<compile_context>
chip_gen: v6e
topology: v6e:2x2x1
jax: 0.10.0
libtpu: 0.0.40
codegen_flags: <defaults>
</compile_context>

<pallas_src>
import jax
import jax.numpy as jnp
import numpy as np
from jax import lax
from jax.experimental import pallas as pl
from jax.experimental.pallas import tpu as pltpu

NEG_SLOPE = 0.01          # PyTorch nn.LeakyReLU default negative_slope
C1, C2 = 32, 64           # conv channels (from the module)
POOL1, POOL2 = 4, 2       # maxpool kernel sizes
GROUP = 8                 # conv1 output positions per banded matmul (2 pool windows)
WIN = 16                  # x window width per group (GROUP + k - 1 = 10, padded to 16)


def _leaky(x):
    return jnp.where(x >= 0, x, NEG_SLOPE * x)


def _round_up(n, m):
    return ((n + m - 1) // m) * m


def compact_cnn_kernel(x_ref, wband_ref, bband_ref, w2_ref, b2_ref,
                       wf1_ref, bf1_ref, wf2_ref, bf2_ref, out_ref):
    """One batch tile (TB samples) end-to-end. Slab rows = position*TB + sample."""
    TB = x_ref.shape[0]
    L = x_ref.shape[1] - 8                      # wrapper pads x with (1, 7) zero cols
    L4 = L // POOL1
    L8 = L4 // POOL2

    x = x_ref[...]                              # [TB, L+8] f32

    # ---- conv1 (1->32,k=3,p=1) + LeakyReLU + maxpool(4), fused -----------------
    pieces = []                                 # L4 pieces of [TB, C1]
    for g in range(L // GROUP):
        win = x[:, GROUP * g: GROUP * g + WIN]                            # [TB, 16]
        y = jnp.dot(win, wband_ref[...],
                    preferred_element_type=jnp.float32) + bband_ref[...]  # [TB, 8*C1]
        y = _leaky(y)
        for m in range(GROUP // POOL1):                                   # 2 pool windows
            q = y[:, m * POOL1 * C1:(m + 1) * POOL1 * C1]                 # [TB, 4*C1]
            p = jnp.maximum(jnp.maximum(q[:, 0:C1], q[:, C1:2 * C1]),
                            jnp.maximum(q[:, 2 * C1:3 * C1], q[:, 3 * C1:4 * C1]))
            pieces.append(p.astype(jnp.bfloat16))
    h1 = jnp.concatenate(pieces, axis=0)                                  # [L4*TB, C1]

    # ---- conv2 (32->64,k=3,p=1) + LeakyReLU as three slab matmuls --------------
    zero_blk = jnp.zeros((TB, C1), jnp.bfloat16)
    h_prev = jnp.concatenate([zero_blk, h1[:-TB, :]], axis=0)             # position l-1
    h_next = jnp.concatenate([h1[TB:, :], zero_blk], axis=0)              # position l+1
    w2 = w2_ref[...]                                                      # [3*C1, C2] bf16
    y2 = (jnp.dot(h_prev, w2[0:C1, :], preferred_element_type=jnp.float32)
          + jnp.dot(h1, w2[C1:2 * C1, :], preferred_element_type=jnp.float32)
          + jnp.dot(h_next, w2[2 * C1:3 * C1, :], preferred_element_type=jnp.float32))
    y2 = _leaky(y2 + b2_ref[...])                                         # [L4*TB, C2] f32

    # ---- maxpool(2) + flatten into [TB, L8*C2] ---------------------------------
    fc_pieces = []
    for j in range(L8):
        a = y2[(2 * j) * TB:(2 * j + 1) * TB, :]
        b = y2[(2 * j + 1) * TB:(2 * j + 2) * TB, :]
        fc_pieces.append(jnp.maximum(a, b).astype(jnp.bfloat16))          # [TB, C2]
    fc1_in = jnp.concatenate(fc_pieces, axis=1)                           # [TB, L8*C2]

    # ---- fc1 + LeakyReLU + (dropout == identity) + fc2 (padded to 128 lanes) ---
    f = jnp.dot(fc1_in, wf1_ref[...],
                preferred_element_type=jnp.float32) + bf1_ref[...]        # [TB, nodes]
    f = _leaky(f).astype(jnp.bfloat16)
    logits = jnp.dot(f, wf2_ref[...],
                     preferred_element_type=jnp.float32) + bf2_ref[...]   # [TB, 128]
    out_ref[...] = logits.astype(out_ref.dtype)


def compact_1d_cnn_forward(x, params, *, batch_tile=128, interpret=False):
    """x: [B, num_features] -> logits [B, num_classes]."""
    B, L = x.shape
    if L % 8 != 0:
        raise ValueError("num_features must be a multiple of 8 (maxpool 4 then 2)")
    w1, b1 = params["w1"], params["b1"]          # [32,1,3], [32]   (PyTorch layout)
    w2, b2 = params["w2"], params["b2"]          # [64,32,3], [64]
    wf1, bf1 = params["wf1"], params["bf1"]      # [128, (L//8)*64], [128]
    wf2, bf2 = params["wf2"], params["bf2"]      # [nc, 128], [nc]
    nodes, nc = wf1.shape[0], wf2.shape[0]
    L4, L8 = L // 4, L // 8
    NCP = _round_up(max(nc, 128), 128)           # lane-dense padded class dim

    # conv1 -> banded matmul weight: wband[i+k, i*C1 + c] = w1[c, 0, k]
    wband = jnp.zeros((WIN, GROUP, C1), jnp.float32)
    for k in range(3):
        wband = wband.at[jnp.arange(GROUP) + k, jnp.arange(GROUP), :].set(
            jnp.broadcast_to(w1[:, 0, k].astype(jnp.float32), (GROUP, C1)))
    wband = wband.reshape(WIN, GROUP * C1)
    bband = jnp.tile(b1.astype(jnp.float32), GROUP).reshape(1, GROUP * C1)

    # conv2: PyTorch [C2, C1, 3] -> per-tap [3*C1, C2] (rows k*C1 + cin)
    w2_k = jnp.transpose(w2, (2, 1, 0)).reshape(3 * C1, C2).astype(jnp.bfloat16)
    b2_k = b2.reshape(1, C2).astype(jnp.float32)

    # fc1: permute rows from PyTorch channel-major flatten (c*L8 + l) to the
    # kernel's position-major flatten (l*C2 + c)
    wf1_k = (wf1.T.reshape(C2, L8, nodes).transpose(1, 0, 2)
             .reshape(L8 * C2, nodes).astype(jnp.bfloat16))
    bf1_k = bf1.reshape(1, nodes).astype(jnp.float32)

    # fc2: zero-pad classes to NCP lanes
    wf2_k = jnp.zeros((nodes, NCP), jnp.bfloat16).at[:, :nc].set(
        wf2.T.astype(jnp.bfloat16))
    bf2_k = jnp.zeros((1, NCP), jnp.float32).at[0, :nc].set(bf2.astype(jnp.float32))

    # batch tiling; pad x columns (1 left, 7 right) for the conv1 windows
    TB = _round_up(min(batch_tile, _round_up(B, 8)), 8)
    B_pad = _round_up(B, TB)
    x_p = jnp.pad(x.astype(jnp.float32), ((0, B_pad - B), (1, 7)))

    out = pl.pallas_call(
        compact_cnn_kernel,
        out_shape=jax.ShapeDtypeStruct((B_pad, NCP), jnp.float32),
        grid_spec=pltpu.PrefetchScalarGridSpec(
            num_scalar_prefetch=0,
            grid=(B_pad // TB,),
            in_specs=[
                pl.BlockSpec((TB, L + 8), lambda i: (i, 0)),          # x tile
                pl.BlockSpec((WIN, GROUP * C1), lambda i: (0, 0)),    # conv1 band
                pl.BlockSpec((1, GROUP * C1), lambda i: (0, 0)),      # conv1 bias
                pl.BlockSpec((3 * C1, C2), lambda i: (0, 0)),         # conv2 taps
                pl.BlockSpec((1, C2), lambda i: (0, 0)),              # conv2 bias
                pl.BlockSpec((L8 * C2, nodes), lambda i: (0, 0)),     # fc1 weight
                pl.BlockSpec((1, nodes), lambda i: (0, 0)),           # fc1 bias
                pl.BlockSpec((nodes, NCP), lambda i: (0, 0)),         # fc2 weight (padded)
                pl.BlockSpec((1, NCP), lambda i: (0, 0)),             # fc2 bias (padded)
            ],
            out_specs=pl.BlockSpec((TB, NCP), lambda i: (i, 0)),
        ),
        compiler_params=pltpu.CompilerParams(
            dimension_semantics=("parallel",)),
        interpret=interpret,
    )(x_p, wband, bband, w2_k, b2_k, wf1_k, bf1_k, wf2_k, bf2_k)
    return out[:B, :nc]


def reference_forward(x, params):
    """Pure-JAX mirror of the PyTorch forward (NCW conv, channel-major flatten)."""
    w1, b1, w2, b2 = params["w1"], params["b1"], params["w2"], params["b2"]
    wf1, bf1, wf2, bf2 = params["wf1"], params["bf1"], params["wf2"], params["bf2"]
    hp = lax.Precision.HIGHEST

    y = x.astype(jnp.float32)[:, None, :]                         # [B, 1, L]
    y = lax.conv_general_dilated(y, w1, (1,), [(1, 1)],
                                 dimension_numbers=("NCH", "OIH", "NCH"),
                                 precision=hp) + b1[None, :, None]
    y = _leaky(y)
    B, C, L = y.shape
    y = jnp.max(y.reshape(B, C, L // 4, 4), axis=-1)
    y = lax.conv_general_dilated(y, w2, (1,), [(1, 1)],
                                 dimension_numbers=("NCH", "OIH", "NCH"),
                                 precision=hp) + b2[None, :, None]
    y = _leaky(y)
    B, C, L = y.shape
    y = jnp.max(y.reshape(B, C, L // 2, 2), axis=-1)
    flat = y.reshape(B, -1)                                       # channel-major
    f = _leaky(jnp.dot(flat, wf1.T, precision=hp) + bf1)
    return jnp.dot(f, wf2.T, precision=hp) + bf2


def init_params(key, num_features, num_classes, nodes=128):
    fc_input = (num_features // 4 // 2) * C2
    ks = jax.random.split(key, 8)

    def u(k, shape, scale):
        return jax.random.uniform(k, shape, jnp.float32, -1.0, 1.0) * scale

    return {
        "w1": u(ks[0], (C1, 1, 3), 0.3),
        "b1": u(ks[1], (C1,), 0.1),
        "w2": u(ks[2], (C2, C1, 3), 0.1),
        "b2": u(ks[3], (C2,), 0.1),
        "wf1": u(ks[4], (nodes, fc_input), 0.03),
        "bf1": u(ks[5], (nodes,), 0.1),
        "wf2": u(ks[6], (num_classes, nodes), 0.08),
        "bf2": u(ks[7], (num_classes,), 0.1),
    }


if __name__ == "__main__":
    B, NUM_FEATURES, NUM_CLASSES = 4, 128, 11   # CLASSES=11 from Config
    key = jax.random.PRNGKey(0)
    kx, kp = jax.random.split(key)
    x = jax.random.normal(kx, (B, NUM_FEATURES), jnp.float32)
    params = init_params(kp, NUM_FEATURES, NUM_CLASSES)

    logits = compact_1d_cnn_forward(x, params)
    logits = jax.block_until_ready(logits)
    assert logits.shape == (B, NUM_CLASSES)

    ref = reference_forward(x, params)
    np.testing.assert_allclose(np.asarray(logits), np.asarray(ref),
                               rtol=5e-2, atol=5e-2)
    print("KERNEL_OK")
</pallas_src>

<mosaic_0001>
module attributes {stable_mosaic.version = 11 : i64} {
  func.func @compact_cnn_kernel(%arg0: i32, %arg1: memref<8x136xf32, #tpu.memory_space<vmem>>, %arg2: memref<16x256xf32, #tpu.memory_space<vmem>>, %arg3: memref<1x256xf32, #tpu.memory_space<vmem>>, %arg4: memref<96x64xbf16, #tpu.memory_space<vmem>>, %arg5: memref<1x64xf32, #tpu.memory_space<vmem>>, %arg6: memref<1024x128xbf16, #tpu.memory_space<vmem>>, %arg7: memref<1x128xf32, #tpu.memory_space<vmem>>, %arg8: memref<128x128xbf16, #tpu.memory_space<vmem>>, %arg9: memref<1x128xf32, #tpu.memory_space<vmem>>, %arg10: memref<8x128xf32, #tpu.memory_space<vmem>>) attributes {dimension_semantics = [#tpu.dimension_semantics<parallel>], iteration_bounds = array<i64: 1>, scalar_prefetch = 0 : i64, scratch_operands = 0 : i64, tpu.core_type = #tpu.core_type<tc>, window_params = [{transform_indices = @transform_0, window_bounds = array<i64: 8, 136>}, {pipeline_mode = #tpu.pipeline_mode<synchronous>, transform_indices = @transform_1, window_bounds = array<i64: 16, 256>}, {pipeline_mode = #tpu.pipeline_mode<synchronous>, transform_indices = @transform_2, window_bounds = array<i64: 1, 256>}, {pipeline_mode = #tpu.pipeline_mode<synchronous>, transform_indices = @transform_3, window_bounds = array<i64: 96, 64>}, {pipeline_mode = #tpu.pipeline_mode<synchronous>, transform_indices = @transform_4, window_bounds = array<i64: 1, 64>}, {pipeline_mode = #tpu.pipeline_mode<synchronous>, transform_indices = @transform_5, window_bounds = array<i64: 1024, 128>}, {pipeline_mode = #tpu.pipeline_mode<synchronous>, transform_indices = @transform_6, window_bounds = array<i64: 1, 128>}, {pipeline_mode = #tpu.pipeline_mode<synchronous>, transform_indices = @transform_7, window_bounds = array<i64: 128, 128>}, {pipeline_mode = #tpu.pipeline_mode<synchronous>, transform_indices = @transform_8, window_bounds = array<i64: 1, 128>}, {transform_indices = @transform_9, window_bounds = array<i64: 8, 128>}]} {
    %c0 = arith.constant 0 : index
    %c0_0 = arith.constant 0 : index
    %0 = vector.load %arg1[%c0, %c0_0] : memref<8x136xf32, #tpu.memory_space<vmem>>, vector<8x136xf32>
    %1 = vector.extract_strided_slice %0 {offsets = [0, 0], sizes = [8, 16], strides = [1, 1]} : vector<8x136xf32> to vector<8x16xf32>
    %c0_1 = arith.constant 0 : index
    %c0_2 = arith.constant 0 : index
    %2 = vector.load %arg2[%c0_1, %c0_2] : memref<16x256xf32, #tpu.memory_space<vmem>>, vector<16x256xf32>
    %cst = arith.constant dense<0.000000e+00> : vector<8x256xf32>
    %3 = tpu.matmul %1, %2, %cst {dimension_numbers = #tpu.dot_dimension_numbers<[1], [0], [0], [1], [0, 0, 1, 1], [], []>} : vector<8x16xf32>, vector<16x256xf32>, vector<8x256xf32> -> vector<8x256xf32>
    %c0_3 = arith.constant 0 : index
    %c0_4 = arith.constant 0 : index
    %4 = vector.load %arg3[%c0_3, %c0_4] : memref<1x256xf32, #tpu.memory_space<vmem>>, vector<1x256xf32>
    %5 = vector.broadcast %4 : vector<1x256xf32> to vector<8x256xf32>
    %6 = arith.addf %3, %5 : vector<8x256xf32>
    %cst_5 = arith.constant 0.000000e+00 : f32
    %7 = vector.broadcast %cst_5 : f32 to vector<8x256xf32>
    %8 = arith.cmpf oge, %6, %7 : vector<8x256xf32>
    %cst_6 = arith.constant 0.00999999977 : f32
    %9 = vector.broadcast %cst_6 : f32 to vector<8x256xf32>
    %10 = arith.mulf %9, %6 : vector<8x256xf32>
    %11 = arith.select %8, %6, %10 : vector<8x256xi1>, vector<8x256xf32>
    %12 = vector.extract_strided_slice %11 {offsets = [0, 0], sizes = [8, 128], strides = [1, 1]} : vector<8x256xf32> to vector<8x128xf32>
    %13 = vector.extract_strided_slice %12 {offsets = [0, 0], sizes = [8, 32], strides = [1, 1]} : vector<8x128xf32> to vector<8x32xf32>
    %14 = vector.extract_strided_slice %12 {offsets = [0, 32], sizes = [8, 32], strides = [1, 1]} : vector<8x128xf32> to vector<8x32xf32>
    %15 = arith.maximumf %13, %14 : vector<8x32xf32>
    %16 = vector.extract_strided_slice %12 {offsets = [0, 64], sizes = [8, 32], strides = [1, 1]} : vector<8x128xf32> to vector<8x32xf32>
    %17 = vector.extract_strided_slice %12 {offsets = [0, 96], sizes = [8, 32], strides = [1, 1]} : vector<8x128xf32> to vector<8x32xf32>
    %18 = arith.maximumf %16, %17 : vector<8x32xf32>
    %19 = arith.maximumf %15, %18 : vector<8x32xf32>
    %20 = arith.truncf %19 : vector<8x32xf32> to vector<8x32xbf16>
    %21 = vector.extract_strided_slice %11 {offsets = [0, 128], sizes = [8, 128], strides = [1, 1]} : vector<8x256xf32> to vector<8x128xf32>
    %22 = vector.extract_strided_slice %21 {offsets = [0, 0], sizes = [8, 32], strides = [1, 1]} : vector<8x128xf32> to vector<8x32xf32>
    %23 = vector.extract_strided_slice %21 {offsets = [0, 32], sizes = [8, 32], strides = [1, 1]} : vector<8x128xf32> to vector<8x32xf32>
    %24 = arith.maximumf %22, %23 : vector<8x32xf32>
    %25 = vector.extract_strided_slice %21 {offsets = [0, 64], sizes = [8, 32], strides = [1, 1]} : vector<8x128xf32> to vector<8x32xf32>
    %26 = vector.extract_strided_slice %21 {offsets = [0, 96], sizes = [8, 32], strides = [1, 1]} : vector<8x128xf32> to vector<8x32xf32>
    %27 = arith.maximumf %25, %26 : vector<8x32xf32>
    %28 = arith.maximumf %24, %27 : vector<8x32xf32>
    %29 = arith.truncf %28 : vector<8x32xf32> to vector<8x32xbf16>
    %30 = vector.extract_strided_slice %0 {offsets = [0, 8], sizes = [8, 16], strides = [1, 1]} : vector<8x136xf32> to vector<8x16xf32>
    %c0_7 = arith.constant 0 : index
    %c0_8 = arith.constant 0 : index
    %31 = vector.load %arg2[%c0_7, %c0_8] : memref<16x256xf32, #tpu.memory_space<vmem>>, vector<16x256xf32>
    %cst_9 = arith.constant dense<0.000000e+00> : vector<8x256xf32>
    %32 = tpu.matmul %30, %31, %cst_9 {dimension_numbers = #tpu.dot_dimension_numbers<[1], [0], [0], [1], [0, 0, 1, 1], [], []>} : vector<8x16xf32>, vector<16x256xf32>, vector<8x256xf32> -> vector<8x256xf32>
    %c0_10 = arith.constant 0 : index
    %c0_11 = arith.constant 0 : index
    %33 = vector.load %arg3[%c0_10, %c0_11] : memref<1x256xf32, #tpu.memory_space<vmem>>, vector<1x256xf32>
    %34 = vector.broadcast %33 : vector<1x256xf32> to vector<8x256xf32>
    %35 = arith.addf %32, %34 : vector<8x256xf32>
    %cst_12 = arith.constant 0.000000e+00 : f32
    %36 = vector.broadcast %cst_12 : f32 to vector<8x256xf32>
    %37 = arith.cmpf oge, %35, %36 : vector<8x256xf32>
    %cst_13 = arith.constant 0.00999999977 : f32
    %38 = vector.broadcast %cst_13 : f32 to vector<8x256xf32>
    %39 = arith.mulf %38, %35 : vector<8x256xf32>
    %40 = arith.select %37, %35, %39 : vector<8x256xi1>, vector<8x256xf32>
    %41 = vector.extract_strided_slice %40 {offsets = [0, 0], sizes = [8, 128], strides = [1, 1]} : vector<8x256xf32> to vector<8x128xf32>
    %42 = vector.extract_strided_slice %41 {offsets = [0, 0], sizes = [8, 32], strides = [1, 1]} : vector<8x128xf32> to vector<8x32xf32>
    %43 = vector.extract_strided_slice %41 {offsets = [0, 32], sizes = [8, 32], strides = [1, 1]} : vector<8x128xf32> to vector<8x32xf32>
    %44 = arith.maximumf %42, %43 : vector<8x32xf32>
    %45 = vector.extract_strided_slice %41 {offsets = [0, 64], sizes = [8, 32], strides = [1, 1]} : vector<8x128xf32> to vector<8x32xf32>
    %46 = vector.extract_strided_slice %41 {offsets = [0, 96], sizes = [8, 32], strides = [1, 1]} : vector<8x128xf32> to vector<8x32xf32>
    %47 = arith.maximumf %45, %46 : vector<8x32xf32>
    %48 = arith.maximumf %44, %47 : vector<8x32xf32>
    %49 = arith.truncf %48 : vector<8x32xf32> to vector<8x32xbf16>
    %50 = vector.extract_strided_slice %40 {offsets = [0, 128], sizes = [8, 128], strides = [1, 1]} : vector<8x256xf32> to vector<8x128xf32>
    %51 = vector.extract_strided_slice %50 {offsets = [0, 0], sizes = [8, 32], strides = [1, 1]} : vector<8x128xf32> to vector<8x32xf32>
    %52 = vector.extract_strided_slice %50 {offsets = [0, 32], sizes = [8, 32], strides = [1, 1]} : vector<8x128xf32> to vector<8x32xf32>
    %53 = arith.maximumf %51, %52 : vector<8x32xf32>
    %54 = vector.extract_strided_slice %50 {offsets = [0, 64], sizes = [8, 32], strides = [1, 1]} : vector<8x128xf32> to vector<8x32xf32>
    %55 = vector.extract_strided_slice %50 {offsets = [0, 96], sizes = [8, 32], strides = [1, 1]} : vector<8x128xf32> to vector<8x32xf32>
    %56 = arith.maximumf %54, %55 : vector<8x32xf32>
    %57 = arith.maximumf %53, %56 : vector<8x32xf32>
    %58 = arith.truncf %57 : vector<8x32xf32> to vector<8x32xbf16>
    %59 = vector.extract_strided_slice %0 {offsets = [0, 16], sizes = [8, 16], strides = [1, 1]} : vector<8x136xf32> to vector<8x16xf32>
    %c0_14 = arith.constant 0 : index
    %c0_15 = arith.constant 0 : index
    %60 = vector.load %arg2[%c0_14, %c0_15] : memref<16x256xf32, #tpu.memory_space<vmem>>, vector<16x256xf32>
    %cst_16 = arith.constant dense<0.000000e+00> : vector<8x256xf32>
    %61 = tpu.matmul %59, %60, %cst_16 {dimension_numbers = #tpu.dot_dimension_numbers<[1], [0], [0], [1], [0, 0, 1, 1], [], []>} : vector<8x16xf32>, vector<16x256xf32>, vector<8x256xf32> -> vector<8x256xf32>
    %c0_17 = arith.constant 0 : index
    %c0_18 = arith.constant 0 : index
    %62 = vector.load %arg3[%c0_17, %c0_18] : memref<1x256xf32, #tpu.memory_space<vmem>>, vector<1x256xf32>
    %63 = vector.broadcast %62 : vector<1x256xf32> to vector<8x256xf32>
    %64 = arith.addf %61, %63 : vector<8x256xf32>
    %cst_19 = arith.constant 0.000000e+00 : f32
    %65 = vector.broadcast %cst_19 : f32 to vector<8x256xf32>
    %66 = arith.cmpf oge, %64, %65 : vector<8x256xf32>
    %cst_20 = arith.constant 0.00999999977 : f32
    %67 = vector.broadcast %cst_20 : f32 to vector<8x256xf32>
    %68 = arith.mulf %67, %64 : vector<8x256xf32>
    %69 = arith.select %66, %64, %68 : vector<8x256xi1>, vector<8x256xf32>
    %70 = vector.extract_strided_slice %69 {offsets = [0, 0], sizes = [8, 128], strides = [1, 1]} : vector<8x256xf32> to vector<8x128xf32>
    %71 = vector.extract_strided_slice %70 {offsets = [0, 0], sizes = [8, 32], strides = [1, 1]} : vector<8x128xf32> to vector<8x32xf32>
    %72 = vector.extract_strided_slice %70 {offsets = [0, 32], sizes = [8, 32], strides = [1, 1]} : vector<8x128xf32> to vector<8x32xf32>
    %73 = arith.maximumf %71, %72 : vector<8x32xf32>
    %74 = vector.extract_strided_slice %70 {offsets = [0, 64], sizes = [8, 32], strides = [1, 1]} : vector<8x128xf32> to vector<8x32xf32>
    %75 = vector.extract_strided_slice %70 {offsets = [0, 96], sizes = [8, 32], strides = [1, 1]} : vector<8x128xf32> to vector<8x32xf32>
    %76 = arith.maximumf %74, %75 : vector<8x32xf32>
    %77 = arith.maximumf %73, %76 : vector<8x32xf32>
    %78 = arith.truncf %77 : vector<8x32xf32> to vector<8x32xbf16>
    %79 = vector.extract_strided_slice %69 {offsets = [0, 128], sizes = [8, 128], strides = [1, 1]} : vector<8x256xf32> to vector<8x128xf32>
    %80 = vector.extract_strided_slice %79 {offsets = [0, 0], sizes = [8, 32], strides = [1, 1]} : vector<8x128xf32> to vector<8x32xf32>
    %81 = vector.extract_strided_slice %79 {offsets = [0, 32], sizes = [8, 32], strides = [1, 1]} : vector<8x128xf32> to vector<8x32xf32>
    %82 = arith.maximumf %80, %81 : vector<8x32xf32>
    %83 = vector.extract_strided_slice %79 {offsets = [0, 64], sizes = [8, 32], strides = [1, 1]} : vector<8x128xf32> to vector<8x32xf32>
    %84 = vector.extract_strided_slice %79 {offsets = [0, 96], sizes = [8, 32], strides = [1, 1]} : vector<8x128xf32> to vector<8x32xf32>
    %85 = arith.maximumf %83, %84 : vector<8x32xf32>
    %86 = arith.maximumf %82, %85 : vector<8x32xf32>
    %87 = arith.truncf %86 : vector<8x32xf32> to vector<8x32xbf16>
    %88 = vector.extract_strided_slice %0 {offsets = [0, 24], sizes = [8, 16], strides = [1, 1]} : vector<8x136xf32> to vector<8x16xf32>
    %c0_21 = arith.constant 0 : index
    %c0_22 = arith.constant 0 : index
    %89 = vector.load %arg2[%c0_21, %c0_22] : memref<16x256xf32, #tpu.memory_space<vmem>>, vector<16x256xf32>
    %cst_23 = arith.constant dense<0.000000e+00> : vector<8x256xf32>
    %90 = tpu.matmul %88, %89, %cst_23 {dimension_numbers = #tpu.dot_dimension_numbers<[1], [0], [0], [1], [0, 0, 1, 1], [], []>} : vector<8x16xf32>, vector<16x256xf32>, vector<8x256xf32> -> vector<8x256xf32>
    %c0_24 = arith.constant 0 : index
    %c0_25 = arith.constant 0 : index
    %91 = vector.load %arg3[%c0_24, %c0_25] : memref<1x256xf32, #tpu.memory_space<vmem>>, vector<1x256xf32>
    %92 = vector.broadcast %91 : vector<1x256xf32> to vector<8x256xf32>
    %93 = arith.addf %90, %92 : vector<8x256xf32>
    %cst_26 = arith.constant 0.000000e+00 : f32
    %94 = vector.broadcast %cst_26 : f32 to vector<8x256xf32>
    %95 = arith.cmpf oge, %93, %94 : vector<8x256xf32>
    %cst_27 = arith.constant 0.00999999977 : f32
    %96 = vector.broadcast %cst_27 : f32 to vector<8x256xf32>
    %97 = arith.mulf %96, %93 : vector<8x256xf32>
    %98 = arith.select %95, %93, %97 : vector<8x256xi1>, vector<8x256xf32>
    %99 = vector.extract_strided_slice %98 {offsets = [0, 0], sizes = [8, 128], strides = [1, 1]} : vector<8x256xf32> to vector<8x128xf32>
    %100 = vector.extract_strided_slice %99 {offsets = [0, 0], sizes = [8, 32], strides = [1, 1]} : vector<8x128xf32> to vector<8x32xf32>
    %101 = vector.extract_strided_slice %99 {offsets = [0, 32], sizes = [8, 32], strides = [1, 1]} : vector<8x128xf32> to vector<8x32xf32>
    %102 = arith.maximumf %100, %101 : vector<8x32xf32>
    %103 = vector.extract_strided_slice %99 {offsets = [0, 64], sizes = [8, 32], strides = [1, 1]} : vector<8x128xf32> to vector<8x32xf32>
    %104 = vector.extract_strided_slice %99 {offsets = [0, 96], sizes = [8, 32], strides = [1, 1]} : vector<8x128xf32> to vector<8x32xf32>
    %105 = arith.maximumf %103, %104 : vector<8x32xf32>
    %106 = arith.maximumf %102, %105 : vector<8x32xf32>
    %107 = arith.truncf %106 : vector<8x32xf32> to vector<8x32xbf16>
    %108 = vector.extract_strided_slice %98 {offsets = [0, 128], sizes = [8, 128], strides = [1, 1]} : vector<8x256xf32> to vector<8x128xf32>
    %109 = vector.extract_strided_slice %108 {offsets = [0, 0], sizes = [8, 32], strides = [1, 1]} : vector<8x128xf32> to vector<8x32xf32>
    %110 = vector.extract_strided_slice %108 {offsets = [0, 32], sizes = [8, 32], strides = [1, 1]} : vector<8x128xf32> to vector<8x32xf32>
    %111 = arith.maximumf %109, %110 : vector<8x32xf32>
    %112 = vector.extract_strided_slice %108 {offsets = [0, 64], sizes = [8, 32], strides = [1, 1]} : vector<8x128xf32> to vector<8x32xf32>
    %113 = vector.extract_strided_slice %108 {offsets = [0, 96], sizes = [8, 32], strides = [1, 1]} : vector<8x128xf32> to vector<8x32xf32>
    %114 = arith.maximumf %112, %113 : vector<8x32xf32>
    %115 = arith.maximumf %111, %114 : vector<8x32xf32>
    %116 = arith.truncf %115 : vector<8x32xf32> to vector<8x32xbf16>
    %117 = vector.extract_strided_slice %0 {offsets = [0, 32], sizes = [8, 16], strides = [1, 1]} : vector<8x136xf32> to vector<8x16xf32>
    %c0_28 = arith.constant 0 : index
    %c0_29 = arith.constant 0 : index
    %118 = vector.load %arg2[%c0_28, %c0_29] : memref<16x256xf32, #tpu.memory_space<vmem>>, vector<16x256xf32>
    %cst_30 = arith.constant dense<0.000000e+00> : vector<8x256xf32>
    %119 = tpu.matmul %117, %118, %cst_30 {dimension_numbers = #tpu.dot_dimension_numbers<[1], [0], [0], [1], [0, 0, 1, 1], [], []>} : vector<8x16xf32>, vector<16x256xf32>, vector<8x256xf32> -> vector<8x256xf32>
    %c0_31 = arith.constant 0 : index
    %c0_32 = arith.constant 0 : index
    %120 = vector.load %arg3[%c0_31, %c0_32] : memref<1x256xf32, #tpu.memory_space<vmem>>, vector<1x256xf32>
    %121 = vector.broadcast %120 : vector<1x256xf32> to vector<8x256xf32>
    %122 = arith.addf %119, %121 : vector<8x256xf32>
    %cst_33 = arith.constant 0.000000e+00 : f32
    %123 = vector.broadcast %cst_33 : f32 to vector<8x256xf32>
    %124 = arith.cmpf oge, %122, %123 : vector<8x256xf32>
    %cst_34 = arith.constant 0.00999999977 : f32
    %125 = vector.broadcast %cst_34 : f32 to vector<8x256xf32>
    %126 = arith.mulf %125, %122 : vector<8x256xf32>
    %127 = arith.select %124, %122, %126 : vector<8x256xi1>, vector<8x256xf32>
    %128 = vector.extract_strided_slice %127 {offsets = [0, 0], sizes = [8, 128], strides = [1, 1]} : vector<8x256xf32> to vector<8x128xf32>
    %129 = vector.extract_strided_slice %128 {offsets = [0, 0], sizes = [8, 32], strides = [1, 1]} : vector<8x128xf32> to vector<8x32xf32>
    %130 = vector.extract_strided_slice %128 {offsets = [0, 32], sizes = [8, 32], strides = [1, 1]} : vector<8x128xf32> to vector<8x32xf32>
    %131 = arith.maximumf %129, %130 : vector<8x32xf32>
    %132 = vector.extract_strided_slice %128 {offsets = [0, 64], sizes = [8, 32], strides = [1, 1]} : vector<8x128xf32> to vector<8x32xf32>
    %133 = vector.extract_strided_slice %128 {offsets = [0, 96], sizes = [8, 32], strides = [1, 1]} : vector<8x128xf32> to vector<8x32xf32>
    %134 = arith.maximumf %132, %133 : vector<8x32xf32>
    %135 = arith.maximumf %131, %134 : vector<8x32xf32>
    %136 = arith.truncf %135 : vector<8x32xf32> to vector<8x32xbf16>
    %137 = vector.extract_strided_slice %127 {offsets = [0, 128], sizes = [8, 128], strides = [1, 1]} : vector<8x256xf32> to vector<8x128xf32>
    %138 = vector.extract_strided_slice %137 {offsets = [0, 0], sizes = [8, 32], strides = [1, 1]} : vector<8x128xf32> to vector<8x32xf32>
    %139 = vector.extract_strided_slice %137 {offsets = [0, 32], sizes = [8, 32], strides = [1, 1]} : vector<8x128xf32> to vector<8x32xf32>
    %140 = arith.maximumf %138, %139 : vector<8x32xf32>
    %141 = vector.extract_strided_slice %137 {offsets = [0, 64], sizes = [8, 32], strides = [1, 1]} : vector<8x128xf32> to vector<8x32xf32>
    %142 = vector.extract_strided_slice %137 {offsets = [0, 96], sizes = [8, 32], strides = [1, 1]} : vector<8x128xf32> to vector<8x32xf32>
    %143 = arith.maximumf %141, %142 : vector<8x32xf32>
    %144 = arith.maximumf %140, %143 : vector<8x32xf32>
    %145 = arith.truncf %144 : vector<8x32xf32> to vector<8x32xbf16>
    %146 = vector.extract_strided_slice %0 {offsets = [0, 40], sizes = [8, 16], strides = [1, 1]} : vector<8x136xf32> to vector<8x16xf32>
    %c0_35 = arith.constant 0 : index
    %c0_36 = arith.constant 0 : index
    %147 = vector.load %arg2[%c0_35, %c0_36] : memref<16x256xf32, #tpu.memory_space<vmem>>, vector<16x256xf32>
    %cst_37 = arith.constant dense<0.000000e+00> : vector<8x256xf32>
    %148 = tpu.matmul %146, %147, %cst_37 {dimension_numbers = #tpu.dot_dimension_numbers<[1], [0], [0], [1], [0, 0, 1, 1], [], []>} : vector<8x16xf32>, vector<16x256xf32>, vector<8x256xf32> -> vector<8x256xf32>
    %c0_38 = arith.constant 0 : index
    %c0_39 = arith.constant 0 : index
    %149 = vector.load %arg3[%c0_38, %c0_39] : memref<1x256xf32, #tpu.memory_space<vmem>>, vector<1x256xf32>
    %150 = vector.broadcast %149 : vector<1x256xf32> to vector<8x256xf32>
    %151 = arith.addf %148, %150 : vector<8x256xf32>
    %cst_40 = arith.constant 0.000000e+00 : f32
    %152 = vector.broadcast %cst_40 : f32 to vector<8x256xf32>
    %153 = arith.cmpf oge, %151, %152 : vector<8x256xf32>
    %cst_41 = arith.constant 0.00999999977 : f32
    %154 = vector.broadcast %cst_41 : f32 to vector<8x256xf32>
    %155 = arith.mulf %154, %151 : vector<8x256xf32>
    %156 = arith.select %153, %151, %155 : vector<8x256xi1>, vector<8x256xf32>
    %157 = vector.extract_strided_slice %156 {offsets = [0, 0], sizes = [8, 128], strides = [1, 1]} : vector<8x256xf32> to vector<8x128xf32>
    %158 = vector.extract_strided_slice %157 {offsets = [0, 0], sizes = [8, 32], strides = [1, 1]} : vector<8x128xf32> to vector<8x32xf32>
    %159 = vector.extract_strided_slice %157 {offsets = [0, 32], sizes = [8, 32], strides = [1, 1]} : vector<8x128xf32> to vector<8x32xf32>
    %160 = arith.maximumf %158, %159 : vector<8x32xf32>
    %161 = vector.extract_strided_slice %157 {offsets = [0, 64], sizes = [8, 32], strides = [1, 1]} : vector<8x128xf32> to vector<8x32xf32>
    %162 = vector.extract_strided_slice %157 {offsets = [0, 96], sizes = [8, 32], strides = [1, 1]} : vector<8x128xf32> to vector<8x32xf32>
    %163 = arith.maximumf %161, %162 : vector<8x32xf32>
    %164 = arith.maximumf %160, %163 : vector<8x32xf32>
    %165 = arith.truncf %164 : vector<8x32xf32> to vector<8x32xbf16>
    %166 = vector.extract_strided_slice %156 {offsets = [0, 128], sizes = [8, 128], strides = [1, 1]} : vector<8x256xf32> to vector<8x128xf32>
    %167 = vector.extract_strided_slice %166 {offsets = [0, 0], sizes = [8, 32], strides = [1, 1]} : vector<8x128xf32> to vector<8x32xf32>
    %168 = vector.extract_strided_slice %166 {offsets = [0, 32], sizes = [8, 32], strides = [1, 1]} : vector<8x128xf32> to vector<8x32xf32>
    %169 = arith.maximumf %167, %168 : vector<8x32xf32>
    %170 = vector.extract_strided_slice %166 {offsets = [0, 64], sizes = [8, 32], strides = [1, 1]} : vector<8x128xf32> to vector<8x32xf32>
    %171 = vector.extract_strided_slice %166 {offsets = [0, 96], sizes = [8, 32], strides = [1, 1]} : vector<8x128xf32> to vector<8x32xf32>
    %172 = arith.maximumf %170, %171 : vector<8x32xf32>
    %173 = arith.maximumf %169, %172 : vector<8x32xf32>
    %174 = arith.truncf %173 : vector<8x32xf32> to vector<8x32xbf16>
    %175 = vector.extract_strided_slice %0 {offsets = [0, 48], sizes = [8, 16], strides = [1, 1]} : vector<8x136xf32> to vector<8x16xf32>
    %c0_42 = arith.constant 0 : index
    %c0_43 = arith.constant 0 : index
    %176 = vector.load %arg2[%c0_42, %c0_43] : memref<16x256xf32, #tpu.memory_space<vmem>>, vector<16x256xf32>
    %cst_44 = arith.constant dense<0.000000e+00> : vector<8x256xf32>
    %177 = tpu.matmul %175, %176, %cst_44 {dimension_numbers = #tpu.dot_dimension_numbers<[1], [0], [0], [1], [0, 0, 1, 1], [], []>} : vector<8x16xf32>, vector<16x256xf32>, vector<8x256xf32> -> vector<8x256xf32>
    %c0_45 = arith.constant 0 : index
    %c0_46 = arith.constant 0 : index
    %178 = vector.load %arg3[%c0_45, %c0_46] : memref<1x256xf32, #tpu.memory_space<vmem>>, vector<1x256xf32>
    %179 = vector.broadcast %178 : vector<1x256xf32> to vector<8x256xf32>
    %180 = arith.addf %177, %179 : vector<8x256xf32>
    %cst_47 = arith.constant 0.000000e+00 : f32
    %181 = vector.broadcast %cst_47 : f32 to vector<8x256xf32>
    %182 = arith.cmpf oge, %180, %181 : vector<8x256xf32>
    %cst_48 = arith.constant 0.00999999977 : f32
    %183 = vector.broadcast %cst_48 : f32 to vector<8x256xf32>
    %184 = arith.mulf %183, %180 : vector<8x256xf32>
    %185 = arith.select %182, %180, %184 : vector<8x256xi1>, vector<8x256xf32>
    %186 = vector.extract_strided_slice %185 {offsets = [0, 0], sizes = [8, 128], strides = [1, 1]} : vector<8x256xf32> to vector<8x128xf32>
    %187 = vector.extract_strided_slice %186 {offsets = [0, 0], sizes = [8, 32], strides = [1, 1]} : vector<8x128xf32> to vector<8x32xf32>
    %188 = vector.extract_strided_slice %186 {offsets = [0, 32], sizes = [8, 32], strides = [1, 1]} : vector<8x128xf32> to vector<8x32xf32>
    %189 = arith.maximumf %187, %188 : vector<8x32xf32>
    %190 = vector.extract_strided_slice %186 {offsets = [0, 64], sizes = [8, 32], strides = [1, 1]} : vector<8x128xf32> to vector<8x32xf32>
    %191 = vector.extract_strided_slice %186 {offsets = [0, 96], sizes = [8, 32], strides = [1, 1]} : vector<8x128xf32> to vector<8x32xf32>
    %192 = arith.maximumf %190, %191 : vector<8x32xf32>
    %193 = arith.maximumf %189, %192 : vector<8x32xf32>
    %194 = arith.truncf %193 : vector<8x32xf32> to vector<8x32xbf16>
    %195 = vector.extract_strided_slice %185 {offsets = [0, 128], sizes = [8, 128], strides = [1, 1]} : vector<8x256xf32> to vector<8x128xf32>
    %196 = vector.extract_strided_slice %195 {offsets = [0, 0], sizes = [8, 32], strides = [1, 1]} : vector<8x128xf32> to vector<8x32xf32>
    %197 = vector.extract_strided_slice %195 {offsets = [0, 32], sizes = [8, 32], strides = [1, 1]} : vector<8x128xf32> to vector<8x32xf32>
    %198 = arith.maximumf %196, %197 : vector<8x32xf32>
    %199 = vector.extract_strided_slice %195 {offsets = [0, 64], sizes = [8, 32], strides = [1, 1]} : vector<8x128xf32> to vector<8x32xf32>
    %200 = vector.extract_strided_slice %195 {offsets = [0, 96], sizes = [8, 32], strides = [1, 1]} : vector<8x128xf32> to vector<8x32xf32>
    %201 = arith.maximumf %199, %200 : vector<8x32xf32>
    %202 = arith.maximumf %198, %201 : vector<8x32xf32>
    %203 = arith.truncf %202 : vector<8x32xf32> to vector<8x32xbf16>
    %204 = vector.extract_strided_slice %0 {offsets = [0, 56], sizes = [8, 16], strides = [1, 1]} : vector<8x136xf32> to vector<8x16xf32>
    %c0_49 = arith.constant 0 : index
    %c0_50 = arith.constant 0 : index
    %205 = vector.load %arg2[%c0_49, %c0_50] : memref<16x256xf32, #tpu.memory_space<vmem>>, vector<16x256xf32>
    %cst_51 = arith.constant dense<0.000000e+00> : vector<8x256xf32>
    %206 = tpu.matmul %204, %205, %cst_51 {dimension_numbers = #tpu.dot_dimension_numbers<[1], [0], [0], [1], [0, 0, 1, 1], [], []>} : vector<8x16xf32>, vector<16x256xf32>, vector<8x256xf32> -> vector<8x256xf32>
    %c0_52 = arith.constant 0 : index
    %c0_53 = arith.constant 0 : index
    %207 = vector.load %arg3[%c0_52, %c0_53] : memref<1x256xf32, #tpu.memory_space<vmem>>, vector<1x256xf32>
    %208 = vector.broadcast %207 : vector<1x256xf32> to vector<8x256xf32>
    %209 = arith.addf %206, %208 : vector<8x256xf32>
    %cst_54 = arith.constant 0.000000e+00 : f32
    %210 = vector.broadcast %cst_54 : f32 to vector<8x256xf32>
    %211 = arith.cmpf oge, %209, %210 : vector<8x256xf32>
    %cst_55 = arith.constant 0.00999999977 : f32
    %212 = vector.broadcast %cst_55 : f32 to vector<8x256xf32>
    %213 = arith.mulf %212, %209 : vector<8x256xf32>
    %214 = arith.select %211, %209, %213 : vector<8x256xi1>, vector<8x256xf32>
    %215 = vector.extract_strided_slice %214 {offsets = [0, 0], sizes = [8, 128], strides = [1, 1]} : vector<8x256xf32> to vector<8x128xf32>
    %216 = vector.extract_strided_slice %215 {offsets = [0, 0], sizes = [8, 32], strides = [1, 1]} : vector<8x128xf32> to vector<8x32xf32>
    %217 = vector.extract_strided_slice %215 {offsets = [0, 32], sizes = [8, 32], strides = [1, 1]} : vector<8x128xf32> to vector<8x32xf32>
    %218 = arith.maximumf %216, %217 : vector<8x32xf32>
    %219 = vector.extract_strided_slice %215 {offsets = [0, 64], sizes = [8, 32], strides = [1, 1]} : vector<8x128xf32> to vector<8x32xf32>
    %220 = vector.extract_strided_slice %215 {offsets = [0, 96], sizes = [8, 32], strides = [1, 1]} : vector<8x128xf32> to vector<8x32xf32>
    %221 = arith.maximumf %219, %220 : vector<8x32xf32>
    %222 = arith.maximumf %218, %221 : vector<8x32xf32>
    %223 = arith.truncf %222 : vector<8x32xf32> to vector<8x32xbf16>
    %224 = vector.extract_strided_slice %214 {offsets = [0, 128], sizes = [8, 128], strides = [1, 1]} : vector<8x256xf32> to vector<8x128xf32>
    %225 = vector.extract_strided_slice %224 {offsets = [0, 0], sizes = [8, 32], strides = [1, 1]} : vector<8x128xf32> to vector<8x32xf32>
    %226 = vector.extract_strided_slice %224 {offsets = [0, 32], sizes = [8, 32], strides = [1, 1]} : vector<8x128xf32> to vector<8x32xf32>
    %227 = arith.maximumf %225, %226 : vector<8x32xf32>
    %228 = vector.extract_strided_slice %224 {offsets = [0, 64], sizes = [8, 32], strides = [1, 1]} : vector<8x128xf32> to vector<8x32xf32>
    %229 = vector.extract_strided_slice %224 {offsets = [0, 96], sizes = [8, 32], strides = [1, 1]} : vector<8x128xf32> to vector<8x32xf32>
    %230 = arith.maximumf %228, %229 : vector<8x32xf32>
    %231 = arith.maximumf %227, %230 : vector<8x32xf32>
    %232 = arith.truncf %231 : vector<8x32xf32> to vector<8x32xbf16>
    %233 = vector.extract_strided_slice %0 {offsets = [0, 64], sizes = [8, 16], strides = [1, 1]} : vector<8x136xf32> to vector<8x16xf32>
    %c0_56 = arith.constant 0 : index
    %c0_57 = arith.constant 0 : index
    %234 = vector.load %arg2[%c0_56, %c0_57] : memref<16x256xf32, #tpu.memory_space<vmem>>, vector<16x256xf32>
    %cst_58 = arith.constant dense<0.000000e+00> : vector<8x256xf32>
    %235 = tpu.matmul %233, %234, %cst_58 {dimension_numbers = #tpu.dot_dimension_numbers<[1], [0], [0], [1], [0, 0, 1, 1], [], []>} : vector<8x16xf32>, vector<16x256xf32>, vector<8x256xf32> -> vector<8x256xf32>
    %c0_59 = arith.constant 0 : index
    %c0_60 = arith.constant 0 : index
    %236 = vector.load %arg3[%c0_59, %c0_60] : memref<1x256xf32, #tpu.memory_space<vmem>>, vector<1x256xf32>
    %237 = vector.broadcast %236 : vector<1x256xf32> to vector<8x256xf32>
    %238 = arith.addf %235, %237 : vector<8x256xf32>
    %cst_61 = arith.constant 0.000000e+00 : f32
    %239 = vector.broadcast %cst_61 : f32 to vector<8x256xf32>
    %240 = arith.cmpf oge, %238, %239 : vector<8x256xf32>
    %cst_62 = arith.constant 0.00999999977 : f32
    %241 = vector.broadcast %cst_62 : f32 to vector<8x256xf32>
    %242 = arith.mulf %241, %238 : vector<8x256xf32>
    %243 = arith.select %240, %238, %242 : vector<8x256xi1>, vector<8x256xf32>
    %244 = vector.extract_strided_slice %243 {offsets = [0, 0], sizes = [8, 128], strides = [1, 1]} : vector<8x256xf32> to vector<8x128xf32>
    %245 = vector.extract_strided_slice %244 {offsets = [0, 0], sizes = [8, 32], strides = [1, 1]} : vector<8x128xf32> to vector<8x32xf32>
    %246 = vector.extract_strided_slice %244 {offsets = [0, 32], sizes = [8, 32], strides = [1, 1]} : vector<8x128xf32> to vector<8x32xf32>
    %247 = arith.maximumf %245, %246 : vector<8x32xf32>
    %248 = vector.extract_strided_slice %244 {offsets = [0, 64], sizes = [8, 32], strides = [1, 1]} : vector<8x128xf32> to vector<8x32xf32>
    %249 = vector.extract_strided_slice %244 {offsets = [0, 96], sizes = [8, 32], strides = [1, 1]} : vector<8x128xf32> to vector<8x32xf32>
    %250 = arith.maximumf %248, %249 : vector<8x32xf32>
    %251 = arith.maximumf %247, %250 : vector<8x32xf32>
    %252 = arith.truncf %251 : vector<8x32xf32> to vector<8x32xbf16>
    %253 = vector.extract_strided_slice %243 {offsets = [0, 128], sizes = [8, 128], strides = [1, 1]} : vector<8x256xf32> to vector<8x128xf32>
    %254 = vector.extract_strided_slice %253 {offsets = [0, 0], sizes = [8, 32], strides = [1, 1]} : vector<8x128xf32> to vector<8x32xf32>
    %255 = vector.extract_strided_slice %253 {offsets = [0, 32], sizes = [8, 32], strides = [1, 1]} : vector<8x128xf32> to vector<8x32xf32>
    %256 = arith.maximumf %254, %255 : vector<8x32xf32>
    %257 = vector.extract_strided_slice %253 {offsets = [0, 64], sizes = [8, 32], strides = [1, 1]} : vector<8x128xf32> to vector<8x32xf32>
    %258 = vector.extract_strided_slice %253 {offsets = [0, 96], sizes = [8, 32], strides = [1, 1]} : vector<8x128xf32> to vector<8x32xf32>
    %259 = arith.maximumf %257, %258 : vector<8x32xf32>
    %260 = arith.maximumf %256, %259 : vector<8x32xf32>
    %261 = arith.truncf %260 : vector<8x32xf32> to vector<8x32xbf16>
    %262 = vector.extract_strided_slice %0 {offsets = [0, 72], sizes = [8, 16], strides = [1, 1]} : vector<8x136xf32> to vector<8x16xf32>
    %c0_63 = arith.constant 0 : index
    %c0_64 = arith.constant 0 : index
    %263 = vector.load %arg2[%c0_63, %c0_64] : memref<16x256xf32, #tpu.memory_space<vmem>>, vector<16x256xf32>
    %cst_65 = arith.constant dense<0.000000e+00> : vector<8x256xf32>
    %264 = tpu.matmul %262, %263, %cst_65 {dimension_numbers = #tpu.dot_dimension_numbers<[1], [0], [0], [1], [0, 0, 1, 1], [], []>} : vector<8x16xf32>, vector<16x256xf32>, vector<8x256xf32> -> vector<8x256xf32>
    %c0_66 = arith.constant 0 : index
    %c0_67 = arith.constant 0 : index
    %265 = vector.load %arg3[%c0_66, %c0_67] : memref<1x256xf32, #tpu.memory_space<vmem>>, vector<1x256xf32>
    %266 = vector.broadcast %265 : vector<1x256xf32> to vector<8x256xf32>
    %267 = arith.addf %264, %266 : vector<8x256xf32>
    %cst_68 = arith.constant 0.000000e+00 : f32
    %268 = vector.broadcast %cst_68 : f32 to vector<8x256xf32>
    %269 = arith.cmpf oge, %267, %268 : vector<8x256xf32>
    %cst_69 = arith.constant 0.00999999977 : f32
    %270 = vector.broadcast %cst_69 : f32 to vector<8x256xf32>
    %271 = arith.mulf %270, %267 : vector<8x256xf32>
    %272 = arith.select %269, %267, %271 : vector<8x256xi1>, vector<8x256xf32>
    %273 = vector.extract_strided_slice %272 {offsets = [0, 0], sizes = [8, 128], strides = [1, 1]} : vector<8x256xf32> to vector<8x128xf32>
    %274 = vector.extract_strided_slice %273 {offsets = [0, 0], sizes = [8, 32], strides = [1, 1]} : vector<8x128xf32> to vector<8x32xf32>
    %275 = vector.extract_strided_slice %273 {offsets = [0, 32], sizes = [8, 32], strides = [1, 1]} : vector<8x128xf32> to vector<8x32xf32>
    %276 = arith.maximumf %274, %275 : vector<8x32xf32>
    %277 = vector.extract_strided_slice %273 {offsets = [0, 64], sizes = [8, 32], strides = [1, 1]} : vector<8x128xf32> to vector<8x32xf32>
    %278 = vector.extract_strided_slice %273 {offsets = [0, 96], sizes = [8, 32], strides = [1, 1]} : vector<8x128xf32> to vector<8x32xf32>
    %279 = arith.maximumf %277, %278 : vector<8x32xf32>
    %280 = arith.maximumf %276, %279 : vector<8x32xf32>
    %281 = arith.truncf %280 : vector<8x32xf32> to vector<8x32xbf16>
    %282 = vector.extract_strided_slice %272 {offsets = [0, 128], sizes = [8, 128], strides = [1, 1]} : vector<8x256xf32> to vector<8x128xf32>
    %283 = vector.extract_strided_slice %282 {offsets = [0, 0], sizes = [8, 32], strides = [1, 1]} : vector<8x128xf32> to vector<8x32xf32>
    %284 = vector.extract_strided_slice %282 {offsets = [0, 32], sizes = [8, 32], strides = [1, 1]} : vector<8x128xf32> to vector<8x32xf32>
    %285 = arith.maximumf %283, %284 : vector<8x32xf32>
    %286 = vector.extract_strided_slice %282 {offsets = [0, 64], sizes = [8, 32], strides = [1, 1]} : vector<8x128xf32> to vector<8x32xf32>
    %287 = vector.extract_strided_slice %282 {offsets = [0, 96], sizes = [8, 32], strides = [1, 1]} : vector<8x128xf32> to vector<8x32xf32>
    %288 = arith.maximumf %286, %287 : vector<8x32xf32>
    %289 = arith.maximumf %285, %288 : vector<8x32xf32>
    %290 = arith.truncf %289 : vector<8x32xf32> to vector<8x32xbf16>
    %291 = vector.extract_strided_slice %0 {offsets = [0, 80], sizes = [8, 16], strides = [1, 1]} : vector<8x136xf32> to vector<8x16xf32>
    %c0_70 = arith.constant 0 : index
    %c0_71 = arith.constant 0 : index
    %292 = vector.load %arg2[%c0_70, %c0_71] : memref<16x256xf32, #tpu.memory_space<vmem>>, vector<16x256xf32>
    %cst_72 = arith.constant dense<0.000000e+00> : vector<8x256xf32>
    %293 = tpu.matmul %291, %292, %cst_72 {dimension_numbers = #tpu.dot_dimension_numbers<[1], [0], [0], [1], [0, 0, 1, 1], [], []>} : vector<8x16xf32>, vector<16x256xf32>, vector<8x256xf32> -> vector<8x256xf32>
    %c0_73 = arith.constant 0 : index
    %c0_74 = arith.constant 0 : index
    %294 = vector.load %arg3[%c0_73, %c0_74] : memref<1x256xf32, #tpu.memory_space<vmem>>, vector<1x256xf32>
    %295 = vector.broadcast %294 : vector<1x256xf32> to vector<8x256xf32>
    %296 = arith.addf %293, %295 : vector<8x256xf32>
    %cst_75 = arith.constant 0.000000e+00 : f32
    %297 = vector.broadcast %cst_75 : f32 to vector<8x256xf32>
    %298 = arith.cmpf oge, %296, %297 : vector<8x256xf32>
    %cst_76 = arith.constant 0.00999999977 : f32
    %299 = vector.broadcast %cst_76 : f32 to vector<8x256xf32>
    %300 = arith.mulf %299, %296 : vector<8x256xf32>
    %301 = arith.select %298, %296, %300 : vector<8x256xi1>, vector<8x256xf32>
    %302 = vector.extract_strided_slice %301 {offsets = [0, 0], sizes = [8, 128], strides = [1, 1]} : vector<8x256xf32> to vector<8x128xf32>
    %303 = vector.extract_strided_slice %302 {offsets = [0, 0], sizes = [8, 32], strides = [1, 1]} : vector<8x128xf32> to vector<8x32xf32>
    %304 = vector.extract_strided_slice %302 {offsets = [0, 32], sizes = [8, 32], strides = [1, 1]} : vector<8x128xf32> to vector<8x32xf32>
    %305 = arith.maximumf %303, %304 : vector<8x32xf32>
    %306 = vector.extract_strided_slice %302 {offsets = [0, 64], sizes = [8, 32], strides = [1, 1]} : vector<8x128xf32> to vector<8x32xf32>
    %307 = vector.extract_strided_slice %302 {offsets = [0, 96], sizes = [8, 32], strides = [1, 1]} : vector<8x128xf32> to vector<8x32xf32>
    %308 = arith.maximumf %306, %307 : vector<8x32xf32>
    %309 = arith.maximumf %305, %308 : vector<8x32xf32>
    %310 = arith.truncf %309 : vector<8x32xf32> to vector<8x32xbf16>
    %311 = vector.extract_strided_slice %301 {offsets = [0, 128], sizes = [8, 128], strides = [1, 1]} : vector<8x256xf32> to vector<8x128xf32>
    %312 = vector.extract_strided_slice %311 {offsets = [0, 0], sizes = [8, 32], strides = [1, 1]} : vector<8x128xf32> to vector<8x32xf32>
    %313 = vector.extract_strided_slice %311 {offsets = [0, 32], sizes = [8, 32], strides = [1, 1]} : vector<8x128xf32> to vector<8x32xf32>
    %314 = arith.maximumf %312, %313 : vector<8x32xf32>
    %315 = vector.extract_strided_slice %311 {offsets = [0, 64], sizes = [8, 32], strides = [1, 1]} : vector<8x128xf32> to vector<8x32xf32>
    %316 = vector.extract_strided_slice %311 {offsets = [0, 96], sizes = [8, 32], strides = [1, 1]} : vector<8x128xf32> to vector<8x32xf32>
    %317 = arith.maximumf %315, %316 : vector<8x32xf32>
    %318 = arith.maximumf %314, %317 : vector<8x32xf32>
    %319 = arith.truncf %318 : vector<8x32xf32> to vector<8x32xbf16>
    %320 = vector.extract_strided_slice %0 {offsets = [0, 88], sizes = [8, 16], strides = [1, 1]} : vector<8x136xf32> to vector<8x16xf32>
    %c0_77 = arith.constant 0 : index
    %c0_78 = arith.constant 0 : index
    %321 = vector.load %arg2[%c0_77, %c0_78] : memref<16x256xf32, #tpu.memory_space<vmem>>, vector<16x256xf32>
    %cst_79 = arith.constant dense<0.000000e+00> : vector<8x256xf32>
    %322 = tpu.matmul %320, %321, %cst_79 {dimension_numbers = #tpu.dot_dimension_numbers<[1], [0], [0], [1], [0, 0, 1, 1], [], []>} : vector<8x16xf32>, vector<16x256xf32>, vector<8x256xf32> -> vector<8x256xf32>
    %c0_80 = arith.constant 0 : index
    %c0_81 = arith.constant 0 : index
    %323 = vector.load %arg3[%c0_80, %c0_81] : memref<1x256xf32, #tpu.memory_space<vmem>>, vector<1x256xf32>
    %324 = vector.broadcast %323 : vector<1x256xf32> to vector<8x256xf32>
    %325 = arith.addf %322, %324 : vector<8x256xf32>
    %cst_82 = arith.constant 0.000000e+00 : f32
    %326 = vector.broadcast %cst_82 : f32 to vector<8x256xf32>
    %327 = arith.cmpf oge, %325, %326 : vector<8x256xf32>
    %cst_83 = arith.constant 0.00999999977 : f32
    %328 = vector.broadcast %cst_83 : f32 to vector<8x256xf32>
    %329 = arith.mulf %328, %325 : vector<8x256xf32>
    %330 = arith.select %327, %325, %329 : vector<8x256xi1>, vector<8x256xf32>
    %331 = vector.extract_strided_slice %330 {offsets = [0, 0], sizes = [8, 128], strides = [1, 1]} : vector<8x256xf32> to vector<8x128xf32>
    %332 = vector.extract_strided_slice %331 {offsets = [0, 0], sizes = [8, 32], strides = [1, 1]} : vector<8x128xf32> to vector<8x32xf32>
    %333 = vector.extract_strided_slice %331 {offsets = [0, 32], sizes = [8, 32], strides = [1, 1]} : vector<8x128xf32> to vector<8x32xf32>
    %334 = arith.maximumf %332, %333 : vector<8x32xf32>
    %335 = vector.extract_strided_slice %331 {offsets = [0, 64], sizes = [8, 32], strides = [1, 1]} : vector<8x128xf32> to vector<8x32xf32>
    %336 = vector.extract_strided_slice %331 {offsets = [0, 96], sizes = [8, 32], strides = [1, 1]} : vector<8x128xf32> to vector<8x32xf32>
    %337 = arith.maximumf %335, %336 : vector<8x32xf32>
    %338 = arith.maximumf %334, %337 : vector<8x32xf32>
    %339 = arith.truncf %338 : vector<8x32xf32> to vector<8x32xbf16>
    %340 = vector.extract_strided_slice %330 {offsets = [0, 128], sizes = [8, 128], strides = [1, 1]} : vector<8x256xf32> to vector<8x128xf32>
    %341 = vector.extract_strided_slice %340 {offsets = [0, 0], sizes = [8, 32], strides = [1, 1]} : vector<8x128xf32> to vector<8x32xf32>
    %342 = vector.extract_strided_slice %340 {offsets = [0, 32], sizes = [8, 32], strides = [1, 1]} : vector<8x128xf32> to vector<8x32xf32>
    %343 = arith.maximumf %341, %342 : vector<8x32xf32>
    %344 = vector.extract_strided_slice %340 {offsets = [0, 64], sizes = [8, 32], strides = [1, 1]} : vector<8x128xf32> to vector<8x32xf32>
    %345 = vector.extract_strided_slice %340 {offsets = [0, 96], sizes = [8, 32], strides = [1, 1]} : vector<8x128xf32> to vector<8x32xf32>
    %346 = arith.maximumf %344, %345 : vector<8x32xf32>
    %347 = arith.maximumf %343, %346 : vector<8x32xf32>
    %348 = arith.truncf %347 : vector<8x32xf32> to vector<8x32xbf16>
    %349 = vector.extract_strided_slice %0 {offsets = [0, 96], sizes = [8, 16], strides = [1, 1]} : vector<8x136xf32> to vector<8x16xf32>
    %c0_84 = arith.constant 0 : index
    %c0_85 = arith.constant 0 : index
    %350 = vector.load %arg2[%c0_84, %c0_85] : memref<16x256xf32, #tpu.memory_space<vmem>>, vector<16x256xf32>
    %cst_86 = arith.constant dense<0.000000e+00> : vector<8x256xf32>
    %351 = tpu.matmul %349, %350, %cst_86 {dimension_numbers = #tpu.dot_dimension_numbers<[1], [0], [0], [1], [0, 0, 1, 1], [], []>} : vector<8x16xf32>, vector<16x256xf32>, vector<8x256xf32> -> vector<8x256xf32>
    %c0_87 = arith.constant 0 : index
    %c0_88 = arith.constant 0 : index
    %352 = vector.load %arg3[%c0_87, %c0_88] : memref<1x256xf32, #tpu.memory_space<vmem>>, vector<1x256xf32>
    %353 = vector.broadcast %352 : vector<1x256xf32> to vector<8x256xf32>
    %354 = arith.addf %351, %353 : vector<8x256xf32>
    %cst_89 = arith.constant 0.000000e+00 : f32
    %355 = vector.broadcast %cst_89 : f32 to vector<8x256xf32>
    %356 = arith.cmpf oge, %354, %355 : vector<8x256xf32>
    %cst_90 = arith.constant 0.00999999977 : f32
    %357 = vector.broadcast %cst_90 : f32 to vector<8x256xf32>
    %358 = arith.mulf %357, %354 : vector<8x256xf32>
    %359 = arith.select %356, %354, %358 : vector<8x256xi1>, vector<8x256xf32>
    %360 = vector.extract_strided_slice %359 {offsets = [0, 0], sizes = [8, 128], strides = [1, 1]} : vector<8x256xf32> to vector<8x128xf32>
    %361 = vector.extract_strided_slice %360 {offsets = [0, 0], sizes = [8, 32], strides = [1, 1]} : vector<8x128xf32> to vector<8x32xf32>
    %362 = vector.extract_strided_slice %360 {offsets = [0, 32], sizes = [8, 32], strides = [1, 1]} : vector<8x128xf32> to vector<8x32xf32>
    %363 = arith.maximumf %361, %362 : vector<8x32xf32>
    %364 = vector.extract_strided_slice %360 {offsets = [0, 64], sizes = [8, 32], strides = [1, 1]} : vector<8x128xf32> to vector<8x32xf32>
    %365 = vector.extract_strided_slice %360 {offsets = [0, 96], sizes = [8, 32], strides = [1, 1]} : vector<8x128xf32> to vector<8x32xf32>
    %366 = arith.maximumf %364, %365 : vector<8x32xf32>
    %367 = arith.maximumf %363, %366 : vector<8x32xf32>
    %368 = arith.truncf %367 : vector<8x32xf32> to vector<8x32xbf16>
    %369 = vector.extract_strided_slice %359 {offsets = [0, 128], sizes = [8, 128], strides = [1, 1]} : vector<8x256xf32> to vector<8x128xf32>
    %370 = vector.extract_strided_slice %369 {offsets = [0, 0], sizes = [8, 32], strides = [1, 1]} : vector<8x128xf32> to vector<8x32xf32>
    %371 = vector.extract_strided_slice %369 {offsets = [0, 32], sizes = [8, 32], strides = [1, 1]} : vector<8x128xf32> to vector<8x32xf32>
    %372 = arith.maximumf %370, %371 : vector<8x32xf32>
    %373 = vector.extract_strided_slice %369 {offsets = [0, 64], sizes = [8, 32], strides = [1, 1]} : vector<8x128xf32> to vector<8x32xf32>
    %374 = vector.extract_strided_slice %369 {offsets = [0, 96], sizes = [8, 32], strides = [1, 1]} : vector<8x128xf32> to vector<8x32xf32>
    %375 = arith.maximumf %373, %374 : vector<8x32xf32>
    %376 = arith.maximumf %372, %375 : vector<8x32xf32>
    %377 = arith.truncf %376 : vector<8x32xf32> to vector<8x32xbf16>
    %378 = vector.extract_strided_slice %0 {offsets = [0, 104], sizes = [8, 16], strides = [1, 1]} : vector<8x136xf32> to vector<8x16xf32>
    %c0_91 = arith.constant 0 : index
    %c0_92 = arith.constant 0 : index
    %379 = vector.load %arg2[%c0_91, %c0_92] : memref<16x256xf32, #tpu.memory_space<vmem>>, vector<16x256xf32>
    %cst_93 = arith.constant dense<0.000000e+00> : vector<8x256xf32>
    %380 = tpu.matmul %378, %379, %cst_93 {dimension_numbers = #tpu.dot_dimension_numbers<[1], [0], [0], [1], [0, 0, 1, 1], [], []>} : vector<8x16xf32>, vector<16x256xf32>, vector<8x256xf32> -> vector<8x256xf32>
    %c0_94 = arith.constant 0 : index
    %c0_95 = arith.constant 0 : index
    %381 = vector.load %arg3[%c0_94, %c0_95] : memref<1x256xf32, #tpu.memory_space<vmem>>, vector<1x256xf32>
    %382 = vector.broadcast %381 : vector<1x256xf32> to vector<8x256xf32>
    %383 = arith.addf %380, %382 : vector<8x256xf32>
    %cst_96 = arith.constant 0.000000e+00 : f32
    %384 = vector.broadcast %cst_96 : f32 to vector<8x256xf32>
    %385 = arith.cmpf oge, %383, %384 : vector<8x256xf32>
    %cst_97 = arith.constant 0.00999999977 : f32
    %386 = vector.broadcast %cst_97 : f32 to vector<8x256xf32>
    %387 = arith.mulf %386, %383 : vector<8x256xf32>
    %388 = arith.select %385, %383, %387 : vector<8x256xi1>, vector<8x256xf32>
    %389 = vector.extract_strided_slice %388 {offsets = [0, 0], sizes = [8, 128], strides = [1, 1]} : vector<8x256xf32> to vector<8x128xf32>
    %390 = vector.extract_strided_slice %389 {offsets = [0, 0], sizes = [8, 32], strides = [1, 1]} : vector<8x128xf32> to vector<8x32xf32>
    %391 = vector.extract_strided_slice %389 {offsets = [0, 32], sizes = [8, 32], strides = [1, 1]} : vector<8x128xf32> to vector<8x32xf32>
    %392 = arith.maximumf %390, %391 : vector<8x32xf32>
    %393 = vector.extract_strided_slice %389 {offsets = [0, 64], sizes = [8, 32], strides = [1, 1]} : vector<8x128xf32> to vector<8x32xf32>
    %394 = vector.extract_strided_slice %389 {offsets = [0, 96], sizes = [8, 32], strides = [1, 1]} : vector<8x128xf32> to vector<8x32xf32>
    %395 = arith.maximumf %393, %394 : vector<8x32xf32>
    %396 = arith.maximumf %392, %395 : vector<8x32xf32>
    %397 = arith.truncf %396 : vector<8x32xf32> to vector<8x32xbf16>
    %398 = vector.extract_strided_slice %388 {offsets = [0, 128], sizes = [8, 128], strides = [1, 1]} : vector<8x256xf32> to vector<8x128xf32>
    %399 = vector.extract_strided_slice %398 {offsets = [0, 0], sizes = [8, 32], strides = [1, 1]} : vector<8x128xf32> to vector<8x32xf32>
    %400 = vector.extract_strided_slice %398 {offsets = [0, 32], sizes = [8, 32], strides = [1, 1]} : vector<8x128xf32> to vector<8x32xf32>
    %401 = arith.maximumf %399, %400 : vector<8x32xf32>
    %402 = vector.extract_strided_slice %398 {offsets = [0, 64], sizes = [8, 32], strides = [1, 1]} : vector<8x128xf32> to vector<8x32xf32>
    %403 = vector.extract_strided_slice %398 {offsets = [0, 96], sizes = [8, 32], strides = [1, 1]} : vector<8x128xf32> to vector<8x32xf32>
    %404 = arith.maximumf %402, %403 : vector<8x32xf32>
    %405 = arith.maximumf %401, %404 : vector<8x32xf32>
    %406 = arith.truncf %405 : vector<8x32xf32> to vector<8x32xbf16>
    %407 = vector.extract_strided_slice %0 {offsets = [0, 112], sizes = [8, 16], strides = [1, 1]} : vector<8x136xf32> to vector<8x16xf32>
    %c0_98 = arith.constant 0 : index
    %c0_99 = arith.constant 0 : index
    %408 = vector.load %arg2[%c0_98, %c0_99] : memref<16x256xf32, #tpu.memory_space<vmem>>, vector<16x256xf32>
    %cst_100 = arith.constant dense<0.000000e+00> : vector<8x256xf32>
    %409 = tpu.matmul %407, %408, %cst_100 {dimension_numbers = #tpu.dot_dimension_numbers<[1], [0], [0], [1], [0, 0, 1, 1], [], []>} : vector<8x16xf32>, vector<16x256xf32>, vector<8x256xf32> -> vector<8x256xf32>
    %c0_101 = arith.constant 0 : index
    %c0_102 = arith.constant 0 : index
    %410 = vector.load %arg3[%c0_101, %c0_102] : memref<1x256xf32, #tpu.memory_space<vmem>>, vector<1x256xf32>
    %411 = vector.broadcast %410 : vector<1x256xf32> to vector<8x256xf32>
    %412 = arith.addf %409, %411 : vector<8x256xf32>
    %cst_103 = arith.constant 0.000000e+00 : f32
    %413 = vector.broadcast %cst_103 : f32 to vector<8x256xf32>
    %414 = arith.cmpf oge, %412, %413 : vector<8x256xf32>
    %cst_104 = arith.constant 0.00999999977 : f32
    %415 = vector.broadcast %cst_104 : f32 to vector<8x256xf32>
    %416 = arith.mulf %415, %412 : vector<8x256xf32>
    %417 = arith.select %414, %412, %416 : vector<8x256xi1>, vector<8x256xf32>
    %418 = vector.extract_strided_slice %417 {offsets = [0, 0], sizes = [8, 128], strides = [1, 1]} : vector<8x256xf32> to vector<8x128xf32>
    %419 = vector.extract_strided_slice %418 {offsets = [0, 0], sizes = [8, 32], strides = [1, 1]} : vector<8x128xf32> to vector<8x32xf32>
    %420 = vector.extract_strided_slice %418 {offsets = [0, 32], sizes = [8, 32], strides = [1, 1]} : vector<8x128xf32> to vector<8x32xf32>
    %421 = arith.maximumf %419, %420 : vector<8x32xf32>
    %422 = vector.extract_strided_slice %418 {offsets = [0, 64], sizes = [8, 32], strides = [1, 1]} : vector<8x128xf32> to vector<8x32xf32>
    %423 = vector.extract_strided_slice %418 {offsets = [0, 96], sizes = [8, 32], strides = [1, 1]} : vector<8x128xf32> to vector<8x32xf32>
    %424 = arith.maximumf %422, %423 : vector<8x32xf32>
    %425 = arith.maximumf %421, %424 : vector<8x32xf32>
    %426 = arith.truncf %425 : vector<8x32xf32> to vector<8x32xbf16>
    %427 = vector.extract_strided_slice %417 {offsets = [0, 128], sizes = [8, 128], strides = [1, 1]} : vector<8x256xf32> to vector<8x128xf32>
    %428 = vector.extract_strided_slice %427 {offsets = [0, 0], sizes = [8, 32], strides = [1, 1]} : vector<8x128xf32> to vector<8x32xf32>
    %429 = vector.extract_strided_slice %427 {offsets = [0, 32], sizes = [8, 32], strides = [1, 1]} : vector<8x128xf32> to vector<8x32xf32>
    %430 = arith.maximumf %428, %429 : vector<8x32xf32>
    %431 = vector.extract_strided_slice %427 {offsets = [0, 64], sizes = [8, 32], strides = [1, 1]} : vector<8x128xf32> to vector<8x32xf32>
    %432 = vector.extract_strided_slice %427 {offsets = [0, 96], sizes = [8, 32], strides = [1, 1]} : vector<8x128xf32> to vector<8x32xf32>
    %433 = arith.maximumf %431, %432 : vector<8x32xf32>
    %434 = arith.maximumf %430, %433 : vector<8x32xf32>
    %435 = arith.truncf %434 : vector<8x32xf32> to vector<8x32xbf16>
    %436 = vector.extract_strided_slice %0 {offsets = [0, 120], sizes = [8, 16], strides = [1, 1]} : vector<8x136xf32> to vector<8x16xf32>
    %c0_105 = arith.constant 0 : index
    %c0_106 = arith.constant 0 : index
    %437 = vector.load %arg2[%c0_105, %c0_106] : memref<16x256xf32, #tpu.memory_space<vmem>>, vector<16x256xf32>
    %cst_107 = arith.constant dense<0.000000e+00> : vector<8x256xf32>
    %438 = tpu.matmul %436, %437, %cst_107 {dimension_numbers = #tpu.dot_dimension_numbers<[1], [0], [0], [1], [0, 0, 1, 1], [], []>} : vector<8x16xf32>, vector<16x256xf32>, vector<8x256xf32> -> vector<8x256xf32>
    %c0_108 = arith.constant 0 : index
    %c0_109 = arith.constant 0 : index
    %439 = vector.load %arg3[%c0_108, %c0_109] : memref<1x256xf32, #tpu.memory_space<vmem>>, vector<1x256xf32>
    %440 = vector.broadcast %439 : vector<1x256xf32> to vector<8x256xf32>
    %441 = arith.addf %438, %440 : vector<8x256xf32>
    %cst_110 = arith.constant 0.000000e+00 : f32
    %442 = vector.broadcast %cst_110 : f32 to vector<8x256xf32>
    %443 = arith.cmpf oge, %441, %442 : vector<8x256xf32>
    %cst_111 = arith.constant 0.00999999977 : f32
    %444 = vector.broadcast %cst_111 : f32 to vector<8x256xf32>
    %445 = arith.mulf %444, %441 : vector<8x256xf32>
    %446 = arith.select %443, %441, %445 : vector<8x256xi1>, vector<8x256xf32>
    %447 = vector.extract_strided_slice %446 {offsets = [0, 0], sizes = [8, 128], strides = [1, 1]} : vector<8x256xf32> to vector<8x128xf32>
    %448 = vector.extract_strided_slice %447 {offsets = [0, 0], sizes = [8, 32], strides = [1, 1]} : vector<8x128xf32> to vector<8x32xf32>
    %449 = vector.extract_strided_slice %447 {offsets = [0, 32], sizes = [8, 32], strides = [1, 1]} : vector<8x128xf32> to vector<8x32xf32>
    %450 = arith.maximumf %448, %449 : vector<8x32xf32>
    %451 = vector.extract_strided_slice %447 {offsets = [0, 64], sizes = [8, 32], strides = [1, 1]} : vector<8x128xf32> to vector<8x32xf32>
    %452 = vector.extract_strided_slice %447 {offsets = [0, 96], sizes = [8, 32], strides = [1, 1]} : vector<8x128xf32> to vector<8x32xf32>
    %453 = arith.maximumf %451, %452 : vector<8x32xf32>
    %454 = arith.maximumf %450, %453 : vector<8x32xf32>
    %455 = arith.truncf %454 : vector<8x32xf32> to vector<8x32xbf16>
    %456 = vector.extract_strided_slice %446 {offsets = [0, 128], sizes = [8, 128], strides = [1, 1]} : vector<8x256xf32> to vector<8x128xf32>
    %457 = vector.extract_strided_slice %456 {offsets = [0, 0], sizes = [8, 32], strides = [1, 1]} : vector<8x128xf32> to vector<8x32xf32>
    %458 = vector.extract_strided_slice %456 {offsets = [0, 32], sizes = [8, 32], strides = [1, 1]} : vector<8x128xf32> to vector<8x32xf32>
    %459 = arith.maximumf %457, %458 : vector<8x32xf32>
    %460 = vector.extract_strided_slice %456 {offsets = [0, 64], sizes = [8, 32], strides = [1, 1]} : vector<8x128xf32> to vector<8x32xf32>
    %461 = vector.extract_strided_slice %456 {offsets = [0, 96], sizes = [8, 32], strides = [1, 1]} : vector<8x128xf32> to vector<8x32xf32>
    %462 = arith.maximumf %460, %461 : vector<8x32xf32>
    %463 = arith.maximumf %459, %462 : vector<8x32xf32>
    %464 = arith.truncf %463 : vector<8x32xf32> to vector<8x32xbf16>
    %465 = tpu.concatenate %20, %29, %49, %58, %78, %87, %107, %116, %136, %145, %165, %174, %194, %203, %223, %232 in 0 : vector<8x32xbf16>, vector<8x32xbf16>, vector<8x32xbf16>, vector<8x32xbf16>, vector<8x32xbf16>, vector<8x32xbf16>, vector<8x32xbf16>, vector<8x32xbf16>, vector<8x32xbf16>, vector<8x32xbf16>, vector<8x32xbf16>, vector<8x32xbf16>, vector<8x32xbf16>, vector<8x32xbf16>, vector<8x32xbf16>, vector<8x32xbf16> -> vector<128x32xbf16>
    %466 = tpu.concatenate %252, %261, %281, %290, %310, %319, %339, %348, %368, %377, %397, %406, %426, %435, %455, %464 in 0 : vector<8x32xbf16>, vector<8x32xbf16>, vector<8x32xbf16>, vector<8x32xbf16>, vector<8x32xbf16>, vector<8x32xbf16>, vector<8x32xbf16>, vector<8x32xbf16>, vector<8x32xbf16>, vector<8x32xbf16>, vector<8x32xbf16>, vector<8x32xbf16>, vector<8x32xbf16>, vector<8x32xbf16>, vector<8x32xbf16>, vector<8x32xbf16> -> vector<128x32xbf16>
    %467 = tpu.concatenate %465, %466 in 0 : vector<128x32xbf16>, vector<128x32xbf16> -> vector<256x32xbf16>
    %cst_112 = arith.constant 0.000000e+00 : bf16
    %468 = vector.broadcast %cst_112 : bf16 to vector<8x32xbf16>
    %469 = vector.extract_strided_slice %467 {offsets = [0, 0], sizes = [248, 32], strides = [1, 1]} : vector<256x32xbf16> to vector<248x32xbf16>
    %470 = tpu.concatenate %468, %469 in 0 : vector<8x32xbf16>, vector<248x32xbf16> -> vector<256x32xbf16>
    %471 = vector.extract_strided_slice %467 {offsets = [8, 0], sizes = [248, 32], strides = [1, 1]} : vector<256x32xbf16> to vector<248x32xbf16>
    %472 = tpu.concatenate %471, %468 in 0 : vector<248x32xbf16>, vector<8x32xbf16> -> vector<256x32xbf16>
    %c0_113 = arith.constant 0 : index
    %c0_114 = arith.constant 0 : index
    %473 = vector.load %arg4[%c0_113, %c0_114] : memref<96x64xbf16, #tpu.memory_space<vmem>>, vector<96x64xbf16>
    %474 = vector.extract_strided_slice %473 {offsets = [0, 0], sizes = [32, 64], strides = [1, 1]} : vector<96x64xbf16> to vector<32x64xbf16>
    %cst_115 = arith.constant dense<0.000000e+00> : vector<256x64xf32>
    %475 = tpu.matmul %470, %474, %cst_115 {dimension_numbers = #tpu.dot_dimension_numbers<[1], [0], [0], [1], [0, 0, 1, 1], [], []>} : vector<256x32xbf16>, vector<32x64xbf16>, vector<256x64xf32> -> vector<256x64xf32>
    %476 = vector.extract_strided_slice %473 {offsets = [32, 0], sizes = [32, 64], strides = [1, 1]} : vector<96x64xbf16> to vector<32x64xbf16>
    %cst_116 = arith.constant dense<0.000000e+00> : vector<256x64xf32>
    %477 = tpu.matmul %467, %476, %cst_116 {dimension_numbers = #tpu.dot_dimension_numbers<[1], [0], [0], [1], [0, 0, 1, 1], [], []>} : vector<256x32xbf16>, vector<32x64xbf16>, vector<256x64xf32> -> vector<256x64xf32>
    %478 = arith.addf %475, %477 : vector<256x64xf32>
    %479 = vector.extract_strided_slice %473 {offsets = [64, 0], sizes = [32, 64], strides = [1, 1]} : vector<96x64xbf16> to vector<32x64xbf16>
    %cst_117 = arith.constant dense<0.000000e+00> : vector<256x64xf32>
    %480 = tpu.matmul %472, %479, %cst_117 {dimension_numbers = #tpu.dot_dimension_numbers<[1], [0], [0], [1], [0, 0, 1, 1], [], []>} : vector<256x32xbf16>, vector<32x64xbf16>, vector<256x64xf32> -> vector<256x64xf32>
    %481 = arith.addf %478, %480 : vector<256x64xf32>
    %c0_118 = arith.constant 0 : index
    %c0_119 = arith.constant 0 : index
    %482 = vector.load %arg5[%c0_118, %c0_119] : memref<1x64xf32, #tpu.memory_space<vmem>>, vector<1x64xf32>
    %483 = vector.broadcast %482 : vector<1x64xf32> to vector<256x64xf32>
    %484 = arith.addf %481, %483 : vector<256x64xf32>
    %cst_120 = arith.constant 0.000000e+00 : f32
    %485 = vector.broadcast %cst_120 : f32 to vector<256x64xf32>
    %486 = arith.cmpf oge, %484, %485 : vector<256x64xf32>
    %cst_121 = arith.constant 0.00999999977 : f32
    %487 = vector.broadcast %cst_121 : f32 to vector<256x64xf32>
    %488 = arith.mulf %487, %484 : vector<256x64xf32>
    %489 = arith.select %486, %484, %488 : vector<256x64xi1>, vector<256x64xf32>
    %490 = vector.extract_strided_slice %489 {offsets = [0, 0], sizes = [8, 64], strides = [1, 1]} : vector<256x64xf32> to vector<8x64xf32>
    %491 = vector.extract_strided_slice %489 {offsets = [8, 0], sizes = [8, 64], strides = [1, 1]} : vector<256x64xf32> to vector<8x64xf32>
    %492 = arith.maximumf %490, %491 : vector<8x64xf32>
    %493 = arith.truncf %492 : vector<8x64xf32> to vector<8x64xbf16>
    %494 = vector.extract_strided_slice %489 {offsets = [16, 0], sizes = [8, 64], strides = [1, 1]} : vector<256x64xf32> to vector<8x64xf32>
    %495 = vector.extract_strided_slice %489 {offsets = [24, 0], sizes = [8, 64], strides = [1, 1]} : vector<256x64xf32> to vector<8x64xf32>
    %496 = arith.maximumf %494, %495 : vector<8x64xf32>
    %497 = arith.truncf %496 : vector<8x64xf32> to vector<8x64xbf16>
    %498 = vector.extract_strided_slice %489 {offsets = [32, 0], sizes = [8, 64], strides = [1, 1]} : vector<256x64xf32> to vector<8x64xf32>
    %499 = vector.extract_strided_slice %489 {offsets = [40, 0], sizes = [8, 64], strides = [1, 1]} : vector<256x64xf32> to vector<8x64xf32>
    %500 = arith.maximumf %498, %499 : vector<8x64xf32>
    %501 = arith.truncf %500 : vector<8x64xf32> to vector<8x64xbf16>
    %502 = vector.extract_strided_slice %489 {offsets = [48, 0], sizes = [8, 64], strides = [1, 1]} : vector<256x64xf32> to vector<8x64xf32>
    %503 = vector.extract_strided_slice %489 {offsets = [56, 0], sizes = [8, 64], strides = [1, 1]} : vector<256x64xf32> to vector<8x64xf32>
    %504 = arith.maximumf %502, %503 : vector<8x64xf32>
    %505 = arith.truncf %504 : vector<8x64xf32> to vector<8x64xbf16>
    %506 = vector.extract_strided_slice %489 {offsets = [64, 0], sizes = [8, 64], strides = [1, 1]} : vector<256x64xf32> to vector<8x64xf32>
    %507 = vector.extract_strided_slice %489 {offsets = [72, 0], sizes = [8, 64], strides = [1, 1]} : vector<256x64xf32> to vector<8x64xf32>
    %508 = arith.maximumf %506, %507 : vector<8x64xf32>
    %509 = arith.truncf %508 : vector<8x64xf32> to vector<8x64xbf16>
    %510 = vector.extract_strided_slice %489 {offsets = [80, 0], sizes = [8, 64], strides = [1, 1]} : vector<256x64xf32> to vector<8x64xf32>
    %511 = vector.extract_strided_slice %489 {offsets = [88, 0], sizes = [8, 64], strides = [1, 1]} : vector<256x64xf32> to vector<8x64xf32>
    %512 = arith.maximumf %510, %511 : vector<8x64xf32>
    %513 = arith.truncf %512 : vector<8x64xf32> to vector<8x64xbf16>
    %514 = vector.extract_strided_slice %489 {offsets = [96, 0], sizes = [8, 64], strides = [1, 1]} : vector<256x64xf32> to vector<8x64xf32>
    %515 = vector.extract_strided_slice %489 {offsets = [104, 0], sizes = [8, 64], strides = [1, 1]} : vector<256x64xf32> to vector<8x64xf32>
    %516 = arith.maximumf %514, %515 : vector<8x64xf32>
    %517 = arith.truncf %516 : vector<8x64xf32> to vector<8x64xbf16>
    %518 = vector.extract_strided_slice %489 {offsets = [112, 0], sizes = [8, 64], strides = [1, 1]} : vector<256x64xf32> to vector<8x64xf32>
    %519 = vector.extract_strided_slice %489 {offsets = [120, 0], sizes = [8, 64], strides = [1, 1]} : vector<256x64xf32> to vector<8x64xf32>
    %520 = arith.maximumf %518, %519 : vector<8x64xf32>
    %521 = arith.truncf %520 : vector<8x64xf32> to vector<8x64xbf16>
    %522 = vector.extract_strided_slice %489 {offsets = [128, 0], sizes = [8, 64], strides = [1, 1]} : vector<256x64xf32> to vector<8x64xf32>
    %523 = vector.extract_strided_slice %489 {offsets = [136, 0], sizes = [8, 64], strides = [1, 1]} : vector<256x64xf32> to vector<8x64xf32>
    %524 = arith.maximumf %522, %523 : vector<8x64xf32>
    %525 = arith.truncf %524 : vector<8x64xf32> to vector<8x64xbf16>
    %526 = vector.extract_strided_slice %489 {offsets = [144, 0], sizes = [8, 64], strides = [1, 1]} : vector<256x64xf32> to vector<8x64xf32>
    %527 = vector.extract_strided_slice %489 {offsets = [152, 0], sizes = [8, 64], strides = [1, 1]} : vector<256x64xf32> to vector<8x64xf32>
    %528 = arith.maximumf %526, %527 : vector<8x64xf32>
    %529 = arith.truncf %528 : vector<8x64xf32> to vector<8x64xbf16>
    %530 = vector.extract_strided_slice %489 {offsets = [160, 0], sizes = [8, 64], strides = [1, 1]} : vector<256x64xf32> to vector<8x64xf32>
    %531 = vector.extract_strided_slice %489 {offsets = [168, 0], sizes = [8, 64], strides = [1, 1]} : vector<256x64xf32> to vector<8x64xf32>
    %532 = arith.maximumf %530, %531 : vector<8x64xf32>
    %533 = arith.truncf %532 : vector<8x64xf32> to vector<8x64xbf16>
    %534 = vector.extract_strided_slice %489 {offsets = [176, 0], sizes = [8, 64], strides = [1, 1]} : vector<256x64xf32> to vector<8x64xf32>
    %535 = vector.extract_strided_slice %489 {offsets = [184, 0], sizes = [8, 64], strides = [1, 1]} : vector<256x64xf32> to vector<8x64xf32>
    %536 = arith.maximumf %534, %535 : vector<8x64xf32>
    %537 = arith.truncf %536 : vector<8x64xf32> to vector<8x64xbf16>
    %538 = vector.extract_strided_slice %489 {offsets = [192, 0], sizes = [8, 64], strides = [1, 1]} : vector<256x64xf32> to vector<8x64xf32>
    %539 = vector.extract_strided_slice %489 {offsets = [200, 0], sizes = [8, 64], strides = [1, 1]} : vector<256x64xf32> to vector<8x64xf32>
    %540 = arith.maximumf %538, %539 : vector<8x64xf32>
    %541 = arith.truncf %540 : vector<8x64xf32> to vector<8x64xbf16>
    %542 = vector.extract_strided_slice %489 {offsets = [208, 0], sizes = [8, 64], strides = [1, 1]} : vector<256x64xf32> to vector<8x64xf32>
    %543 = vector.extract_strided_slice %489 {offsets = [216, 0], sizes = [8, 64], strides = [1, 1]} : vector<256x64xf32> to vector<8x64xf32>
    %544 = arith.maximumf %542, %543 : vector<8x64xf32>
    %545 = arith.truncf %544 : vector<8x64xf32> to vector<8x64xbf16>
    %546 = vector.extract_strided_slice %489 {offsets = [224, 0], sizes = [8, 64], strides = [1, 1]} : vector<256x64xf32> to vector<8x64xf32>
    %547 = vector.extract_strided_slice %489 {offsets = [232, 0], sizes = [8, 64], strides = [1, 1]} : vector<256x64xf32> to vector<8x64xf32>
    %548 = arith.maximumf %546, %547 : vector<8x64xf32>
    %549 = arith.truncf %548 : vector<8x64xf32> to vector<8x64xbf16>
    %550 = vector.extract_strided_slice %489 {offsets = [240, 0], sizes = [8, 64], strides = [1, 1]} : vector<256x64xf32> to vector<8x64xf32>
    %551 = vector.extract_strided_slice %489 {offsets = [248, 0], sizes = [8, 64], strides = [1, 1]} : vector<256x64xf32> to vector<8x64xf32>
    %552 = arith.maximumf %550, %551 : vector<8x64xf32>
    %553 = arith.truncf %552 : vector<8x64xf32> to vector<8x64xbf16>
    %554 = tpu.concatenate %493, %497, %501, %505, %509, %513, %517, %521, %525, %529, %533, %537, %541, %545, %549, %553 in 1 : vector<8x64xbf16>, vector<8x64xbf16>, vector<8x64xbf16>, vector<8x64xbf16>, vector<8x64xbf16>, vector<8x64xbf16>, vector<8x64xbf16>, vector<8x64xbf16>, vector<8x64xbf16>, vector<8x64xbf16>, vector<8x64xbf16>, vector<8x64xbf16>, vector<8x64xbf16>, vector<8x64xbf16>, vector<8x64xbf16>, vector<8x64xbf16> -> vector<8x1024xbf16>
    %c0_122 = arith.constant 0 : index
    %c0_123 = arith.constant 0 : index
    %555 = vector.load %arg6[%c0_122, %c0_123] : memref<1024x128xbf16, #tpu.memory_space<vmem>>, vector<1024x128xbf16>
    %cst_124 = arith.constant dense<0.000000e+00> : vector<8x128xf32>
    %556 = tpu.matmul %554, %555, %cst_124 {dimension_numbers = #tpu.dot_dimension_numbers<[1], [0], [0], [1], [0, 0, 1, 1], [], []>} : vector<8x1024xbf16>, vector<1024x128xbf16>, vector<8x128xf32> -> vector<8x128xf32>
    %c0_125 = arith.constant 0 : index
    %c0_126 = arith.constant 0 : index
    %557 = vector.load %arg7[%c0_125, %c0_126] : memref<1x128xf32, #tpu.memory_space<vmem>>, vector<1x128xf32>
    %558 = vector.broadcast %557 : vector<1x128xf32> to vector<8x128xf32>
    %559 = arith.addf %556, %558 : vector<8x128xf32>
    %cst_127 = arith.constant 0.000000e+00 : f32
    %560 = vector.broadcast %cst_127 : f32 to vector<8x128xf32>
    %561 = arith.cmpf oge, %559, %560 : vector<8x128xf32>
    %cst_128 = arith.constant 0.00999999977 : f32
    %562 = vector.broadcast %cst_128 : f32 to vector<8x128xf32>
    %563 = arith.mulf %562, %559 : vector<8x128xf32>
    %564 = arith.select %561, %559, %563 : vector<8x128xi1>, vector<8x128xf32>
    %565 = arith.truncf %564 : vector<8x128xf32> to vector<8x128xbf16>
    %c0_129 = arith.constant 0 : index
    %c0_130 = arith.constant 0 : index
    %566 = vector.load %arg8[%c0_129, %c0_130] : memref<128x128xbf16, #tpu.memory_space<vmem>>, vector<128x128xbf16>
    %cst_131 = arith.constant dense<0.000000e+00> : vector<8x128xf32>
    %567 = tpu.matmul %565, %566, %cst_131 {dimension_numbers = #tpu.dot_dimension_numbers<[1], [0], [0], [1], [0, 0, 1, 1], [], []>} : vector<8x128xbf16>, vector<128x128xbf16>, vector<8x128xf32> -> vector<8x128xf32>
    %c0_132 = arith.constant 0 : index
    %c0_133 = arith.constant 0 : index
    %568 = vector.load %arg9[%c0_132, %c0_133] : memref<1x128xf32, #tpu.memory_space<vmem>>, vector<1x128xf32>
    %569 = vector.broadcast %568 : vector<1x128xf32> to vector<8x128xf32>
    %570 = arith.addf %567, %569 : vector<8x128xf32>
    %c0_134 = arith.constant 0 : index
    %c0_135 = arith.constant 0 : index
    %571 = vector.load %arg10[%c0_134, %c0_135] : memref<8x128xf32, #tpu.memory_space<vmem>>, vector<8x128xf32>
    tpu.vector_store %arg10[%c0_134, %c0_135], %570 {strides = array<i32>} : memref<8x128xf32, #tpu.memory_space<vmem>>, vector<8x128xf32>,
    return
  }
  func.func @transform_0(%arg0: i32) -> (i32, i32) {
    %c0_i32 = arith.constant 0 : i32
    %c0_i32_0 = arith.constant 0 : i32
    return %arg0, %c0_i32 : i32, i32
  }
  func.func @transform_1(%arg0: i32) -> (i32, i32) {
    %c0_i32 = arith.constant 0 : i32
    %c0_i32_0 = arith.constant 0 : i32
    %c0_i32_1 = arith.constant 0 : i32
    return %c0_i32, %c0_i32_0 : i32, i32
  }
  func.func @transform_2(%arg0: i32) -> (i32, i32) {
    %c0_i32 = arith.constant 0 : i32
    %c0_i32_0 = arith.constant 0 : i32
    %c0_i32_1 = arith.constant 0 : i32
    return %c0_i32, %c0_i32_0 : i32, i32
  }
  func.func @transform_3(%arg0: i32) -> (i32, i32) {
    %c0_i32 = arith.constant 0 : i32
    %c0_i32_0 = arith.constant 0 : i32
    %c0_i32_1 = arith.constant 0 : i32
    return %c0_i32, %c0_i32_0 : i32, i32
  }
  func.func @transform_4(%arg0: i32) -> (i32, i32) {
    %c0_i32 = arith.constant 0 : i32
    %c0_i32_0 = arith.constant 0 : i32
    %c0_i32_1 = arith.constant 0 : i32
    return %c0_i32, %c0_i32_0 : i32, i32
  }
  func.func @transform_5(%arg0: i32) -> (i32, i32) {
    %c0_i32 = arith.constant 0 : i32
    %c0_i32_0 = arith.constant 0 : i32
    %c0_i32_1 = arith.constant 0 : i32
    return %c0_i32, %c0_i32_0 : i32, i32
  }
  func.func @transform_6(%arg0: i32) -> (i32, i32) {
    %c0_i32 = arith.constant 0 : i32
    %c0_i32_0 = arith.constant 0 : i32
    %c0_i32_1 = arith.constant 0 : i32
    return %c0_i32, %c0_i32_0 : i32, i32
  }
  func.func @transform_7(%arg0: i32) -> (i32, i32) {
    %c0_i32 = arith.constant 0 : i32
    %c0_i32_0 = arith.constant 0 : i32
    %c0_i32_1 = arith.constant 0 : i32
    return %c0_i32, %c0_i32_0 : i32, i32
  }
  func.func @transform_8(%arg0: i32) -> (i32, i32) {
    %c0_i32 = arith.constant 0 : i32
    %c0_i32_0 = arith.constant 0 : i32
    %c0_i32_1 = arith.constant 0 : i32
    return %c0_i32, %c0_i32_0 : i32, i32
  }
  func.func @transform_9(%arg0: i32) -> (i32, i32) {
    %c0_i32 = arith.constant 0 : i32
    %c0_i32_0 = arith.constant 0 : i32
    return %arg0, %c0_i32 : i32, i32
  }
}

</mosaic_0001>

<llo_original>
// kernel: tpu_custom_call.1
$region0: #{tpu_custom_call.1}
  #allocation0 [shape = 'u32[]', space=smem, size = 0x4, offset = 0x4, fixed_abs, tag = 'smem constant byte address 0x4 - core index']
  #allocation1 [shape = 'u32[144,128]{1,0:T(1,128)}', space=vmem, size = 0x12000, scoped, tag = 'internal scratch']
  %s0 = inlined_call_operand.vmem [shape: f32[8,136], index: 0, kind: input, shape index: {}]
  %s1 = inlined_call_operand.hbm [shape: f32[16,256], index: 1, kind: input, shape index: {}]
  %s2 = inlined_call_operand.vmem [shape: f32[1,256], index: 2, kind: input, shape index: {}]
  %s3 = inlined_call_operand.vmem [shape: bf16[96,64], index: 3, kind: input, shape index: {}]
  %s4 = inlined_call_operand.vmem [shape: f32[1,64], index: 4, kind: input, shape index: {}]
  %s5 = inlined_call_operand.hbm [shape: bf16[1024,128], index: 5, kind: input, shape index: {}]
  %s6 = inlined_call_operand.vmem [shape: f32[1,128], index: 6, kind: input, shape index: {}]
  %s7 = inlined_call_operand.vmem [shape: bf16[128,128], index: 7, kind: input, shape index: {}]
  %s8 = inlined_call_operand.vmem [shape: f32[1,128], index: 8, kind: input, shape index: {}]
  %s9 = inlined_call_operand.hbm [shape: f32[8,128], index: 9, kind: output, shape index: {}]
  %s10 = sld [smem:[#allocation0]]
  $region54: #{tpu_custom_call.1} parent=0
    _
  %s12 = ssub.s32 1, %s10
  %s13 = scalar_select 0, %s12, %s10
  $region1: #{tpu_custom_call.1} parent=0
    #allocation2 [shape = 'u8[16384]{0}', space=vmem, size = 0x4000, scoped, tag = 'input window, operand 1, single buffered']
    #allocation3 [shape = 's32[1]{0}', space=sflag, size = 0x4, scoped, tag = 'scoped memory for tpu_custom_call.1']
    #allocation4 [shape = 's32[1]{0}', space=sflag, size = 0x4, scoped, tag = 'scoped memory for tpu_custom_call.1']
    #allocation5 [shape = 'u8[262144]{0}', space=vmem, size = 0x40000, scoped, tag = 'input window, operand 5, single buffered']
    #allocation6 [shape = 's32[1]{0}', space=sflag, size = 0x4, scoped, tag = 'scoped memory for tpu_custom_call.1']
    #allocation7 [shape = 'u8[4096]{0}', space=vmem, size = 0x1000, scoped, tag = 'output window, operand 0, single buffered']
    %14 = vsyncpa [#allocation3], 0
    %15 = vsyncpa [#allocation6], 0
    %16 = vsyncpa [#allocation4], 0
    // Predicated region
    $region2: #{tpu_custom_call.1} parent=1 // pred_check
      _
    $region3: #{tpu_custom_call.1} parent=1 // pred_check_branch
      %18 = sbr.rel (0) target = $region5
    $region4: #{tpu_custom_call.1} parent=1 // pred_region
      _
    $region5: #{tpu_custom_call.1} parent=1 // pred_fallthru
      _
    // Predicated region
    $region6: #{tpu_custom_call.1} parent=1 // pred_check
      _
    $region7: #{tpu_custom_call.1} parent=1 // pred_check_branch
      %20 = sbr.rel (0) target = $region9
    $region8: #{tpu_custom_call.1} parent=1 // pred_region
      %s22 = ssub.s32 512, 512
      %23 = vsyncadd [#allocation3], %s22
      %s24 = sshll.u32 [#allocation2], 4
      %s25 = int_to_ptr.vmem [resolvable:$true] %s24
      %30 = dma.hbm_to_vmem [thread:$0]  %s1, 512, %s25, [#allocation3], 256, 256, 16
    $region9: #{tpu_custom_call.1} parent=1 // pred_fallthru
      _
    // Predicated region
    $region10: #{tpu_custom_call.1} parent=1 // pred_check
      _
    $region11: #{tpu_custom_call.1} parent=1 // pred_check_branch
      %32 = sbr.rel (0) target = $region13
    $region12: #{tpu_custom_call.1} parent=1 // pred_region
      _
    $region13: #{tpu_custom_call.1} parent=1 // pred_fallthru
      _
    // Predicated region
    $region14: #{tpu_custom_call.1} parent=1 // pred_check
      _
    $region15: #{tpu_custom_call.1} parent=1 // pred_check_branch
      %34 = sbr.rel (0) target = $region17
    $region16: #{tpu_custom_call.1} parent=1 // pred_region
      _
    $region17: #{tpu_custom_call.1} parent=1 // pred_fallthru
      _
    // Predicated region
    $region18: #{tpu_custom_call.1} parent=1 // pred_check
      _
    $region19: #{tpu_custom_call.1} parent=1 // pred_check_branch
      %36 = sbr.rel (0) target = $region21
    $region20: #{tpu_custom_call.1} parent=1 // pred_region
      _
    $region21: #{tpu_custom_call.1} parent=1 // pred_fallthru
      _
    // Predicated region
    $region22: #{tpu_custom_call.1} parent=1 // pred_check
      _
    $region23: #{tpu_custom_call.1} parent=1 // pred_check_branch
      %38 = sbr.rel (0) target = $region25
    $region24: #{tpu_custom_call.1} parent=1 // pred_region
      %s40 = ssub.s32 8192, 8192
      %41 = vsyncadd [#allocation6], %s40
      %s42 = sshll.u32 [#allocation5], 4
      %s43 = int_to_ptr.vmem [resolvable:$true] %s42
      %48 = dma.hbm_to_vmem [thread:$0]  %s5, 8192, %s43, [#allocation6], 64, 64, 4
    $region25: #{tpu_custom_call.1} parent=1 // pred_fallthru
      _
    // Predicated region
    $region26: #{tpu_custom_call.1} parent=1 // pred_check
      _
    $region27: #{tpu_custom_call.1} parent=1 // pred_check_branch
      %50 = sbr.rel (0) target = $region29
    $region28: #{tpu_custom_call.1} parent=1 // pred_region
      _
    $region29: #{tpu_custom_call.1} parent=1 // pred_fallthru
      _
    // Predicated region
    $region30: #{tpu_custom_call.1} parent=1 // pred_check
      _
    $region31: #{tpu_custom_call.1} parent=1 // pred_check_branch
      %52 = sbr.rel (0) target = $region33
    $region32: #{tpu_custom_call.1} parent=1 // pred_region
      _
    $region33: #{tpu_custom_call.1} parent=1 // pred_fallthru
      _
    // Predicated region
    $region34: #{tpu_custom_call.1} parent=1 // pred_check
      _
    $region35: #{tpu_custom_call.1} parent=1 // pred_check_branch
      %54 = sbr.rel (0) target = $region37
    $region36: #{tpu_custom_call.1} parent=1 // pred_region
      _
    $region37: #{tpu_custom_call.1} parent=1 // pred_fallthru
      _
    // Predicated region
    $region38: #{tpu_custom_call.1} parent=1 // pred_check
      _
    $region39: #{tpu_custom_call.1} parent=1 // pred_check_branch
      %56 = sbr.rel (0) target = $region41
    $region40: #{tpu_custom_call.1} parent=1 // pred_region
      %57 = dma.done [#allocation3], 512
    $region41: #{tpu_custom_call.1} parent=1 // pred_fallthru
      _
    // Predicated region
    $region42: #{tpu_custom_call.1} parent=1 // pred_check
      _
    $region43: #{tpu_custom_call.1} parent=1 // pred_check_branch
      %59 = sbr.rel (0) target = $region45
    $region44: #{tpu_custom_call.1} parent=1 // pred_region
      %60 = dma.done [#allocation6], 8192
    $region45: #{tpu_custom_call.1} parent=1 // pred_fallthru
      _
    %v62 = vld [vmem:[%s0] sm:$0xff]
    %v63 = vld [vmem:[%s0 + $0x8] sm:$0xff]
    %v64 = vld [vmem:[#allocation2] sm:$0xff]
    %v65 = vld [vmem:[#allocation2 + $0x8] sm:$0xff]
    %v66 = vld [vmem:[#allocation2 + $0x10] sm:$0xff]
    %v67 = vld [vmem:[#allocation2 + $0x18] sm:$0xff]
    %v68 = vld [vmem:[%s2] sm:$0x3]
    %v70 = vlaneseq
    %v71 = vshrl.u32 %v70, 7
    %v72 = vsub.s32 0, %v71
    %v73 = vrot.slane %v68, %v72
    %v74 = vlaneseq
    %v75 = vshrl.u32 %v74, 7
    %v76 = vsub.s32 1, %v75
    %v77 = vrot.slane %v68, %v76
    %vm80 = vcmask 130048
    %v82 = vsel %vm80, %v62, 0
    %84 = vmatprep.subr.mxu0 0.0
    %85 = vmatpush1.msra.mxu0 0.0
    %86 = vmatprep.subr.mxu0 0.0
    %87 = vmatpush1.msra.mxu0 0.0
    %88 = vmatprep.subr.mxu0 0.0
    %89 = vmatpush1.msra.mxu0 0.0
    %90 = vmatprep.subr.mxu0 0.0
    %91 = vmatpush1.msra.mxu0 0.0
    %92 = vmatprep.subr.mxu0 0.0
    %93 = vmatpush1.msra.mxu0 0.0
    %94 = vmatprep.subr.mxu0 0.0
    %95 = vmatpush1.msra.mxu0 0.0
    %96 = vmatprep.subr.mxu0 0.0
    %97 = vmatpush1.msra.mxu0 0.0
    %98 = vmatprep.subr.mxu0 0.0
    %99 = vmatpush1.msra.mxu0 0.0
    %100 = vmatprep.subr.mxu0 0.0
    %101 = vmatpush1.msra.mxu0 0.0
    %102 = vmatprep.subr.mxu0 0.0
    %103 = vmatpush1.msra.mxu0 0.0
    %104 = vmatprep.subr.mxu0 0.0
    %105 = vmatpush1.msra.mxu0 0.0
    %106 = vmatprep.subr.mxu0 0.0
    %107 = vmatpush1.msra.mxu0 0.0
    %108 = vmatprep.subr.mxu0 0.0
    %109 = vmatpush1.msra.mxu0 0.0
    %110 = vmatprep.subr.mxu0 0.0
    %111 = vmatpush1.msra.mxu0 0.0
    %112 = vmatprep.subr.mxu0 %v67
    %113 = vmatpush1.msra.mxu0 %v66
    %114 = vmatprep.subr.mxu0 %v65
    %115 = vmatpush1.msra.mxu0 %v64
    %116 = vmatprep.subr.mxu0 0.0
    %117 = vmatpush2.msra.mxu0 0.0
    %118 = vmatprep.subr.mxu0 0.0
    %119 = vmatpush2.msra.mxu0 0.0
    %120 = vmatprep.subr.mxu0 0.0
    %121 = vmatpush2.msra.mxu0 0.0
    %122 = vmatprep.subr.mxu0 0.0
    %123 = vmatpush2.msra.mxu0 0.0
    %124 = vmatprep.subr.mxu0 0.0
    %125 = vmatpush2.msra.mxu0 0.0
    %126 = vmatprep.subr.mxu0 0.0
    %127 = vmatpush2.msra.mxu0 0.0
    %128 = vmatprep.subr.mxu0 0.0
    %129 = vmatpush2.msra.mxu0 0.0
    %130 = vmatprep.subr.mxu0 0.0
    %131 = vmatpush2.msra.mxu0 0.0
    %132 = vmatprep.subr.mxu0 0.0
    %133 = vmatpush2.msra.mxu0 0.0
    %134 = vmatprep.subr.mxu0 0.0
    %135 = vmatpush2.msra.mxu0 0.0
    %136 = vmatprep.subr.mxu0 0.0
    %137 = vmatpush2.msra.mxu0 0.0
    %138 = vmatprep.subr.mxu0 0.0
    %139 = vmatpush2.msra.mxu0 0.0
    %140 = vmatprep.subr.mxu0 0.0
    %141 = vmatpush2.msra.mxu0 0.0
    %142 = vmatprep.subr.mxu0 0.0
    %143 = vmatpush2.msra.mxu0 0.0
    %144 = vmatprep.subr.mxu0 0.0
    %145 = vmatpush2.msra.mxu0 0.0
    %146 = vmatprep.subr.mxu0 0.0
    %147 = vmatpush2.msra.mxu0 0.0
    %148 = vmatprep.mubr.f32.mxu0 0.0
    %149 = vmatmul.mubr.f32.gmra.mxu0 %v82
    %v150 = vpop.f32.mrf.mxu0
    %v151 = vadd.f32 %v73, %v150
    %v152 = vpop.f32.mrf.mxu0
    %v153 = vadd.f32 %v77, %v152
    %154 = vdwg.mxu0
    %vm155 = vcmp.ge.f32.partialorder %v151, 0.0
    %vm156 = vcmp.ge.f32.partialorder %v153, 0.0
    %v157 = vmul.f32 %v151, 0.01
    %v158 = vmul.f32 %v153, 0.01
    %v159 = vsel %vm155, %v151, %v157
    %v160 = vsel %vm156, %v153, %v158
    %162 = vrot.lane.b32.xlu0 %v159, 96
    %v163 = vpop.permute.xlu0 %162
    %v165 = vmax.f32 %v159, %v163
    %167 = vrot.lane.b32.xlu0 %v165, 64
    %v168 = vpop.permute.xlu0 %167
    %v170 = vmax.f32 %v165, %v168
    %v171 = vpack.c.bf16 %v170, %v170
    %173 = vrot.lane.b32.xlu0 %v160, 96
    %v174 = vpop.permute.xlu0 %173
    %v176 = vmax.f32 %v160, %v174
    %178 = vrot.lane.b32.xlu0 %v176, 64
    %v179 = vpop.permute.xlu0 %178
    %v181 = vmax.f32 %v176, %v179
    %v182 = vpack.c.bf16 %v181, %v181
    %183 = vrot.lane.b32.xlu0 %v62, 120
    %v184 = vpop.permute.xlu0 %183
    %v185 = vsel %vm80, %v184, 0
    %187 = vmatprep.subr.mxu0 0.0
    %188 = vmatpush1.msra.mxu0 0.0
    %189 = vmatprep.subr.mxu0 0.0
    %190 = vmatpush1.msra.mxu0 0.0
    %191 = vmatprep.subr.mxu0 0.0
    %192 = vmatpush1.msra.mxu0 0.0
    %193 = vmatprep.subr.mxu0 0.0
    %194 = vmatpush1.msra.mxu0 0.0
    %195 = vmatprep.subr.mxu0 0.0
    %196 = vmatpush1.msra.mxu0 0.0
    %197 = vmatprep.subr.mxu0 0.0
    %198 = vmatpush1.msra.mxu0 0.0
    %199 = vmatprep.subr.mxu0 0.0
    %200 = vmatpush1.msra.mxu0 0.0
    %201 = vmatprep.subr.mxu0 0.0
    %202 = vmatpush1.msra.mxu0 0.0
    %203 = vmatprep.subr.mxu0 0.0
    %204 = vmatpush1.msra.mxu0 0.0
    %205 = vmatprep.subr.mxu0 0.0
    %206 = vmatpush1.msra.mxu0 0.0
    %207 = vmatprep.subr.mxu0 0.0
    %208 = vmatpush1.msra.mxu0 0.0
    %209 = vmatprep.subr.mxu0 0.0
    %210 = vmatpush1.msra.mxu0 0.0
    %211 = vmatprep.subr.mxu0 0.0
    %212 = vmatpush1.msra.mxu0 0.0
    %213 = vmatprep.subr.mxu0 0.0
    %214 = vmatpush1.msra.mxu0 0.0
    %215 = vmatprep.subr.mxu0 %v67
    %216 = vmatpush1.msra.mxu0 %v66
    %217 = vmatprep.subr.mxu0 %v65
    %218 = vmatpush1.msra.mxu0 %v64
    %219 = vmatprep.subr.mxu0 0.0
    %220 = vmatpush2.msra.mxu0 0.0
    %221 = vmatprep.subr.mxu0 0.0
    %222 = vmatpush2.msra.mxu0 0.0
    %223 = vmatprep.subr.mxu0 0.0
    %224 = vmatpush2.msra.mxu0 0.0
    %225 = vmatprep.subr.mxu0 0.0
    %226 = vmatpush2.msra.mxu0 0.0
    %227 = vmatprep.subr.mxu0 0.0
    %228 = vmatpush2.msra.mxu0 0.0
    %229 = vmatprep.subr.mxu0 0.0
    %230 = vmatpush2.msra.mxu0 0.0
    %231 = vmatprep.subr.mxu0 0.0
    %232 = vmatpush2.msra.mxu0 0.0
    %233 = vmatprep.subr.mxu0 0.0
    %234 = vmatpush2.msra.mxu0 0.0
    %235 = vmatprep.subr.mxu0 0.0
    %236 = vmatpush2.msra.mxu0 0.0
    %237 = vmatprep.subr.mxu0 0.0
    %238 = vmatpush2.msra.mxu0 0.0
    %239 = vmatprep.subr.mxu0 0.0
    %240 = vmatpush2.msra.mxu0 0.0
    %241 = vmatprep.subr.mxu0 0.0
    %242 = vmatpush2.msra.mxu0 0.0
    %243 = vmatprep.subr.mxu0 0.0
    %244 = vmatpush2.msra.mxu0 0.0
    %245 = vmatprep.subr.mxu0 0.0
    %246 = vmatpush2.msra.mxu0 0.0
    %247 = vmatprep.subr.mxu0 0.0
    %248 = vmatpush2.msra.mxu0 0.0
    %249 = vmatprep.subr.mxu0 0.0
    %250 = vmatpush2.msra.mxu0 0.0
    %251 = vmatprep.mubr.f32.mxu0 0.0
    %252 = vmatmul.mubr.f32.gmra.mxu0 %v185
    %v253 = vpop.f32.mrf.mxu0
    %v254 = vadd.f32 %v73, %v253
    %v255 = vpop.f32.mrf.mxu0
    %v256 = vadd.f32 %v77, %v255
    %257 = vdwg.mxu0
    %vm258 = vcmp.ge.f32.partialorder %v254, 0.0
    %vm259 = vcmp.ge.f32.partialorder %v256, 0.0
    %v260 = vmul.f32 %v254, 0.01
    %v261 = vmul.f32 %v256, 0.01
    %v262 = vsel %vm258, %v254, %v260
    %v263 = vsel %vm259, %v256, %v261
    %265 = vrot.lane.b32.xlu0 %v262, 96
    %v266 = vpop.permute.xlu0 %265
    %v268 = vmax.f32 %v262, %v266
    %270 = vrot.lane.b32.xlu0 %v268, 64
    %v271 = vpop.permute.xlu0 %270
    %v273 = vmax.f32 %v268, %v271
    %v274 = vpack.c.bf16 %v273, %v273
    %276 = vrot.lane.b32.xlu0 %v263, 96
    %v277 = vpop.permute.xlu0 %276
    %v279 = vmax.f32 %v263, %v277
    %281 = vrot.lane.b32.xlu0 %v279, 64
    %v282 = vpop.permute.xlu0 %281
    %v284 = vmax.f32 %v279, %v282
    %v285 = vpack.c.bf16 %v284, %v284
    %286 = vrot.lane.b32.xlu0 %v62, 112
    %v287 = vpop.permute.xlu0 %286
    %v288 = vsel %vm80, %v287, 0
    %290 = vmatprep.subr.mxu0 0.0
    %291 = vmatpush1.msra.mxu0 0.0
    %292 = vmatprep.subr.mxu0 0.0
    %293 = vmatpush1.msra.mxu0 0.0
    %294 = vmatprep.subr.mxu0 0.0
    %295 = vmatpush1.msra.mxu0 0.0
    %296 = vmatprep.subr.mxu0 0.0
    %297 = vmatpush1.msra.mxu0 0.0
    %298 = vmatprep.subr.mxu0 0.0
    %299 = vmatpush1.msra.mxu0 0.0
    %300 = vmatprep.subr.mxu0 0.0
    %301 = vmatpush1.msra.mxu0 0.0
    %302 = vmatprep.subr.mxu0 0.0
    %303 = vmatpush1.msra.mxu0 0.0
    %304 = vmatprep.subr.mxu0 0.0
    %305 = vmatpush1.msra.mxu0 0.0
    %306 = vmatprep.subr.mxu0 0.0
    %307 = vmatpush1.msra.mxu0 0.0
    %308 = vmatprep.subr.mxu0 0.0
    %309 = vmatpush1.msra.mxu0 0.0
    %310 = vmatprep.subr.mxu0 0.0
    %311 = vmatpush1.msra.mxu0 0.0
    %312 = vmatprep.subr.mxu0 0.0
    %313 = vmatpush1.msra.mxu0 0.0
    %314 = vmatprep.subr.mxu0 0.0
    %315 = vmatpush1.msra.mxu0 0.0
    %316 = vmatprep.subr.mxu0 0.0
    %317 = vmatpush1.msra.mxu0 0.0
    %318 = vmatprep.subr.mxu0 %v67
    %319 = vmatpush1.msra.mxu0 %v66
    %320 = vmatprep.subr.mxu0 %v65
    %321 = vmatpush1.msra.mxu0 %v64
    %322 = vmatprep.subr.mxu0 0.0
    %323 = vmatpush2.msra.mxu0 0.0
    %324 = vmatprep.subr.mxu0 0.0
    %325 = vmatpush2.msra.mxu0 0.0
    %326 = vmatprep.subr.mxu0 0.0
    %327 = vmatpush2.msra.mxu0 0.0
    %328 = vmatprep.subr.mxu0 0.0
    %329 = vmatpush2.msra.mxu0 0.0
    %330 = vmatprep.subr.mxu0 0.0
    %331 = vmatpush2.msra.mxu0 0.0
    %332 = vmatprep.subr.mxu0 0.0
    %333 = vmatpush2.msra.mxu0 0.0
    %334 = vmatprep.subr.mxu0 0.0
    %335 = vmatpush2.msra.mxu0 0.0
    %336 = vmatprep.subr.mxu0 0.0
    %337 = vmatpush2.msra.mxu0 0.0
    %338 = vmatprep.subr.mxu0 0.0
    %339 = vmatpush2.msra.mxu0 0.0
    %340 = vmatprep.subr.mxu0 0.0
    %341 = vmatpush2.msra.mxu0 0.0
    %342 = vmatprep.subr.mxu0 0.0
    %343 = vmatpush2.msra.mxu0 0.0
    %344 = vmatprep.subr.mxu0 0.0
    %345 = vmatpush2.msra.mxu0 0.0
    %346 = vmatprep.subr.mxu0 0.0
    %347 = vmatpush2.msra.mxu0 0.0
    %348 = vmatprep.subr.mxu0 0.0
    %349 = vmatpush2.msra.mxu0 0.0
    %350 = vmatprep.subr.mxu0 0.0
    %351 = vmatpush2.msra.mxu0 0.0
    %352 = vmatprep.subr.mxu0 0.0
    %353 = vmatpush2.msra.mxu0 0.0
    %354 = vmatprep.mubr.f32.mxu0 0.0
    %355 = vmatmul.mubr.f32.gmra.mxu0 %v288
    %v356 = vpop.f32.mrf.mxu0
    %v357 = vadd.f32 %v73, %v356
    %v358 = vpop.f32.mrf.mxu0
    %v359 = vadd.f32 %v77, %v358
    %360 = vdwg.mxu0
    %vm361 = vcmp.ge.f32.partialorder %v357, 0.0
    %vm362 = vcmp.ge.f32.partialorder %v359, 0.0
    %v363 = vmul.f32 %v357, 0.01
    %v364 = vmul.f32 %v359, 0.01
    %v365 = vsel %vm361, %v357, %v363
    %v366 = vsel %vm362, %v359, %v364
    %368 = vrot.lane.b32.xlu0 %v365, 96
    %v369 = vpop.permute.xlu0 %368
    %v371 = vmax.f32 %v365, %v369
    %373 = vrot.lane.b32.xlu0 %v371, 64
    %v374 = vpop.permute.xlu0 %373
    %v376 = vmax.f32 %v371, %v374
    %v377 = vpack.c.bf16 %v376, %v376
    %379 = vrot.lane.b32.xlu0 %v366, 96
    %v380 = vpop.permute.xlu0 %379
    %v382 = vmax.f32 %v366, %v380
    %384 = vrot.lane.b32.xlu0 %v382, 64
    %v385 = vpop.permute.xlu0 %384
    %v387 = vmax.f32 %v382, %v385
    %v388 = vpack.c.bf16 %v387, %v387
    %389 = vrot.lane.b32.xlu0 %v62, 104
    %v390 = vpop.permute.xlu0 %389
    %v391 = vsel %vm80, %v390, 0
    %393 = vmatprep.subr.mxu0 0.0
    %394 = vmatpush1.msra.mxu0 0.0
    %395 = vmatprep.subr.mxu0 0.0
    %396 = vmatpush1.msra.mxu0 0.0
    %397 = vmatprep.subr.mxu0 0.0
    %398 = vmatpush1.msra.mxu0 0.0
    %399 = vmatprep.subr.mxu0 0.0
    %400 = vmatpush1.msra.mxu0 0.0
    %401 = vmatprep.subr.mxu0 0.0
    %402 = vmatpush1.msra.mxu0 0.0
    %403 = vmatprep.subr.mxu0 0.0
    %404 = vmatpush1.msra.mxu0 0.0
    %405 = vmatprep.subr.mxu0 0.0
    %406 = vmatpush1.msra.mxu0 0.0
    %407 = vmatprep.subr.mxu0 0.0
    %408 = vmatpush1.msra.mxu0 0.0
    %409 = vmatprep.subr.mxu0 0.0
    %410 = vmatpush1.msra.mxu0 0.0
    %411 = vmatprep.subr.mxu0 0.0
    %412 = vmatpush1.msra.mxu0 0.0
    %413 = vmatprep.subr.mxu0 0.0
    %414 = vmatpush1.msra.mxu0 0.0
    %415 = vmatprep.subr.mxu0 0.0
    %416 = vmatpush1.msra.mxu0 0.0
    %417 = vmatprep.subr.mxu0 0.0
    %418 = vmatpush1.msra.mxu0 0.0
    %419 = vmatprep.subr.mxu0 0.0
    %420 = vmatpush1.msra.mxu0 0.0
    %421 = vmatprep.subr.mxu0 %v67
    %422 = vmatpush1.msra.mxu0 %v66
    %423 = vmatprep.subr.mxu0 %v65
    %424 = vmatpush1.msra.mxu0 %v64
    %425 = vmatprep.subr.mxu0 0.0
    %426 = vmatpush2.msra.mxu0 0.0
    %427 = vmatprep.subr.mxu0 0.0
    %428 = vmatpush2.msra.mxu0 0.0
    %429 = vmatprep.subr.mxu0 0.0
    %430 = vmatpush2.msra.mxu0 0.0
    %431 = vmatprep.subr.mxu0 0.0
    %432 = vmatpush2.msra.mxu0 0.0
    %433 = vmatprep.subr.mxu0 0.0
    %434 = vmatpush2.msra.mxu0 0.0
    %435 = vmatprep.subr.mxu0 0.0
    %436 = vmatpush2.msra.mxu0 0.0
    %437 = vmatprep.subr.mxu0 0.0
    %438 = vmatpush2.msra.mxu0 0.0
    %439 = vmatprep.subr.mxu0 0.0
    %440 = vmatpush2.msra.mxu0 0.0
    %441 = vmatprep.subr.mxu0 0.0
    %442 = vmatpush2.msra.mxu0 0.0
    %443 = vmatprep.subr.mxu0 0.0
    %444 = vmatpush2.msra.mxu0 0.0
    %445 = vmatprep.subr.mxu0 0.0
    %446 = vmatpush2.msra.mxu0 0.0
    %447 = vmatprep.subr.mxu0 0.0
    %448 = vmatpush2.msra.mxu0 0.0
    %449 = vmatprep.subr.mxu0 0.0
    %450 = vmatpush2.msra.mxu0 0.0
    %451 = vmatprep.subr.mxu0 0.0
    %452 = vmatpush2.msra.mxu0 0.0
    %453 = vmatprep.subr.mxu0 0.0
    %454 = vmatpush2.msra.mxu0 0.0
    %455 = vmatprep.subr.mxu0 0.0
    %456 = vmatpush2.msra.mxu0 0.0
    %457 = vmatprep.mubr.f32.mxu0 0.0
    %458 = vmatmul.mubr.f32.gmra.mxu0 %v391
    %v459 = vpop.f32.mrf.mxu0
    %v460 = vadd.f32 %v73, %v459
    %v461 = vpop.f32.mrf.mxu0
    %v462 = vadd.f32 %v77, %v461
    %463 = vdwg.mxu0
    %vm464 = vcmp.ge.f32.partialorder %v460, 0.0
    %vm465 = vcmp.ge.f32.partialorder %v462, 0.0
    %v466 = vmul.f32 %v460, 0.01
    %v467 = vmul.f32 %v462, 0.01
    %v468 = vsel %vm464, %v460, %v466
    %v469 = vsel %vm465, %v462, %v467
    %471 = vrot.lane.b32.xlu0 %v468, 96
    %v472 = vpop.permute.xlu0 %471
    %v474 = vmax.f32 %v468, %v472
    %476 = vrot.lane.b32.xlu0 %v474, 64
    %v477 = vpop.permute.xlu0 %476
    %v479 = vmax.f32 %v474, %v477
    %v480 = vpack.c.bf16 %v479, %v479
    %482 = vrot.lane.b32.xlu0 %v469, 96
    %v483 = vpop.permute.xlu0 %482
    %v485 = vmax.f32 %v469, %v483
    %487 = vrot.lane.b32.xlu0 %v485, 64
    %v488 = vpop.permute.xlu0 %487
    %v490 = vmax.f32 %v485, %v488
    %v491 = vpack.c.bf16 %v490, %v490
    %492 = vrot.lane.b32.xlu0 %v62, 96
    %v493 = vpop.permute.xlu0 %492
    %v494 = vsel %vm80, %v493, 0
    %496 = vmatprep.subr.mxu0 0.0
    %497 = vmatpush1.msra.mxu0 0.0
    %498 = vmatprep.subr.mxu0 0.0
    %499 = vmatpush1.msra.mxu0 0.0
    %500 = vmatprep.subr.mxu0 0.0
    %501 = vmatpush1.msra.mxu0 0.0
    %502 = vmatprep.subr.mxu0 0.0
    %503 = vmatpush1.msra.mxu0 0.0
    %504 = vmatprep.subr.mxu0 0.0
    %505 = vmatpush1.msra.mxu0 0.0
    %506 = vmatprep.subr.mxu0 0.0
    %507 = vmatpush1.msra.mxu0 0.0
    %508 = vmatprep.subr.mxu0 0.0
    %509 = vmatpush1.msra.mxu0 0.0
    %510 = vmatprep.subr.mxu0 0.0
    %511 = vmatpush1.msra.mxu0 0.0
    %512 = vmatprep.subr.mxu0 0.0
    %513 = vmatpush1.msra.mxu0 0.0
    %514 = vmatprep.subr.mxu0 0.0
    %515 = vmatpush1.msra.mxu0 0.0
    %516 = vmatprep.subr.mxu0 0.0
    %517 = vmatpush1.msra.mxu0 0.0
    %518 = vmatprep.subr.mxu0 0.0
    %519 = vmatpush1.msra.mxu0 0.0
    %520 = vmatprep.subr.mxu0 0.0
    %521 = vmatpush1.msra.mxu0 0.0
    %522 = vmatprep.subr.mxu0 0.0
    %523 = vmatpush1.msra.mxu0 0.0
    %524 = vmatprep.subr.mxu0 %v67
    %525 = vmatpush1.msra.mxu0 %v66
    %526 = vmatprep.subr.mxu0 %v65
    %527 = vmatpush1.msra.mxu0 %v64
    %528 = vmatprep.subr.mxu0 0.0
    %529 = vmatpush2.msra.mxu0 0.0
    %530 = vmatprep.subr.mxu0 0.0
    %531 = vmatpush2.msra.mxu0 0.0
    %532 = vmatprep.subr.mxu0 0.0
    %533 = vmatpush2.msra.mxu0 0.0
    %534 = vmatprep.subr.mxu0 0.0
    %535 = vmatpush2.msra.mxu0 0.0
    %536 = vmatprep.subr.mxu0 0.0
    %537 = vmatpush2.msra.mxu0 0.0
    %538 = vmatprep.subr.mxu0 0.0
    %539 = vmatpush2.msra.mxu0 0.0
    %540 = vmatprep.subr.mxu0 0.0
    %541 = vmatpush2.msra.mxu0 0.0
    %542 = vmatprep.subr.mxu0 0.0
    %543 = vmatpush2.msra.mxu0 0.0
    %544 = vmatprep.subr.mxu0 0.0
    %545 = vmatpush2.msra.mxu0 0.0
    %546 = vmatprep.subr.mxu0 0.0
    %547 = vmatpush2.msra.mxu0 0.0
    %548 = vmatprep.subr.mxu0 0.0
    %549 = vmatpush2.msra.mxu0 0.0
    %550 = vmatprep.subr.mxu0 0.0
    %551 = vmatpush2.msra.mxu0 0.0
    %552 = vmatprep.subr.mxu0 0.0
    %553 = vmatpush2.msra.mxu0 0.0
    %554 = vmatprep.subr.mxu0 0.0
    %555 = vmatpush2.msra.mxu0 0.0
    %556 = vmatprep.subr.mxu0 0.0
    %557 = vmatpush2.msra.mxu0 0.0
    %558 = vmatprep.subr.mxu0 0.0
    %559 = vmatpush2.msra.mxu0 0.0
    %560 = vmatprep.mubr.f32.mxu0 0.0
    %561 = vmatmul.mubr.f32.gmra.mxu0 %v494
    %v562 = vpop.f32.mrf.mxu0
    %v563 = vadd.f32 %v73, %v562
    %v564 = vpop.f32.mrf.mxu0
    %v565 = vadd.f32 %v77, %v564
    %566 = vdwg.mxu0
    %vm567 = vcmp.ge.f32.partialorder %v563, 0.0
    %vm568 = vcmp.ge.f32.partialorder %v565, 0.0
    %v569 = vmul.f32 %v563, 0.01
    %v570 = vmul.f32 %v565, 0.01
    %v571 = vsel %vm567, %v563, %v569
    %v572 = vsel %vm568, %v565, %v570
    %574 = vrot.lane.b32.xlu0 %v571, 96
    %v575 = vpop.permute.xlu0 %574
    %v577 = vmax.f32 %v571, %v575
    %579 = vrot.lane.b32.xlu0 %v577, 64
    %v580 = vpop.permute.xlu0 %579
    %v582 = vmax.f32 %v577, %v580
    %v583 = vpack.c.bf16 %v582, %v582
    %585 = vrot.lane.b32.xlu0 %v572, 96
    %v586 = vpop.permute.xlu0 %585
    %v588 = vmax.f32 %v572, %v586
    %590 = vrot.lane.b32.xlu0 %v588, 64
    %v591 = vpop.permute.xlu0 %590
    %v593 = vmax.f32 %v588, %v591
    %v594 = vpack.c.bf16 %v593, %v593
    %595 = vrot.lane.b32.xlu0 %v62, 88
    %v596 = vpop.permute.xlu0 %595
    %v597 = vsel %vm80, %v596, 0
    %599 = vmatprep.subr.mxu0 0.0
    %600 = vmatpush1.msra.mxu0 0.0
    %601 = vmatprep.subr.mxu0 0.0
    %602 = vmatpush1.msra.mxu0 0.0
    %603 = vmatprep.subr.mxu0 0.0
    %604 = vmatpush1.msra.mxu0 0.0
    %605 = vmatprep.subr.mxu0 0.0
    %606 = vmatpush1.msra.mxu0 0.0
    %607 = vmatprep.subr.mxu0 0.0
    %608 = vmatpush1.msra.mxu0 0.0
    %609 = vmatprep.subr.mxu0 0.0
    %610 = vmatpush1.msra.mxu0 0.0
    %611 = vmatprep.subr.mxu0 0.0
    %612 = vmatpush1.msra.mxu0 0.0
    %613 = vmatprep.subr.mxu0 0.0
    %614 = vmatpush1.msra.mxu0 0.0
    %615 = vmatprep.subr.mxu0 0.0
    %616 = vmatpush1.msra.mxu0 0.0
    %617 = vmatprep.subr.mxu0 0.0
    %618 = vmatpush1.msra.mxu0 0.0
    %619 = vmatprep.subr.mxu0 0.0
    %620 = vmatpush1.msra.mxu0 0.0
    %621 = vmatprep.subr.mxu0 0.0
    %622 = vmatpush1.msra.mxu0 0.0
    %623 = vmatprep.subr.mxu0 0.0
    %624 = vmatpush1.msra.mxu0 0.0
    %625 = vmatprep.subr.mxu0 0.0
    %626 = vmatpush1.msra.mxu0 0.0
    %627 = vmatprep.subr.mxu0 %v67
    %628 = vmatpush1.msra.mxu0 %v66
    %629 = vmatprep.subr.mxu0 %v65
    %630 = vmatpush1.msra.mxu0 %v64
    %631 = vmatprep.subr.mxu0 0.0
    %632 = vmatpush2.msra.mxu0 0.0
    %633 = vmatprep.subr.mxu0 0.0
    %634 = vmatpush2.msra.mxu0 0.0
    %635 = vmatprep.subr.mxu0 0.0
    %636 = vmatpush2.msra.mxu0 0.0
    %637 = vmatprep.subr.mxu0 0.0
    %638 = vmatpush2.msra.mxu0 0.0
    %639 = vmatprep.subr.mxu0 0.0
    %640 = vmatpush2.msra.mxu0 0.0
    %641 = vmatprep.subr.mxu0 0.0
    %642 = vmatpush2.msra.mxu0 0.0
    %643 = vmatprep.subr.mxu0 0.0
    %644 = vmatpush2.msra.mxu0 0.0
    %645 = vmatprep.subr.mxu0 0.0
    %646 = vmatpush2.msra.mxu0 0.0
    %647 = vmatprep.subr.mxu0 0.0
    %648 = vmatpush2.msra.mxu0 0.0
    %649 = vmatprep.subr.mxu0 0.0
    %650 = vmatpush2.msra.mxu0 0.0
    %651 = vmatprep.subr.mxu0 0.0
    %652 = vmatpush2.msra.mxu0 0.0
    %653 = vmatprep.subr.mxu0 0.0
    %654 = vmatpush2.msra.mxu0 0.0
    %655 = vmatprep.subr.mxu0 0.0
    %656 = vmatpush2.msra.mxu0 0.0
    %657 = vmatprep.subr.mxu0 0.0
    %658 = vmatpush2.msra.mxu0 0.0
    %659 = vmatprep.subr.mxu0 0.0
    %660 = vmatpush2.msra.mxu0 0.0
    %661 = vmatprep.subr.mxu0 0.0
    %662 = vmatpush2.msra.mxu0 0.0
    %663 = vmatprep.mubr.f32.mxu0 0.0
    %664 = vmatmul.mubr.f32.gmra.mxu0 %v597
    %v665 = vpop.f32.mrf.mxu0
    %v666 = vadd.f32 %v73, %v665
    %v667 = vpop.f32.mrf.mxu0
    %v668 = vadd.f32 %v77, %v667
    %669 = vdwg.mxu0
    %vm670 = vcmp.ge.f32.partialorder %v666, 0.0
    %vm671 = vcmp.ge.f32.partialorder %v668, 0.0
    %v672 = vmul.f32 %v666, 0.01
    %v673 = vmul.f32 %v668, 0.01
    %v674 = vsel %vm670, %v666, %v672
    %v675 = vsel %vm671, %v668, %v673
    %677 = vrot.lane.b32.xlu0 %v674, 96
    %v678 = vpop.permute.xlu0 %677
    %v680 = vmax.f32 %v674, %v678
    %682 = vrot.lane.b32.xlu0 %v680, 64
    %v683 = vpop.permute.xlu0 %682
    %v685 = vmax.f32 %v680, %v683
    %v686 = vpack.c.bf16 %v685, %v685
    %688 = vrot.lane.b32.xlu0 %v675, 96
    %v689 = vpop.permute.xlu0 %688
    %v691 = vmax.f32 %v675, %v689
    %693 = vrot.lane.b32.xlu0 %v691, 64
    %v694 = vpop.permute.xlu0 %693
    %v696 = vmax.f32 %v691, %v694
    %v697 = vpack.c.bf16 %v696, %v696
    %698 = vrot.lane.b32.xlu0 %v62, 80
    %v699 = vpop.permute.xlu0 %698
    %v700 = vsel %vm80, %v699, 0
    %702 = vmatprep.subr.mxu0 0.0
    %703 = vmatpush1.msra.mxu0 0.0
    %704 = vmatprep.subr.mxu0 0.0
    %705 = vmatpush1.msra.mxu0 0.0
    %706 = vmatprep.subr.mxu0 0.0
    %707 = vmatpush1.msra.mxu0 0.0
    %708 = vmatprep.subr.mxu0 0.0
    %709 = vmatpush1.msra.mxu0 0.0
    %710 = vmatprep.subr.mxu0 0.0
    %711 = vmatpush1.msra.mxu0 0.0
    %712 = vmatprep.subr.mxu0 0.0
    %713 = vmatpush1.msra.mxu0 0.0
    %714 = vmatprep.subr.mxu0 0.0
    %715 = vmatpush1.msra.mxu0 0.0
    %716 = vmatprep.subr.mxu0 0.0
    %717 = vmatpush1.msra.mxu0 0.0
    %718 = vmatprep.subr.mxu0 0.0
    %719 = vmatpush1.msra.mxu0 0.0
    %720 = vmatprep.subr.mxu0 0.0
    %721 = vmatpush1.msra.mxu0 0.0
    %722 = vmatprep.subr.mxu0 0.0
    %723 = vmatpush1.msra.mxu0 0.0
    %724 = vmatprep.subr.mxu0 0.0
    %725 = vmatpush1.msra.mxu0 0.0
    %726 = vmatprep.subr.mxu0 0.0
    %727 = vmatpush1.msra.mxu0 0.0
    %728 = vmatprep.subr.mxu0 0.0
    %729 = vmatpush1.msra.mxu0 0.0
    %730 = vmatprep.subr.mxu0 %v67
    %731 = vmatpush1.msra.mxu0 %v66
    %732 = vmatprep.subr.mxu0 %v65
    %733 = vmatpush1.msra.mxu0 %v64
    %734 = vmatprep.subr.mxu0 0.0
    %735 = vmatpush2.msra.mxu0 0.0
    %736 = vmatprep.subr.mxu0 0.0
    %737 = vmatpush2.msra.mxu0 0.0
    %738 = vmatprep.subr.mxu0 0.0
    %739 = vmatpush2.msra.mxu0 0.0
    %740 = vmatprep.subr.mxu0 0.0
    %741 = vmatpush2.msra.mxu0 0.0
    %742 = vmatprep.subr.mxu0 0.0
    %743 = vmatpush2.msra.mxu0 0.0
    %744 = vmatprep.subr.mxu0 0.0
    %745 = vmatpush2.msra.mxu0 0.0
    %746 = vmatprep.subr.mxu0 0.0
    %747 = vmatpush2.msra.mxu0 0.0
    %748 = vmatprep.subr.mxu0 0.0
    %749 = vmatpush2.msra.mxu0 0.0
    %750 = vmatprep.subr.mxu0 0.0
    %751 = vmatpush2.msra.mxu0 0.0
    %752 = vmatprep.subr.mxu0 0.0
    %753 = vmatpush2.msra.mxu0 0.0
    %754 = vmatprep.subr.mxu0 0.0
    %755 = vmatpush2.msra.mxu0 0.0
    %756 = vmatprep.subr.mxu0 0.0
    %757 = vmatpush2.msra.mxu0 0.0
    %758 = vmatprep.subr.mxu0 0.0
    %759 = vmatpush2.msra.mxu0 0.0
    %760 = vmatprep.subr.mxu0 0.0
    %761 = vmatpush2.msra.mxu0 0.0
    %762 = vmatprep.subr.mxu0 0.0
    %763 = vmatpush2.msra.mxu0 0.0
    %764 = vmatprep.subr.mxu0 0.0
    %765 = vmatpush2.msra.mxu0 0.0
    %766 = vmatprep.mubr.f32.mxu0 0.0
    %767 = vmatmul.mubr.f32.gmra.mxu0 %v700
    %v768 = vpop.f32.mrf.mxu0
    %v769 = vadd.f32 %v73, %v768
    %v770 = vpop.f32.mrf.mxu0
    %v771 = vadd.f32 %v77, %v770
    %772 = vdwg.mxu0
    %vm773 = vcmp.ge.f32.partialorder %v769, 0.0
    %vm774 = vcmp.ge.f32.partialorder %v771, 0.0
    %v775 = vmul.f32 %v769, 0.01
    %v776 = vmul.f32 %v771, 0.01
    %v777 = vsel %vm773, %v769, %v775
    %v778 = vsel %vm774, %v771, %v776
    %780 = vrot.lane.b32.xlu0 %v777, 96
    %v781 = vpop.permute.xlu0 %780
    %v783 = vmax.f32 %v777, %v781
    %785 = vrot.lane.b32.xlu0 %v783, 64
    %v786 = vpop.permute.xlu0 %785
    %v788 = vmax.f32 %v783, %v786
    %v789 = vpack.c.bf16 %v788, %v788
    %791 = vrot.lane.b32.xlu0 %v778, 96
    %v792 = vpop.permute.xlu0 %791
    %v794 = vmax.f32 %v778, %v792
    %796 = vrot.lane.b32.xlu0 %v794, 64
    %v797 = vpop.permute.xlu0 %796
    %v799 = vmax.f32 %v794, %v797
    %v800 = vpack.c.bf16 %v799, %v799
    %801 = vrot.lane.b32.xlu0 %v62, 72
    %v802 = vpop.permute.xlu0 %801
    %v803 = vsel %vm80, %v802, 0
    %805 = vmatprep.subr.mxu0 0.0
    %806 = vmatpush1.msra.mxu0 0.0
    %807 = vmatprep.subr.mxu0 0.0
    %808 = vmatpush1.msra.mxu0 0.0
    %809 = vmatprep.subr.mxu0 0.0
    %810 = vmatpush1.msra.mxu0 0.0
    %811 = vmatprep.subr.mxu0 0.0
    %812 = vmatpush1.msra.mxu0 0.0
    %813 = vmatprep.subr.mxu0 0.0
    %814 = vmatpush1.msra.mxu0 0.0
    %815 = vmatprep.subr.mxu0 0.0
    %816 = vmatpush1.msra.mxu0 0.0
    %817 = vmatprep.subr.mxu0 0.0
    %818 = vmatpush1.msra.mxu0 0.0
    %819 = vmatprep.subr.mxu0 0.0
    %820 = vmatpush1.msra.mxu0 0.0
    %821 = vmatprep.subr.mxu0 0.0
    %822 = vmatpush1.msra.mxu0 0.0
    %823 = vmatprep.subr.mxu0 0.0
    %824 = vmatpush1.msra.mxu0 0.0
    %825 = vmatprep.subr.mxu0 0.0
    %826 = vmatpush1.msra.mxu0 0.0
    %827 = vmatprep.subr.mxu0 0.0
    %828 = vmatpush1.msra.mxu0 0.0
    %829 = vmatprep.subr.mxu0 0.0
    %830 = vmatpush1.msra.mxu0 0.0
    %831 = vmatprep.subr.mxu0 0.0
    %832 = vmatpush1.msra.mxu0 0.0
    %833 = vmatprep.subr.mxu0 %v67
    %834 = vmatpush1.msra.mxu0 %v66
    %835 = vmatprep.subr.mxu0 %v65
    %836 = vmatpush1.msra.mxu0 %v64
    %837 = vmatprep.subr.mxu0 0.0
    %838 = vmatpush2.msra.mxu0 0.0
    %839 = vmatprep.subr.mxu0 0.0
    %840 = vmatpush2.msra.mxu0 0.0
    %841 = vmatprep.subr.mxu0 0.0
    %842 = vmatpush2.msra.mxu0 0.0
    %843 = vmatprep.subr.mxu0 0.0
    %844 = vmatpush2.msra.mxu0 0.0
    %845 = vmatprep.subr.mxu0 0.0
    %846 = vmatpush2.msra.mxu0 0.0
    %847 = vmatprep.subr.mxu0 0.0
    %848 = vmatpush2.msra.mxu0 0.0
    %849 = vmatprep.subr.mxu0 0.0
    %850 = vmatpush2.msra.mxu0 0.0
    %851 = vmatprep.subr.mxu0 0.0
    %852 = vmatpush2.msra.mxu0 0.0
    %853 = vmatprep.subr.mxu0 0.0
    %854 = vmatpush2.msra.mxu0 0.0
    %855 = vmatprep.subr.mxu0 0.0
    %856 = vmatpush2.msra.mxu0 0.0
    %857 = vmatprep.subr.mxu0 0.0
    %858 = vmatpush2.msra.mxu0 0.0
    %859 = vmatprep.subr.mxu0 0.0
    %860 = vmatpush2.msra.mxu0 0.0
    %861 = vmatprep.subr.mxu0 0.0
    %862 = vmatpush2.msra.mxu0 0.0
    %863 = vmatprep.subr.mxu0 0.0
    %864 = vmatpush2.msra.mxu0 0.0
    %865 = vmatprep.subr.mxu0 0.0
    %866 = vmatpush2.msra.mxu0 0.0
    %867 = vmatprep.subr.mxu0 0.0
    %868 = vmatpush2.msra.mxu0 0.0
    %869 = vmatprep.mubr.f32.mxu0 0.0
    %870 = vmatmul.mubr.f32.gmra.mxu0 %v803
    %v871 = vpop.f32.mrf.mxu0
    %v872 = vadd.f32 %v73, %v871
    %v873 = vpop.f32.mrf.mxu0
    %v874 = vadd.f32 %v77, %v873
    %875 = vdwg.mxu0
    %vm876 = vcmp.ge.f32.partialorder %v872, 0.0
    %vm877 = vcmp.ge.f32.partialorder %v874, 0.0
    %v878 = vmul.f32 %v872, 0.01
    %v879 = vmul.f32 %v874, 0.01
    %v880 = vsel %vm876, %v872, %v878
    %v881 = vsel %vm877, %v874, %v879
    %883 = vrot.lane.b32.xlu0 %v880, 96
    %v884 = vpop.permute.xlu0 %883
    %v886 = vmax.f32 %v880, %v884
    %888 = vrot.lane.b32.xlu0 %v886, 64
    %v889 = vpop.permute.xlu0 %888
    %v891 = vmax.f32 %v886, %v889
    %v892 = vpack.c.bf16 %v891, %v891
    %894 = vrot.lane.b32.xlu0 %v881, 96
    %v895 = vpop.permute.xlu0 %894
    %v897 = vmax.f32 %v881, %v895
    %899 = vrot.lane.b32.xlu0 %v897, 64
    %v900 = vpop.permute.xlu0 %899
    %v902 = vmax.f32 %v897, %v900
    %v903 = vpack.c.bf16 %v902, %v902
    %904 = vrot.lane.b32.xlu0 %v62, 64
    %v905 = vpop.permute.xlu0 %904
    %v906 = vsel %vm80, %v905, 0
    %908 = vmatprep.subr.mxu0 0.0
    %909 = vmatpush1.msra.mxu0 0.0
    %910 = vmatprep.subr.mxu0 0.0
    %911 = vmatpush1.msra.mxu0 0.0
    %912 = vmatprep.subr.mxu0 0.0
    %913 = vmatpush1.msra.mxu0 0.0
    %914 = vmatprep.subr.mxu0 0.0
    %915 = vmatpush1.msra.mxu0 0.0
    %916 = vmatprep.subr.mxu0 0.0
    %917 = vmatpush1.msra.mxu0 0.0
    %918 = vmatprep.subr.mxu0 0.0
    %919 = vmatpush1.msra.mxu0 0.0
    %920 = vmatprep.subr.mxu0 0.0
    %921 = vmatpush1.msra.mxu0 0.0
    %922 = vmatprep.subr.mxu0 0.0
    %923 = vmatpush1.msra.mxu0 0.0
    %924 = vmatprep.subr.mxu0 0.0
    %925 = vmatpush1.msra.mxu0 0.0
    %926 = vmatprep.subr.mxu0 0.0
    %927 = vmatpush1.msra.mxu0 0.0
    %928 = vmatprep.subr.mxu0 0.0
    %929 = vmatpush1.msra.mxu0 0.0
    %930 = vmatprep.subr.mxu0 0.0
    %931 = vmatpush1.msra.mxu0 0.0
    %932 = vmatprep.subr.mxu0 0.0
    %933 = vmatpush1.msra.mxu0 0.0
    %934 = vmatprep.subr.mxu0 0.0
    %935 = vmatpush1.msra.mxu0 0.0
    %936 = vmatprep.subr.mxu0 %v67
    %937 = vmatpush1.msra.mxu0 %v66
    %938 = vmatprep.subr.mxu0 %v65
    %939 = vmatpush1.msra.mxu0 %v64
    %940 = vmatprep.subr.mxu0 0.0
    %941 = vmatpush2.msra.mxu0 0.0
    %942 = vmatprep.subr.mxu0 0.0
    %943 = vmatpush2.msra.mxu0 0.0
    %944 = vmatprep.subr.mxu0 0.0
    %945 = vmatpush2.msra.mxu0 0.0
    %946 = vmatprep.subr.mxu0 0.0
    %947 = vmatpush2.msra.mxu0 0.0
    %948 = vmatprep.subr.mxu0 0.0
    %949 = vmatpush2.msra.mxu0 0.0
    %950 = vmatprep.subr.mxu0 0.0
    %951 = vmatpush2.msra.mxu0 0.0
    %952 = vmatprep.subr.mxu0 0.0
    %953 = vmatpush2.msra.mxu0 0.0
    %954 = vmatprep.subr.mxu0 0.0
    %955 = vmatpush2.msra.mxu0 0.0
    %956 = vmatprep.subr.mxu0 0.0
    %957 = vmatpush2.msra.mxu0 0.0
    %958 = vmatprep.subr.mxu0 0.0
    %959 = vmatpush2.msra.mxu0 0.0
    %960 = vmatprep.subr.mxu0 0.0
    %961 = vmatpush2.msra.mxu0 0.0
    %962 = vmatprep.subr.mxu0 0.0
    %963 = vmatpush2.msra.mxu0 0.0
    %964 = vmatprep.subr.mxu0 0.0
    %965 = vmatpush2.msra.mxu0 0.0
    %966 = vmatprep.subr.mxu0 0.0
    %967 = vmatpush2.msra.mxu0 0.0
    %968 = vmatprep.subr.mxu0 0.0
    %969 = vmatpush2.msra.mxu0 0.0
    %970 = vmatprep.subr.mxu0 0.0
    %971 = vmatpush2.msra.mxu0 0.0
    %972 = vmatprep.mubr.f32.mxu0 0.0
    %973 = vmatmul.mubr.f32.gmra.mxu0 %v906
    %v974 = vpop.f32.mrf.mxu0
    %v975 = vadd.f32 %v73, %v974
    %v976 = vpop.f32.mrf.mxu0
    %v977 = vadd.f32 %v77, %v976
    %978 = vdwg.mxu0
    %vm979 = vcmp.ge.f32.partialorder %v975, 0.0
    %vm980 = vcmp.ge.f32.partialorder %v977, 0.0
    %v981 = vmul.f32 %v975, 0.01
    %v982 = vmul.f32 %v977, 0.01
    %v983 = vsel %vm979, %v975, %v981
    %v984 = vsel %vm980, %v977, %v982
    %986 = vrot.lane.b32.xlu0 %v983, 96
    %v987 = vpop.permute.xlu0 %986
    %v989 = vmax.f32 %v983, %v987
    %991 = vrot.lane.b32.xlu0 %v989, 64
    %v992 = vpop.permute.xlu0 %991
    %v994 = vmax.f32 %v989, %v992
    %v995 = vpack.c.bf16 %v994, %v994
    %997 = vrot.lane.b32.xlu0 %v984, 96
    %v998 = vpop.permute.xlu0 %997
    %v1000 = vmax.f32 %v984, %v998
    %1002 = vrot.lane.b32.xlu0 %v1000, 64
    %v1003 = vpop.permute.xlu0 %1002
    %v1005 = vmax.f32 %v1000, %v1003
    %v1006 = vpack.c.bf16 %v1005, %v1005
    %1007 = vrot.lane.b32.xlu0 %v62, 56
    %v1008 = vpop.permute.xlu0 %1007
    %v1009 = vsel %vm80, %v1008, 0
    %1011 = vmatprep.subr.mxu0 0.0
    %1012 = vmatpush1.msra.mxu0 0.0
    %1013 = vmatprep.subr.mxu0 0.0
    %1014 = vmatpush1.msra.mxu0 0.0
    %1015 = vmatprep.subr.mxu0 0.0
    %1016 = vmatpush1.msra.mxu0 0.0
    %1017 = vmatprep.subr.mxu0 0.0
    %1018 = vmatpush1.msra.mxu0 0.0
    %1019 = vmatprep.subr.mxu0 0.0
    %1020 = vmatpush1.msra.mxu0 0.0
    %1021 = vmatprep.subr.mxu0 0.0
    %1022 = vmatpush1.msra.mxu0 0.0
    %1023 = vmatprep.subr.mxu0 0.0
    %1024 = vmatpush1.msra.mxu0 0.0
    %1025 = vmatprep.subr.mxu0 0.0
    %1026 = vmatpush1.msra.mxu0 0.0
    %1027 = vmatprep.subr.mxu0 0.0
    %1028 = vmatpush1.msra.mxu0 0.0
    %1029 = vmatprep.subr.mxu0 0.0
    %1030 = vmatpush1.msra.mxu0 0.0
    %1031 = vmatprep.subr.mxu0 0.0
    %1032 = vmatpush1.msra.mxu0 0.0
    %1033 = vmatprep.subr.mxu0 0.0
    %1034 = vmatpush1.msra.mxu0 0.0
    %1035 = vmatprep.subr.mxu0 0.0
    %1036 = vmatpush1.msra.mxu0 0.0
    %1037 = vmatprep.subr.mxu0 0.0
    %1038 = vmatpush1.msra.mxu0 0.0
    %1039 = vmatprep.subr.mxu0 %v67
    %1040 = vmatpush1.msra.mxu0 %v66
    %1041 = vmatprep.subr.mxu0 %v65
    %1042 = vmatpush1.msra.mxu0 %v64
    %1043 = vmatprep.subr.mxu0 0.0
    %1044 = vmatpush2.msra.mxu0 0.0
    %1045 = vmatprep.subr.mxu0 0.0
    %1046 = vmatpush2.msra.mxu0 0.0
    %1047 = vmatprep.subr.mxu0 0.0
    %1048 = vmatpush2.msra.mxu0 0.0
    %1049 = vmatprep.subr.mxu0 0.0
    %1050 = vmatpush2.msra.mxu0 0.0
    %1051 = vmatprep.subr.mxu0 0.0
    %1052 = vmatpush2.msra.mxu0 0.0
    %1053 = vmatprep.subr.mxu0 0.0
    %1054 = vmatpush2.msra.mxu0 0.0
    %1055 = vmatprep.subr.mxu0 0.0
    %1056 = vmatpush2.msra.mxu0 0.0
    %1057 = vmatprep.subr.mxu0 0.0
    %1058 = vmatpush2.msra.mxu0 0.0
    %1059 = vmatprep.subr.mxu0 0.0
    %1060 = vmatpush2.msra.mxu0 0.0
    %1061 = vmatprep.subr.mxu0 0.0
    %1062 = vmatpush2.msra.mxu0 0.0
    %1063 = vmatprep.subr.mxu0 0.0
    %1064 = vmatpush2.msra.mxu0 0.0
    %1065 = vmatprep.subr.mxu0 0.0
    %1066 = vmatpush2.msra.mxu0 0.0
    %1067 = vmatprep.subr.mxu0 0.0
    %1068 = vmatpush2.msra.mxu0 0.0
    %1069 = vmatprep.subr.mxu0 0.0
    %1070 = vmatpush2.msra.mxu0 0.0
    %1071 = vmatprep.subr.mxu0 0.0
    %1072 = vmatpush2.msra.mxu0 0.0
    %1073 = vmatprep.subr.mxu0 0.0
    %1074 = vmatpush2.msra.mxu0 0.0
    %1075 = vmatprep.mubr.f32.mxu0 0.0
    %1076 = vmatmul.mubr.f32.gmra.mxu0 %v1009
    %v1077 = vpop.f32.mrf.mxu0
    %v1078 = vadd.f32 %v73, %v1077
    %v1079 = vpop.f32.mrf.mxu0
    %v1080 = vadd.f32 %v77, %v1079
    %1081 = vdwg.mxu0
    %vm1082 = vcmp.ge.f32.partialorder %v1078, 0.0
    %vm1083 = vcmp.ge.f32.partialorder %v1080, 0.0
    %v1084 = vmul.f32 %v1078, 0.01
    %v1085 = vmul.f32 %v1080, 0.01
    %v1086 = vsel %vm1082, %v1078, %v1084
    %v1087 = vsel %vm1083, %v1080, %v1085
    %1089 = vrot.lane.b32.xlu0 %v1086, 96
    %v1090 = vpop.permute.xlu0 %1089
    %v1092 = vmax.f32 %v1086, %v1090
    %1094 = vrot.lane.b32.xlu0 %v1092, 64
    %v1095 = vpop.permute.xlu0 %1094
    %v1097 = vmax.f32 %v1092, %v1095
    %v1098 = vpack.c.bf16 %v1097, %v1097
    %1100 = vrot.lane.b32.xlu0 %v1087, 96
    %v1101 = vpop.permute.xlu0 %1100
    %v1103 = vmax.f32 %v1087, %v1101
    %1105 = vrot.lane.b32.xlu0 %v1103, 64
    %v1106 = vpop.permute.xlu0 %1105
    %v1108 = vmax.f32 %v1103, %v1106
    %v1109 = vpack.c.bf16 %v1108, %v1108
    %1110 = vrot.lane.b32.xlu0 %v62, 48
    %v1111 = vpop.permute.xlu0 %1110
    %v1112 = vsel %vm80, %v1111, 0
    %1114 = vmatprep.subr.mxu0 0.0
    %1115 = vmatpush1.msra.mxu0 0.0
    %1116 = vmatprep.subr.mxu0 0.0
    %1117 = vmatpush1.msra.mxu0 0.0
    %1118 = vmatprep.subr.mxu0 0.0
    %1119 = vmatpush1.msra.mxu0 0.0
    %1120 = vmatprep.subr.mxu0 0.0
    %1121 = vmatpush1.msra.mxu0 0.0
    %1122 = vmatprep.subr.mxu0 0.0
    %1123 = vmatpush1.msra.mxu0 0.0
    %1124 = vmatprep.subr.mxu0 0.0
    %1125 = vmatpush1.msra.mxu0 0.0
    %1126 = vmatprep.subr.mxu0 0.0
    %1127 = vmatpush1.msra.mxu0 0.0
    %1128 = vmatprep.subr.mxu0 0.0
    %1129 = vmatpush1.msra.mxu0 0.0
    %1130 = vmatprep.subr.mxu0 0.0
    %1131 = vmatpush1.msra.mxu0 0.0
    %1132 = vmatprep.subr.mxu0 0.0
    %1133 = vmatpush1.msra.mxu0 0.0
    %1134 = vmatprep.subr.mxu0 0.0
    %1135 = vmatpush1.msra.mxu0 0.0
    %1136 = vmatprep.subr.mxu0 0.0
    %1137 = vmatpush1.msra.mxu0 0.0
    %1138 = vmatprep.subr.mxu0 0.0
    %1139 = vmatpush1.msra.mxu0 0.0
    %1140 = vmatprep.subr.mxu0 0.0
    %1141 = vmatpush1.msra.mxu0 0.0
    %1142 = vmatprep.subr.mxu0 %v67
    %1143 = vmatpush1.msra.mxu0 %v66
    %1144 = vmatprep.subr.mxu0 %v65
    %1145 = vmatpush1.msra.mxu0 %v64
    %1146 = vmatprep.subr.mxu0 0.0
    %1147 = vmatpush2.msra.mxu0 0.0
    %1148 = vmatprep.subr.mxu0 0.0
    %1149 = vmatpush2.msra.mxu0 0.0
    %1150 = vmatprep.subr.mxu0 0.0
    %1151 = vmatpush2.msra.mxu0 0.0
    %1152 = vmatprep.subr.mxu0 0.0
    %1153 = vmatpush2.msra.mxu0 0.0
    %1154 = vmatprep.subr.mxu0 0.0
    %1155 = vmatpush2.msra.mxu0 0.0
    %1156 = vmatprep.subr.mxu0 0.0
    %1157 = vmatpush2.msra.mxu0 0.0
    %1158 = vmatprep.subr.mxu0 0.0
    %1159 = vmatpush2.msra.mxu0 0.0
    %1160 = vmatprep.subr.mxu0 0.0
    %1161 = vmatpush2.msra.mxu0 0.0
    %1162 = vmatprep.subr.mxu0 0.0
    %1163 = vmatpush2.msra.mxu0 0.0
    %1164 = vmatprep.subr.mxu0 0.0
    %1165 = vmatpush2.msra.mxu0 0.0
    %1166 = vmatprep.subr.mxu0 0.0
    %1167 = vmatpush2.msra.mxu0 0.0
    %1168 = vmatprep.subr.mxu0 0.0
    %1169 = vmatpush2.msra.mxu0 0.0
    %1170 = vmatprep.subr.mxu0 0.0
    %1171 = vmatpush2.msra.mxu0 0.0
    %1172 = vmatprep.subr.mxu0 0.0
    %1173 = vmatpush2.msra.mxu0 0.0
    %1174 = vmatprep.subr.mxu0 0.0
    %1175 = vmatpush2.msra.mxu0 0.0
    %1176 = vmatprep.subr.mxu0 0.0
    %1177 = vmatpush2.msra.mxu0 0.0
    %1178 = vmatprep.mubr.f32.mxu0 0.0
    %1179 = vmatmul.mubr.f32.gmra.mxu0 %v1112
    %v1180 = vpop.f32.mrf.mxu0
    %v1181 = vadd.f32 %v73, %v1180
    %v1182 = vpop.f32.mrf.mxu0
    %v1183 = vadd.f32 %v77, %v1182
    %1184 = vdwg.mxu0
    %vm1185 = vcmp.ge.f32.partialorder %v1181, 0.0
    %vm1186 = vcmp.ge.f32.partialorder %v1183, 0.0
    %v1187 = vmul.f32 %v1181, 0.01
    %v1188 = vmul.f32 %v1183, 0.01
    %v1189 = vsel %vm1185, %v1181, %v1187
    %v1190 = vsel %vm1186, %v1183, %v1188
    %1192 = vrot.lane.b32.xlu0 %v1189, 96
    %v1193 = vpop.permute.xlu0 %1192
    %v1195 = vmax.f32 %v1189, %v1193
    %1197 = vrot.lane.b32.xlu0 %v1195, 64
    %v1198 = vpop.permute.xlu0 %1197
    %v1200 = vmax.f32 %v1195, %v1198
    %v1201 = vpack.c.bf16 %v1200, %v1200
    %1203 = vrot.lane.b32.xlu0 %v1190, 96
    %v1204 = vpop.permute.xlu0 %1203
    %v1206 = vmax.f32 %v1190, %v1204
    %1208 = vrot.lane.b32.xlu0 %v1206, 64
    %v1209 = vpop.permute.xlu0 %1208
    %v1211 = vmax.f32 %v1206, %v1209
    %v1212 = vpack.c.bf16 %v1211, %v1211
    %1213 = vrot.lane.b32.xlu0 %v62, 40
    %v1214 = vpop.permute.xlu0 %1213
    %v1215 = vsel %vm80, %v1214, 0
    %1217 = vmatprep.subr.mxu0 0.0
    %1218 = vmatpush1.msra.mxu0 0.0
    %1219 = vmatprep.subr.mxu0 0.0
    %1220 = vmatpush1.msra.mxu0 0.0
    %1221 = vmatprep.subr.mxu0 0.0
    %1222 = vmatpush1.msra.mxu0 0.0
    %1223 = vmatprep.subr.mxu0 0.0
    %1224 = vmatpush1.msra.mxu0 0.0
    %1225 = vmatprep.subr.mxu0 0.0
    %1226 = vmatpush1.msra.mxu0 0.0
    %1227 = vmatprep.subr.mxu0 0.0
    %1228 = vmatpush1.msra.mxu0 0.0
    %1229 = vmatprep.subr.mxu0 0.0
    %1230 = vmatpush1.msra.mxu0 0.0
    %1231 = vmatprep.subr.mxu0 0.0
    %1232 = vmatpush1.msra.mxu0 0.0
    %1233 = vmatprep.subr.mxu0 0.0
    %1234 = vmatpush1.msra.mxu0 0.0
    %1235 = vmatprep.subr.mxu0 0.0
    %1236 = vmatpush1.msra.mxu0 0.0
    %1237 = vmatprep.subr.mxu0 0.0
    %1238 = vmatpush1.msra.mxu0 0.0
    %1239 = vmatprep.subr.mxu0 0.0
    %1240 = vmatpush1.msra.mxu0 0.0
    %1241 = vmatprep.subr.mxu0 0.0
    %1242 = vmatpush1.msra.mxu0 0.0
    %1243 = vmatprep.subr.mxu0 0.0
    %1244 = vmatpush1.msra.mxu0 0.0
    %1245 = vmatprep.subr.mxu0 %v67
    %1246 = vmatpush1.msra.mxu0 %v66
    %1247 = vmatprep.subr.mxu0 %v65
    %1248 = vmatpush1.msra.mxu0 %v64
    %1249 = vmatprep.subr.mxu0 0.0
    %1250 = vmatpush2.msra.mxu0 0.0
    %1251 = vmatprep.subr.mxu0 0.0
    %1252 = vmatpush2.msra.mxu0 0.0
    %1253 = vmatprep.subr.mxu0 0.0
    %1254 = vmatpush2.msra.mxu0 0.0
    %1255 = vmatprep.subr.mxu0 0.0
    %1256 = vmatpush2.msra.mxu0 0.0
    %1257 = vmatprep.subr.mxu0 0.0
    %1258 = vmatpush2.msra.mxu0 0.0
    %1259 = vmatprep.subr.mxu0 0.0
    %1260 = vmatpush2.msra.mxu0 0.0
    %1261 = vmatprep.subr.mxu0 0.0
    %1262 = vmatpush2.msra.mxu0 0.0
    %1263 = vmatprep.subr.mxu0 0.0
    %1264 = vmatpush2.msra.mxu0 0.0
    %1265 = vmatprep.subr.mxu0 0.0
    %1266 = vmatpush2.msra.mxu0 0.0
    %1267 = vmatprep.subr.mxu0 0.0
    %1268 = vmatpush2.msra.mxu0 0.0
    %1269 = vmatprep.subr.mxu0 0.0
    %1270 = vmatpush2.msra.mxu0 0.0
    %1271 = vmatprep.subr.mxu0 0.0
    %1272 = vmatpush2.msra.mxu0 0.0
    %1273 = vmatprep.subr.mxu0 0.0
    %1274 = vmatpush2.msra.mxu0 0.0
    %1275 = vmatprep.subr.mxu0 0.0
    %1276 = vmatpush2.msra.mxu0 0.0
    %1277 = vmatprep.subr.mxu0 0.0
    %1278 = vmatpush2.msra.mxu0 0.0
    %1279 = vmatprep.subr.mxu0 0.0
    %1280 = vmatpush2.msra.mxu0 0.0
    %1281 = vmatprep.mubr.f32.mxu0 0.0
    %1282 = vmatmul.mubr.f32.gmra.mxu0 %v1215
    %v1283 = vpop.f32.mrf.mxu0
    %v1284 = vadd.f32 %v73, %v1283
    %v1285 = vpop.f32.mrf.mxu0
    %v1286 = vadd.f32 %v77, %v1285
    %1287 = vdwg.mxu0
    %vm1288 = vcmp.ge.f32.partialorder %v1284, 0.0
    %vm1289 = vcmp.ge.f32.partialorder %v1286, 0.0
    %v1290 = vmul.f32 %v1284, 0.01
    %v1291 = vmul.f32 %v1286, 0.01
    %v1292 = vsel %vm1288, %v1284, %v1290
    %v1293 = vsel %vm1289, %v1286, %v1291
    %1295 = vrot.lane.b32.xlu0 %v1292, 96
    %v1296 = vpop.permute.xlu0 %1295
    %v1298 = vmax.f32 %v1292, %v1296
    %1300 = vrot.lane.b32.xlu0 %v1298, 64
    %v1301 = vpop.permute.xlu0 %1300
    %v1303 = vmax.f32 %v1298, %v1301
    %v1304 = vpack.c.bf16 %v1303, %v1303
    %1306 = vrot.lane.b32.xlu0 %v1293, 96
    %v1307 = vpop.permute.xlu0 %1306
    %v1309 = vmax.f32 %v1293, %v1307
    %1311 = vrot.lane.b32.xlu0 %v1309, 64
    %v1312 = vpop.permute.xlu0 %1311
    %v1314 = vmax.f32 %v1309, %v1312
    %v1315 = vpack.c.bf16 %v1314, %v1314
    %1316 = vrot.lane.b32.xlu0 %v62, 32
    %v1317 = vpop.permute.xlu0 %1316
    %v1318 = vsel %vm80, %v1317, 0
    %1320 = vmatprep.subr.mxu0 0.0
    %1321 = vmatpush1.msra.mxu0 0.0
    %1322 = vmatprep.subr.mxu0 0.0
    %1323 = vmatpush1.msra.mxu0 0.0
    %1324 = vmatprep.subr.mxu0 0.0
    %1325 = vmatpush1.msra.mxu0 0.0
    %1326 = vmatprep.subr.mxu0 0.0
    %1327 = vmatpush1.msra.mxu0 0.0
    %1328 = vmatprep.subr.mxu0 0.0
    %1329 = vmatpush1.msra.mxu0 0.0
    %1330 = vmatprep.subr.mxu0 0.0
    %1331 = vmatpush1.msra.mxu0 0.0
    %1332 = vmatprep.subr.mxu0 0.0
    %1333 = vmatpush1.msra.mxu0 0.0
    %1334 = vmatprep.subr.mxu0 0.0
    %1335 = vmatpush1.msra.mxu0 0.0
    %1336 = vmatprep.subr.mxu0 0.0
    %1337 = vmatpush1.msra.mxu0 0.0
    %1338 = vmatprep.subr.mxu0 0.0
    %1339 = vmatpush1.msra.mxu0 0.0
    %1340 = vmatprep.subr.mxu0 0.0
    %1341 = vmatpush1.msra.mxu0 0.0
    %1342 = vmatprep.subr.mxu0 0.0
    %1343 = vmatpush1.msra.mxu0 0.0
    %1344 = vmatprep.subr.mxu0 0.0
    %1345 = vmatpush1.msra.mxu0 0.0
    %1346 = vmatprep.subr.mxu0 0.0
    %1347 = vmatpush1.msra.mxu0 0.0
    %1348 = vmatprep.subr.mxu0 %v67
    %1349 = vmatpush1.msra.mxu0 %v66
    %1350 = vmatprep.subr.mxu0 %v65
    %1351 = vmatpush1.msra.mxu0 %v64
    %1352 = vmatprep.subr.mxu0 0.0
    %1353 = vmatpush2.msra.mxu0 0.0
    %1354 = vmatprep.subr.mxu0 0.0
    %1355 = vmatpush2.msra.mxu0 0.0
    %1356 = vmatprep.subr.mxu0 0.0
    %1357 = vmatpush2.msra.mxu0 0.0
    %1358 = vmatprep.subr.mxu0 0.0
    %1359 = vmatpush2.msra.mxu0 0.0
    %1360 = vmatprep.subr.mxu0 0.0
    %1361 = vmatpush2.msra.mxu0 0.0
    %1362 = vmatprep.subr.mxu0 0.0
    %1363 = vmatpush2.msra.mxu0 0.0
    %1364 = vmatprep.subr.mxu0 0.0
    %1365 = vmatpush2.msra.mxu0 0.0
    %1366 = vmatprep.subr.mxu0 0.0
    %1367 = vmatpush2.msra.mxu0 0.0
    %1368 = vmatprep.subr.mxu0 0.0
    %1369 = vmatpush2.msra.mxu0 0.0
    %1370 = vmatprep.subr.mxu0 0.0
    %1371 = vmatpush2.msra.mxu0 0.0
    %1372 = vmatprep.subr.mxu0 0.0
    %1373 = vmatpush2.msra.mxu0 0.0
    %1374 = vmatprep.subr.mxu0 0.0
    %1375 = vmatpush2.msra.mxu0 0.0
    %1376 = vmatprep.subr.mxu0 0.0
    %1377 = vmatpush2.msra.mxu0 0.0
    %1378 = vmatprep.subr.mxu0 0.0
    %1379 = vmatpush2.msra.mxu0 0.0
    %1380 = vmatprep.subr.mxu0 0.0
    %1381 = vmatpush2.msra.mxu0 0.0
    %1382 = vmatprep.subr.mxu0 0.0
    %1383 = vmatpush2.msra.mxu0 0.0
    %1384 = vmatprep.mubr.f32.mxu0 0.0
    %1385 = vmatmul.mubr.f32.gmra.mxu0 %v1318
    %v1386 = vpop.f32.mrf.mxu0
    %v1387 = vadd.f32 %v73, %v1386
    %v1388 = vpop.f32.mrf.mxu0
    %v1389 = vadd.f32 %v77, %v1388
    %1390 = vdwg.mxu0
    %vm1391 = vcmp.ge.f32.partialorder %v1387, 0.0
    %vm1392 = vcmp.ge.f32.partialorder %v1389, 0.0
    %v1393 = vmul.f32 %v1387, 0.01
    %v1394 = vmul.f32 %v1389, 0.01
    %v1395 = vsel %vm1391, %v1387, %v1393
    %v1396 = vsel %vm1392, %v1389, %v1394
    %1398 = vrot.lane.b32.xlu0 %v1395, 96
    %v1399 = vpop.permute.xlu0 %1398
    %v1401 = vmax.f32 %v1395, %v1399
    %1403 = vrot.lane.b32.xlu0 %v1401, 64
    %v1404 = vpop.permute.xlu0 %1403
    %v1406 = vmax.f32 %v1401, %v1404
    %v1407 = vpack.c.bf16 %v1406, %v1406
    %1409 = vrot.lane.b32.xlu0 %v1396, 96
    %v1410 = vpop.permute.xlu0 %1409
    %v1412 = vmax.f32 %v1396, %v1410
    %1414 = vrot.lane.b32.xlu0 %v1412, 64
    %v1415 = vpop.permute.xlu0 %1414
    %v1417 = vmax.f32 %v1412, %v1415
    %v1418 = vpack.c.bf16 %v1417, %v1417
    %1419 = vrot.lane.b32.xlu0 %v62, 24
    %v1420 = vpop.permute.xlu0 %1419
    %v1421 = vsel %vm80, %v1420, 0
    %1423 = vmatprep.subr.mxu0 0.0
    %1424 = vmatpush1.msra.mxu0 0.0
    %1425 = vmatprep.subr.mxu0 0.0
    %1426 = vmatpush1.msra.mxu0 0.0
    %1427 = vmatprep.subr.mxu0 0.0
    %1428 = vmatpush1.msra.mxu0 0.0
    %1429 = vmatprep.subr.mxu0 0.0
    %1430 = vmatpush1.msra.mxu0 0.0
    %1431 = vmatprep.subr.mxu0 0.0
    %1432 = vmatpush1.msra.mxu0 0.0
    %1433 = vmatprep.subr.mxu0 0.0
    %1434 = vmatpush1.msra.mxu0 0.0
    %1435 = vmatprep.subr.mxu0 0.0
    %1436 = vmatpush1.msra.mxu0 0.0
    %1437 = vmatprep.subr.mxu0 0.0
    %1438 = vmatpush1.msra.mxu0 0.0
    %1439 = vmatprep.subr.mxu0 0.0
    %1440 = vmatpush1.msra.mxu0 0.0
    %1441 = vmatprep.subr.mxu0 0.0
    %1442 = vmatpush1.msra.mxu0 0.0
    %1443 = vmatprep.subr.mxu0 0.0
    %1444 = vmatpush1.msra.mxu0 0.0
    %1445 = vmatprep.subr.mxu0 0.0
    %1446 = vmatpush1.msra.mxu0 0.0
    %1447 = vmatprep.subr.mxu0 0.0
    %1448 = vmatpush1.msra.mxu0 0.0
    %1449 = vmatprep.subr.mxu0 0.0
    %1450 = vmatpush1.msra.mxu0 0.0
    %1451 = vmatprep.subr.mxu0 %v67
    %1452 = vmatpush1.msra.mxu0 %v66
    %1453 = vmatprep.subr.mxu0 %v65
    %1454 = vmatpush1.msra.mxu0 %v64
    %1455 = vmatprep.subr.mxu0 0.0
    %1456 = vmatpush2.msra.mxu0 0.0
    %1457 = vmatprep.subr.mxu0 0.0
    %1458 = vmatpush2.msra.mxu0 0.0
    %1459 = vmatprep.subr.mxu0 0.0
    %1460 = vmatpush2.msra.mxu0 0.0
    %1461 = vmatprep.subr.mxu0 0.0
    %1462 = vmatpush2.msra.mxu0 0.0
    %1463 = vmatprep.subr.mxu0 0.0
    %1464 = vmatpush2.msra.mxu0 0.0
    %1465 = vmatprep.subr.mxu0 0.0
    %1466 = vmatpush2.msra.mxu0 0.0
    %1467 = vmatprep.subr.mxu0 0.0
    %1468 = vmatpush2.msra.mxu0 0.0
    %1469 = vmatprep.subr.mxu0 0.0
    %1470 = vmatpush2.msra.mxu0 0.0
    %1471 = vmatprep.subr.mxu0 0.0
    %1472 = vmatpush2.msra.mxu0 0.0
    %1473 = vmatprep.subr.mxu0 0.0
    %1474 = vmatpush2.msra.mxu0 0.0
    %1475 = vmatprep.subr.mxu0 0.0
    %1476 = vmatpush2.msra.mxu0 0.0
    %1477 = vmatprep.subr.mxu0 0.0
    %1478 = vmatpush2.msra.mxu0 0.0
    %1479 = vmatprep.subr.mxu0 0.0
    %1480 = vmatpush2.msra.mxu0 0.0
    %1481 = vmatprep.subr.mxu0 0.0
    %1482 = vmatpush2.msra.mxu0 0.0
    %1483 = vmatprep.subr.mxu0 0.0
    %1484 = vmatpush2.msra.mxu0 0.0
    %1485 = vmatprep.subr.mxu0 0.0
    %1486 = vmatpush2.msra.mxu0 0.0
    %1487 = vmatprep.mubr.f32.mxu0 0.0
    %1488 = vmatmul.mubr.f32.gmra.mxu0 %v1421
    %v1489 = vpop.f32.mrf.mxu0
    %v1490 = vadd.f32 %v73, %v1489
    %v1491 = vpop.f32.mrf.mxu0
    %v1492 = vadd.f32 %v77, %v1491
    %1493 = vdwg.mxu0
    %vm1494 = vcmp.ge.f32.partialorder %v1490, 0.0
    %vm1495 = vcmp.ge.f32.partialorder %v1492, 0.0
    %v1496 = vmul.f32 %v1490, 0.01
    %v1497 = vmul.f32 %v1492, 0.01
    %v1498 = vsel %vm1494, %v1490, %v1496
    %v1499 = vsel %vm1495, %v1492, %v1497
    %1501 = vrot.lane.b32.xlu0 %v1498, 96
    %v1502 = vpop.permute.xlu0 %1501
    %v1504 = vmax.f32 %v1498, %v1502
    %1506 = vrot.lane.b32.xlu0 %v1504, 64
    %v1507 = vpop.permute.xlu0 %1506
    %v1509 = vmax.f32 %v1504, %v1507
    %v1510 = vpack.c.bf16 %v1509, %v1509
    %1512 = vrot.lane.b32.xlu0 %v1499, 96
    %v1513 = vpop.permute.xlu0 %1512
    %v1515 = vmax.f32 %v1499, %v1513
    %1517 = vrot.lane.b32.xlu0 %v1515, 64
    %v1518 = vpop.permute.xlu0 %1517
    %v1520 = vmax.f32 %v1515, %v1518
    %v1521 = vpack.c.bf16 %v1520, %v1520
    %1522 = vrot.lane.b32.xlu0 %v62, 16
    %v1523 = vpop.permute.xlu0 %1522
    %v1524 = vsel %vm80, %v1523, 0
    %1526 = vmatprep.subr.mxu0 0.0
    %1527 = vmatpush1.msra.mxu0 0.0
    %1528 = vmatprep.subr.mxu0 0.0
    %1529 = vmatpush1.msra.mxu0 0.0
    %1530 = vmatprep.subr.mxu0 0.0
    %1531 = vmatpush1.msra.mxu0 0.0
    %1532 = vmatprep.subr.mxu0 0.0
    %1533 = vmatpush1.msra.mxu0 0.0
    %1534 = vmatprep.subr.mxu0 0.0
    %1535 = vmatpush1.msra.mxu0 0.0
    %1536 = vmatprep.subr.mxu0 0.0
    %1537 = vmatpush1.msra.mxu0 0.0
    %1538 = vmatprep.subr.mxu0 0.0
    %1539 = vmatpush1.msra.mxu0 0.0
    %1540 = vmatprep.subr.mxu0 0.0
    %1541 = vmatpush1.msra.mxu0 0.0
    %1542 = vmatprep.subr.mxu0 0.0
    %1543 = vmatpush1.msra.mxu0 0.0
    %1544 = vmatprep.subr.mxu0 0.0
    %1545 = vmatpush1.msra.mxu0 0.0
    %1546 = vmatprep.subr.mxu0 0.0
    %1547 = vmatpush1.msra.mxu0 0.0
    %1548 = vmatprep.subr.mxu0 0.0
    %1549 = vmatpush1.msra.mxu0 0.0
    %1550 = vmatprep.subr.mxu0 0.0
    %1551 = vmatpush1.msra.mxu0 0.0
    %1552 = vmatprep.subr.mxu0 0.0
    %1553 = vmatpush1.msra.mxu0 0.0
    %1554 = vmatprep.subr.mxu0 %v67
    %1555 = vmatpush1.msra.mxu0 %v66
    %1556 = vmatprep.subr.mxu0 %v65
    %1557 = vmatpush1.msra.mxu0 %v64
    %1558 = vmatprep.subr.mxu0 0.0
    %1559 = vmatpush2.msra.mxu0 0.0
    %1560 = vmatprep.subr.mxu0 0.0
    %1561 = vmatpush2.msra.mxu0 0.0
    %1562 = vmatprep.subr.mxu0 0.0
    %1563 = vmatpush2.msra.mxu0 0.0
    %1564 = vmatprep.subr.mxu0 0.0
    %1565 = vmatpush2.msra.mxu0 0.0
    %1566 = vmatprep.subr.mxu0 0.0
    %1567 = vmatpush2.msra.mxu0 0.0
    %1568 = vmatprep.subr.mxu0 0.0
    %1569 = vmatpush2.msra.mxu0 0.0
    %1570 = vmatprep.subr.mxu0 0.0
    %1571 = vmatpush2.msra.mxu0 0.0
    %1572 = vmatprep.subr.mxu0 0.0
    %1573 = vmatpush2.msra.mxu0 0.0
    %1574 = vmatprep.subr.mxu0 0.0
    %1575 = vmatpush2.msra.mxu0 0.0
    %1576 = vmatprep.subr.mxu0 0.0
    %1577 = vmatpush2.msra.mxu0 0.0
    %1578 = vmatprep.subr.mxu0 0.0
    %1579 = vmatpush2.msra.mxu0 0.0
    %1580 = vmatprep.subr.mxu0 0.0
    %1581 = vmatpush2.msra.mxu0 0.0
    %1582 = vmatprep.subr.mxu0 0.0
    %1583 = vmatpush2.msra.mxu0 0.0
    %1584 = vmatprep.subr.mxu0 0.0
    %1585 = vmatpush2.msra.mxu0 0.0
    %1586 = vmatprep.subr.mxu0 0.0
    %1587 = vmatpush2.msra.mxu0 0.0
    %1588 = vmatprep.subr.mxu0 0.0
    %1589 = vmatpush2.msra.mxu0 0.0
    %1590 = vmatprep.mubr.f32.mxu0 0.0
    %1591 = vmatmul.mubr.f32.gmra.mxu0 %v1524
    %v1592 = vpop.f32.mrf.mxu0
    %v1593 = vadd.f32 %v73, %v1592
    %v1594 = vpop.f32.mrf.mxu0
    %v1595 = vadd.f32 %v77, %v1594
    %1596 = vdwg.mxu0
    %vm1597 = vcmp.ge.f32.partialorder %v1593, 0.0
    %vm1598 = vcmp.ge.f32.partialorder %v1595, 0.0
    %v1599 = vmul.f32 %v1593, 0.01
    %v1600 = vmul.f32 %v1595, 0.01
    %v1601 = vsel %vm1597, %v1593, %v1599
    %v1602 = vsel %vm1598, %v1595, %v1600
    %1604 = vrot.lane.b32.xlu0 %v1601, 96
    %v1605 = vpop.permute.xlu0 %1604
    %v1607 = vmax.f32 %v1601, %v1605
    %1609 = vrot.lane.b32.xlu0 %v1607, 64
    %v1610 = vpop.permute.xlu0 %1609
    %v1612 = vmax.f32 %v1607, %v1610
    %v1613 = vpack.c.bf16 %v1612, %v1612
    %1615 = vrot.lane.b32.xlu0 %v1602, 96
    %v1616 = vpop.permute.xlu0 %1615
    %v1618 = vmax.f32 %v1602, %v1616
    %1620 = vrot.lane.b32.xlu0 %v1618, 64
    %v1621 = vpop.permute.xlu0 %1620
    %v1623 = vmax.f32 %v1618, %v1621
    %v1624 = vpack.c.bf16 %v1623, %v1623
    %1626 = vrot.lane.b32.xlu0 %v62, 8
    %v1627 = vpop.permute.xlu0 %1626
    %1628 = vrot.lane.b32.xlu0 %v63, 8
    %v1629 = vpop.permute.xlu0 %1628
    %vm1630 = vcmask 64512
    %v1631 = vsel %vm1630, %v1627, %v1629
    %v1632 = vsel %vm80, %v1631, 0
    %1634 = vmatprep.subr.mxu0 0.0
    %1635 = vmatpush1.msra.mxu0 0.0
    %1636 = vmatprep.subr.mxu0 0.0
    %1637 = vmatpush1.msra.mxu0 0.0
    %1638 = vmatprep.subr.mxu0 0.0
    %1639 = vmatpush1.msra.mxu0 0.0
    %1640 = vmatprep.subr.mxu0 0.0
    %1641 = vmatpush1.msra.mxu0 0.0
    %1642 = vmatprep.subr.mxu0 0.0
    %1643 = vmatpush1.msra.mxu0 0.0
    %1644 = vmatprep.subr.mxu0 0.0
    %1645 = vmatpush1.msra.mxu0 0.0
    %1646 = vmatprep.subr.mxu0 0.0
    %1647 = vmatpush1.msra.mxu0 0.0
    %1648 = vmatprep.subr.mxu0 0.0
    %1649 = vmatpush1.msra.mxu0 0.0
    %1650 = vmatprep.subr.mxu0 0.0
    %1651 = vmatpush1.msra.mxu0 0.0
    %1652 = vmatprep.subr.mxu0 0.0
    %1653 = vmatpush1.msra.mxu0 0.0
    %1654 = vmatprep.subr.mxu0 0.0
    %1655 = vmatpush1.msra.mxu0 0.0
    %1656 = vmatprep.subr.mxu0 0.0
    %1657 = vmatpush1.msra.mxu0 0.0
    %1658 = vmatprep.subr.mxu0 0.0
    %1659 = vmatpush1.msra.mxu0 0.0
    %1660 = vmatprep.subr.mxu0 0.0
    %1661 = vmatpush1.msra.mxu0 0.0
    %1662 = vmatprep.subr.mxu0 %v67
    %1663 = vmatpush1.msra.mxu0 %v66
    %1664 = vmatprep.subr.mxu0 %v65
    %1665 = vmatpush1.msra.mxu0 %v64
    %1666 = vmatprep.subr.mxu0 0.0
    %1667 = vmatpush2.msra.mxu0 0.0
    %1668 = vmatprep.subr.mxu0 0.0
    %1669 = vmatpush2.msra.mxu0 0.0
    %1670 = vmatprep.subr.mxu0 0.0
    %1671 = vmatpush2.msra.mxu0 0.0
    %1672 = vmatprep.subr.mxu0 0.0
    %1673 = vmatpush2.msra.mxu0 0.0
    %1674 = vmatprep.subr.mxu0 0.0
    %1675 = vmatpush2.msra.mxu0 0.0
    %1676 = vmatprep.subr.mxu0 0.0
    %1677 = vmatpush2.msra.mxu0 0.0
    %1678 = vmatprep.subr.mxu0 0.0
    %1679 = vmatpush2.msra.mxu0 0.0
    %1680 = vmatprep.subr.mxu0 0.0
    %1681 = vmatpush2.msra.mxu0 0.0
    %1682 = vmatprep.subr.mxu0 0.0
    %1683 = vmatpush2.msra.mxu0 0.0
    %1684 = vmatprep.subr.mxu0 0.0
    %1685 = vmatpush2.msra.mxu0 0.0
    %1686 = vmatprep.subr.mxu0 0.0
    %1687 = vmatpush2.msra.mxu0 0.0
    %1688 = vmatprep.subr.mxu0 0.0
    %1689 = vmatpush2.msra.mxu0 0.0
    %1690 = vmatprep.subr.mxu0 0.0
    %1691 = vmatpush2.msra.mxu0 0.0
    %1692 = vmatprep.subr.mxu0 0.0
    %1693 = vmatpush2.msra.mxu0 0.0
    %1694 = vmatprep.subr.mxu0 0.0
    %1695 = vmatpush2.msra.mxu0 0.0
    %1696 = vmatprep.subr.mxu0 0.0
    %1697 = vmatpush2.msra.mxu0 0.0
    %1698 = vmatprep.mubr.f32.mxu0 0.0
    %1699 = vmatmul.mubr.f32.gmra.mxu0 %v1632
    %v1700 = vpop.f32.mrf.mxu0
    %v1701 = vadd.f32 %v73, %v1700
    %v1702 = vpop.f32.mrf.mxu0
    %v1703 = vadd.f32 %v77, %v1702
    %1704 = vdwg.mxu0
    %vm1705 = vcmp.ge.f32.partialorder %v1701, 0.0
    %vm1706 = vcmp.ge.f32.partialorder %v1703, 0.0
    %v1707 = vmul.f32 %v1701, 0.01
    %v1708 = vmul.f32 %v1703, 0.01
    %v1709 = vsel %vm1705, %v1701, %v1707
    %v1710 = vsel %vm1706, %v1703, %v1708
    %1712 = vrot.lane.b32.xlu0 %v1709, 96
    %v1713 = vpop.permute.xlu0 %1712
    %v1715 = vmax.f32 %v1709, %v1713
    %1717 = vrot.lane.b32.xlu0 %v1715, 64
    %v1718 = vpop.permute.xlu0 %1717
    %v1720 = vmax.f32 %v1715, %v1718
    %v1721 = vpack.c.bf16 %v1720, %v1720
    %1723 = vrot.lane.b32.xlu0 %v1710, 96
    %v1724 = vpop.permute.xlu0 %1723
    %v1726 = vmax.f32 %v1710, %v1724
    %1728 = vrot.lane.b32.xlu0 %v1726, 64
    %v1729 = vpop.permute.xlu0 %1728
    %v1731 = vmax.f32 %v1726, %v1729
    %v1732 = vpack.c.bf16 %v1731, %v1731
    %v1734 = vrot.slane %v182, 4
    %v1736 = vrot.slane %v285, 4
    %v1738 = vrot.slane %v388, 4
    %v1740 = vrot.slane %v491, 4
    %v1742 = vrot.slane %v594, 4
    %v1744 = vrot.slane %v697, 4
    %v1746 = vrot.slane %v800, 4
    %v1748 = vrot.slane %v903, 4
    %vm1749 = vcmask 1043456
    %v1752 = vsel %vm1749, %v171, %v1734
    %v1755 = vsel %vm1749, %v274, %v1736
    %v1758 = vsel %vm1749, %v377, %v1738
    %v1761 = vsel %vm1749, %v480, %v1740
    %v1764 = vsel %vm1749, %v583, %v1742
    %v1767 = vsel %vm1749, %v686, %v1744
    %v1770 = vsel %vm1749, %v789, %v1746
    %v1773 = vsel %vm1749, %v892, %v1748
    %v1775 = vrot.slane %v1006, 4
    %v1777 = vrot.slane %v1109, 4
    %v1779 = vrot.slane %v1212, 4
    %v1781 = vrot.slane %v1315, 4
    %v1783 = vrot.slane %v1418, 4
    %v1785 = vrot.slane %v1521, 4
    %v1787 = vrot.slane %v1624, 4
    %v1789 = vrot.slane %v1732, 4
    %v1792 = vsel %vm1749, %v995, %v1775
    %v1795 = vsel %vm1749, %v1098, %v1777
    %v1798 = vsel %vm1749, %v1201, %v1779
    %v1801 = vsel %vm1749, %v1304, %v1781
    %v1804 = vsel %vm1749, %v1407, %v1783
    %v1807 = vsel %vm1749, %v1510, %v1785
    %v1810 = vsel %vm1749, %v1613, %v1787
    %v1813 = vsel %vm1749, %v1721, %v1789
    %vm1830 = vcmask 1043456
    %v1831 = vrot.slane %v1752, 4
    %v1832 = vrot.slane %v1755, 4
    %v1833 = vsel %vm1830, %v1831, %v1832
    %v1834 = vrot.slane %v1758, 4
    %v1835 = vsel %vm1830, %v1832, %v1834
    %v1836 = vrot.slane %v1761, 4
    %v1837 = vsel %vm1830, %v1834, %v1836
    %v1838 = vrot.slane %v1764, 4
    %v1839 = vsel %vm1830, %v1836, %v1838
    %v1840 = vrot.slane %v1767, 4
    %v1841 = vsel %vm1830, %v1838, %v1840
    %v1842 = vrot.slane %v1770, 4
    %v1843 = vsel %vm1830, %v1840, %v1842
    %v1844 = vrot.slane %v1773, 4
    %v1845 = vsel %vm1830, %v1842, %v1844
    %v1846 = vrot.slane %v1792, 4
    %v1847 = vsel %vm1830, %v1844, %v1846
    %v1848 = vrot.slane %v1795, 4
    %v1849 = vsel %vm1830, %v1846, %v1848
    %v1850 = vrot.slane %v1798, 4
    %v1851 = vsel %vm1830, %v1848, %v1850
    %v1852 = vrot.slane %v1801, 4
    %v1853 = vsel %vm1830, %v1850, %v1852
    %v1854 = vrot.slane %v1804, 4
    %v1855 = vsel %vm1830, %v1852, %v1854
    %v1856 = vrot.slane %v1807, 4
    %v1857 = vsel %vm1830, %v1854, %v1856
    %v1858 = vrot.slane %v1810, 4
    %v1859 = vsel %vm1830, %v1856, %v1858
    %v1860 = vrot.slane %v1813, 4
    %v1861 = vsel %vm1830, %v1858, %v1860
    %v1864 = vsel %vm1749, 0, %v1831
    %v1866 = vsel %vm1749, %v1860, 0
    %v1867 = vld [vmem:[%s3] sm:$0xf]
    %v1868 = vld [vmem:[%s3 + $0x4] sm:$0xf]
    %v1869 = vld [vmem:[%s3 + $0x8] sm:$0xf]
    %v1870 = vld [vmem:[%s3 + $0xc] sm:$0xf]
    %v1871 = vld [vmem:[%s3 + $0x10] sm:$0xf]
    %v1872 = vld [vmem:[%s3 + $0x14] sm:$0xf]
    %v1873 = vld [vmem:[%s3 + $0x18] sm:$0xf]
    %v1874 = vld [vmem:[%s3 + $0x1c] sm:$0xf]
    %v1875 = vld [vmem:[%s3 + $0x20] sm:$0xf]
    %v1876 = vld [vmem:[%s3 + $0x24] sm:$0xf]
    %v1877 = vld [vmem:[%s3 + $0x28] sm:$0xf]
    %v1878 = vld [vmem:[%s3 + $0x2c] sm:$0xf]
    %v1883 = vunpack.c.l.b16 %v1871
    %v1884 = vunpack.c.l.b16 %v1872
    %v1885 = vunpack.c.l.b16 %v1873
    %v1886 = vunpack.c.l.b16 %v1874
    %v1887 = vpack.c.b16 %v1884, %v1883
    %v1888 = vpack.c.b16 %v1886, %v1885
    %vm1891 = vcmask 261120
    %v1892 = vsel %vm1891, %v1752, 0
    %v1894 = vsel %vm1891, %v1755, 0
    %v1896 = vsel %vm1891, %v1758, 0
    %v1898 = vsel %vm1891, %v1761, 0
    %v1900 = vsel %vm1891, %v1764, 0
    %v1902 = vsel %vm1891, %v1767, 0
    %v1904 = vsel %vm1891, %v1770, 0
    %v1906 = vsel %vm1891, %v1773, 0
    %v1908 = vsel %vm1891, %v1792, 0
    %v1910 = vsel %vm1891, %v1795, 0
    %v1912 = vsel %vm1891, %v1798, 0
    %v1914 = vsel %vm1891, %v1801, 0
    %v1916 = vsel %vm1891, %v1804, 0
    %v1918 = vsel %vm1891, %v1807, 0
    %v1920 = vsel %vm1891, %v1810, 0
    %v1922 = vsel %vm1891, %v1813, 0
    %1924 = vmatprep.subr.bf16.mxu0 0
    %1925 = vmatpush1.bf16.msra.mxu0 0
    %1926 = vmatprep.subr.bf16.mxu0 0
    %1927 = vmatpush1.bf16.msra.mxu0 0
    %1928 = vmatprep.subr.bf16.mxu0 0
    %1929 = vmatpush1.bf16.msra.mxu0 0
    %1930 = vmatprep.subr.bf16.mxu0 0
    %1931 = vmatpush1.bf16.msra.mxu0 0
    %1932 = vmatprep.subr.bf16.mxu0 0
    %1933 = vmatpush1.bf16.msra.mxu0 0
    %1934 = vmatprep.subr.bf16.mxu0 0
    %1935 = vmatpush1.bf16.msra.mxu0 0
    %1936 = vmatprep.subr.bf16.mxu0 0
    %1937 = vmatpush1.bf16.msra.mxu0 %v1888
    %1938 = vmatprep.subr.bf16.mxu0 0
    %1939 = vmatpush1.bf16.msra.mxu0 %v1887
    %1940 = vmatprep.subr.bf16.mxu0 0
    %1941 = vmatpush2.bf16.msra.mxu0 0
    %1942 = vmatprep.subr.bf16.mxu0 0
    %1943 = vmatpush2.bf16.msra.mxu0 0
    %1944 = vmatprep.subr.bf16.mxu0 0
    %1945 = vmatpush2.bf16.msra.mxu0 0
    %1946 = vmatprep.subr.bf16.mxu0 0
    %1947 = vmatpush2.bf16.msra.mxu0 0
    %1948 = vmatprep.subr.bf16.mxu0 0
    %1949 = vmatpush2.bf16.msra.mxu0 0
    %1950 = vmatprep.subr.bf16.mxu0 0
    %1951 = vmatpush2.bf16.msra.mxu0 0
    %1952 = vmatprep.subr.bf16.mxu0 0
    %1953 = vmatpush2.bf16.msra.mxu0 0
    %1954 = vmatprep.subr.bf16.mxu0 0
    %1955 = vmatpush2.bf16.msra.mxu0 0
    %1956 = vmatprep.mubr.bf16.mxu0 0
    %1957 = vmatmul.mubr.bf16.gmra.mxu0 %v1892
    %v1958 = vpop.f32.mrf.mxu0
    %v1959 = vadd.f32 0.0, %v1958
    %v1960 = vpop.f32.mrf.mxu0
    %v1961 = vpop.f32.mrf.mxu0
    %v1962 = vadd.f32 0.0, %v1961
    %v1963 = vpop.f32.mrf.mxu0
    %1964 = vmatprep.mubr.bf16.mxu0 0
    %1965 = vmatmul.mubr.bf16.gmra.mxu0 %v1894
    %v1966 = vpop.f32.mrf.mxu0
    %v1967 = vadd.f32 0.0, %v1966
    %v1968 = vpop.f32.mrf.mxu0
    %v1969 = vpop.f32.mrf.mxu0
    %v1970 = vadd.f32 0.0, %v1969
    %v1971 = vpop.f32.mrf.mxu0
    %1972 = vmatprep.mubr.bf16.mxu0 0
    %1973 = vmatmul.mubr.bf16.gmra.mxu0 %v1896
    %v1974 = vpop.f32.mrf.mxu0
    %v1975 = vadd.f32 0.0, %v1974
    %v1976 = vpop.f32.mrf.mxu0
    %v1977 = vpop.f32.mrf.mxu0
    %v1978 = vadd.f32 0.0, %v1977
    %v1979 = vpop.f32.mrf.mxu0
    %1980 = vmatprep.mubr.bf16.mxu0 0
    %1981 = vmatmul.mubr.bf16.gmra.mxu0 %v1898
    %v1982 = vpop.f32.mrf.mxu0
    %v1983 = vadd.f32 0.0, %v1982
    %v1984 = vpop.f32.mrf.mxu0
    %v1985 = vpop.f32.mrf.mxu0
    %v1986 = vadd.f32 0.0, %v1985
    %v1987 = vpop.f32.mrf.mxu0
    %1988 = vmatprep.mubr.bf16.mxu0 0
    %1989 = vmatmul.mubr.bf16.gmra.mxu0 %v1900
    %v1990 = vpop.f32.mrf.mxu0
    %v1991 = vadd.f32 0.0, %v1990
    %v1992 = vpop.f32.mrf.mxu0
    %v1993 = vpop.f32.mrf.mxu0
    %v1994 = vadd.f32 0.0, %v1993
    %v1995 = vpop.f32.mrf.mxu0
    %1996 = vmatprep.mubr.bf16.mxu0 0
    %1997 = vmatmul.mubr.bf16.gmra.mxu0 %v1902
    %v1998 = vpop.f32.mrf.mxu0
    %v1999 = vadd.f32 0.0, %v1998
    %v2000 = vpop.f32.mrf.mxu0
    %v2001 = vpop.f32.mrf.mxu0
    %v2002 = vadd.f32 0.0, %v2001
    %v2003 = vpop.f32.mrf.mxu0
    %2004 = vmatprep.mubr.bf16.mxu0 0
    %2005 = vmatmul.mubr.bf16.gmra.mxu0 %v1904
    %v2006 = vpop.f32.mrf.mxu0
    %v2007 = vadd.f32 0.0, %v2006
    %v2008 = vpop.f32.mrf.mxu0
    %v2009 = vpop.f32.mrf.mxu0
    %v2010 = vadd.f32 0.0, %v2009
    %v2011 = vpop.f32.mrf.mxu0
    %2012 = vmatprep.mubr.bf16.mxu0 0
    %2013 = vmatmul.mubr.bf16.gmra.mxu0 %v1906
    %v2014 = vpop.f32.mrf.mxu0
    %v2015 = vadd.f32 0.0, %v2014
    %v2016 = vpop.f32.mrf.mxu0
    %v2017 = vpop.f32.mrf.mxu0
    %v2018 = vadd.f32 0.0, %v2017
    %v2019 = vpop.f32.mrf.mxu0
    %2020 = vmatprep.mubr.bf16.mxu0 0
    %2021 = vmatmul.mubr.bf16.gmra.mxu0 %v1908
    %v2022 = vpop.f32.mrf.mxu0
    %v2023 = vadd.f32 0.0, %v2022
    %v2024 = vpop.f32.mrf.mxu0
    %v2025 = vpop.f32.mrf.mxu0
    %v2026 = vadd.f32 0.0, %v2025
    %v2027 = vpop.f32.mrf.mxu0
    %2028 = vmatprep.mubr.bf16.mxu0 0
    %2029 = vmatmul.mubr.bf16.gmra.mxu0 %v1910
    %v2030 = vpop.f32.mrf.mxu0
    %v2031 = vadd.f32 0.0, %v2030
    %v2032 = vpop.f32.mrf.mxu0
    %v2033 = vpop.f32.mrf.mxu0
    %v2034 = vadd.f32 0.0, %v2033
    %v2035 = vpop.f32.mrf.mxu0
    %2036 = vmatprep.mubr.bf16.mxu0 0
    %2037 = vmatmul.mubr.bf16.gmra.mxu0 %v1912
    %v2038 = vpop.f32.mrf.mxu0
    %v2039 = vadd.f32 0.0, %v2038
    %v2040 = vpop.f32.mrf.mxu0
    %v2041 = vpop.f32.mrf.mxu0
    %v2042 = vadd.f32 0.0, %v2041
    %v2043 = vpop.f32.mrf.mxu0
    %2044 = vmatprep.mubr.bf16.mxu0 0
    %2045 = vmatmul.mubr.bf16.gmra.mxu0 %v1914
    %v2046 = vpop.f32.mrf.mxu0
    %v2047 = vadd.f32 0.0, %v2046
    %v2048 = vpop.f32.mrf.mxu0
    %v2049 = vpop.f32.mrf.mxu0
    %v2050 = vadd.f32 0.0, %v2049
    %v2051 = vpop.f32.mrf.mxu0
    %2052 = vmatprep.mubr.bf16.mxu0 0
    %2053 = vmatmul.mubr.bf16.gmra.mxu0 %v1916
    %v2054 = vpop.f32.mrf.mxu0
    %v2055 = vadd.f32 0.0, %v2054
    %v2056 = vpop.f32.mrf.mxu0
    %v2057 = vpop.f32.mrf.mxu0
    %v2058 = vadd.f32 0.0, %v2057
    %v2059 = vpop.f32.mrf.mxu0
    %2060 = vmatprep.mubr.bf16.mxu0 0
    %2061 = vmatmul.mubr.bf16.gmra.mxu0 %v1918
    %v2062 = vpop.f32.mrf.mxu0
    %v2063 = vadd.f32 0.0, %v2062
    %v2064 = vpop.f32.mrf.mxu0
    %v2065 = vpop.f32.mrf.mxu0
    %v2066 = vadd.f32 0.0, %v2065
    %v2067 = vpop.f32.mrf.mxu0
    %2068 = vmatprep.mubr.bf16.mxu0 0
    %2069 = vmatmul.mubr.bf16.gmra.mxu0 %v1920
    %v2070 = vpop.f32.mrf.mxu0
    %v2071 = vadd.f32 0.0, %v2070
    %v2072 = vpop.f32.mrf.mxu0
    %v2073 = vpop.f32.mrf.mxu0
    %v2074 = vadd.f32 0.0, %v2073
    %v2075 = vpop.f32.mrf.mxu0
    %2076 = vmatprep.mubr.bf16.mxu0 0
    %2077 = vmatmul.mubr.bf16.gmra.mxu0 %v1922
    %v2078 = vpop.f32.mrf.mxu0
    %v2079 = vadd.f32 0.0, %v2078
    %v2080 = vpop.f32.mrf.mxu0
    %v2081 = vpop.f32.mrf.mxu0
    %v2082 = vadd.f32 0.0, %v2081
    %v2083 = vpop.f32.mrf.mxu0
    %2084 = vdwg.mxu0
    %v2089 = vunpack.c.l.b16 %v1867
    %v2090 = vunpack.c.l.b16 %v1868
    %v2091 = vunpack.c.l.b16 %v1869
    %v2092 = vunpack.c.l.b16 %v1870
    %v2093 = vpack.c.b16 %v2090, %v2089
    %v2094 = vpack.c.b16 %v2092, %v2091
    %v2097 = vsel %vm1891, %v1864, 0
    %v2100 = vsel %vm1891, %v1833, 0
    %v2103 = vsel %vm1891, %v1835, 0
    %v2106 = vsel %vm1891, %v1837, 0
    %v2109 = vsel %vm1891, %v1839, 0
    %v2112 = vsel %vm1891, %v1841, 0
    %v2115 = vsel %vm1891, %v1843, 0
    %v2118 = vsel %vm1891, %v1845, 0
    %v2121 = vsel %vm1891, %v1847, 0
    %v2124 = vsel %vm1891, %v1849, 0
    %v2127 = vsel %vm1891, %v1851, 0
    %v2130 = vsel %vm1891, %v1853, 0
    %v2133 = vsel %vm1891, %v1855, 0
    %v2136 = vsel %vm1891, %v1857, 0
    %v2139 = vsel %vm1891, %v1859, 0
    %v2142 = vsel %vm1891, %v1861, 0
    %2144 = vmatprep.subr.bf16.mxu0 0
    %2145 = vmatpush1.bf16.msra.mxu0 0
    %2146 = vmatprep.subr.bf16.mxu0 0
    %2147 = vmatpush1.bf16.msra.mxu0 0
    %2148 = vmatprep.subr.bf16.mxu0 0
    %2149 = vmatpush1.bf16.msra.mxu0 0
    %2150 = vmatprep.subr.bf16.mxu0 0
    %2151 = vmatpush1.bf16.msra.mxu0 0
    %2152 = vmatprep.subr.bf16.mxu0 0
    %2153 = vmatpush1.bf16.msra.mxu0 0
    %2154 = vmatprep.subr.bf16.mxu0 0
    %2155 = vmatpush1.bf16.msra.mxu0 0
    %2156 = vmatprep.subr.bf16.mxu0 0
    %2157 = vmatpush1.bf16.msra.mxu0 %v2094
    %2158 = vmatprep.subr.bf16.mxu0 0
    %2159 = vmatpush1.bf16.msra.mxu0 %v2093
    %2160 = vmatprep.subr.bf16.mxu0 0
    %2161 = vmatpush2.bf16.msra.mxu0 0
    %2162 = vmatprep.subr.bf16.mxu0 0
    %2163 = vmatpush2.bf16.msra.mxu0 0
    %2164 = vmatprep.subr.bf16.mxu0 0
    %2165 = vmatpush2.bf16.msra.mxu0 0
    %2166 = vmatprep.subr.bf16.mxu0 0
    %2167 = vmatpush2.bf16.msra.mxu0 0
    %2168 = vmatprep.subr.bf16.mxu0 0
    %2169 = vmatpush2.bf16.msra.mxu0 0
    %2170 = vmatprep.subr.bf16.mxu0 0
    %2171 = vmatpush2.bf16.msra.mxu0 0
    %2172 = vmatprep.subr.bf16.mxu0 0
    %2173 = vmatpush2.bf16.msra.mxu0 0
    %2174 = vmatprep.subr.bf16.mxu0 0
    %2175 = vmatpush2.bf16.msra.mxu0 0
    %2176 = vmatprep.mubr.bf16.mxu0 0
    %2177 = vmatmul.mubr.bf16.gmra.mxu0 %v2097
    %v2178 = vpop.f32.mrf.mxu0
    %v2179 = vadd.f32 %v1959, %v2178
    %v2180 = vpop.f32.mrf.mxu0
    %v2181 = vpop.f32.mrf.mxu0
    %v2182 = vadd.f32 %v1962, %v2181
    %v2183 = vpop.f32.mrf.mxu0
    %2184 = vmatprep.mubr.bf16.mxu0 0
    %2185 = vmatmul.mubr.bf16.gmra.mxu0 %v2100
    %v2186 = vpop.f32.mrf.mxu0
    %v2187 = vadd.f32 %v1967, %v2186
    %v2188 = vpop.f32.mrf.mxu0
    %v2189 = vpop.f32.mrf.mxu0
    %v2190 = vadd.f32 %v1970, %v2189
    %v2191 = vpop.f32.mrf.mxu0
    %2192 = vmatprep.mubr.bf16.mxu0 0
    %2193 = vmatmul.mubr.bf16.gmra.mxu0 %v2103
    %v2194 = vpop.f32.mrf.mxu0
    %v2195 = vadd.f32 %v1975, %v2194
    %v2196 = vpop.f32.mrf.mxu0
    %v2197 = vpop.f32.mrf.mxu0
    %v2198 = vadd.f32 %v1978, %v2197
    %v2199 = vpop.f32.mrf.mxu0
    %2200 = vmatprep.mubr.bf16.mxu0 0
    %2201 = vmatmul.mubr.bf16.gmra.mxu0 %v2106
    %v2202 = vpop.f32.mrf.mxu0
    %v2203 = vadd.f32 %v1983, %v2202
    %v2204 = vpop.f32.mrf.mxu0
    %v2205 = vpop.f32.mrf.mxu0
    %v2206 = vadd.f32 %v1986, %v2205
    %v2207 = vpop.f32.mrf.mxu0
    %2208 = vmatprep.mubr.bf16.mxu0 0
    %2209 = vmatmul.mubr.bf16.gmra.mxu0 %v2109
    %v2210 = vpop.f32.mrf.mxu0
    %v2211 = vadd.f32 %v1991, %v2210
    %v2212 = vpop.f32.mrf.mxu0
    %v2213 = vpop.f32.mrf.mxu0
    %v2214 = vadd.f32 %v1994, %v2213
    %v2215 = vpop.f32.mrf.mxu0
    %2216 = vmatprep.mubr.bf16.mxu0 0
    %2217 = vmatmul.mubr.bf16.gmra.mxu0 %v2112
    %v2218 = vpop.f32.mrf.mxu0
    %v2219 = vadd.f32 %v1999, %v2218
    %v2220 = vpop.f32.mrf.mxu0
    %v2221 = vpop.f32.mrf.mxu0
    %v2222 = vadd.f32 %v2002, %v2221
    %v2223 = vpop.f32.mrf.mxu0
    %2224 = vmatprep.mubr.bf16.mxu0 0
    %2225 = vmatmul.mubr.bf16.gmra.mxu0 %v2115
    %v2226 = vpop.f32.mrf.mxu0
    %v2227 = vadd.f32 %v2007, %v2226
    %v2228 = vpop.f32.mrf.mxu0
    %v2229 = vpop.f32.mrf.mxu0
    %v2230 = vadd.f32 %v2010, %v2229
    %v2231 = vpop.f32.mrf.mxu0
    %2232 = vmatprep.mubr.bf16.mxu0 0
    %2233 = vmatmul.mubr.bf16.gmra.mxu0 %v2118
    %v2234 = vpop.f32.mrf.mxu0
    %v2235 = vadd.f32 %v2015, %v2234
    %v2236 = vpop.f32.mrf.mxu0
    %v2237 = vpop.f32.mrf.mxu0
    %v2238 = vadd.f32 %v2018, %v2237
    %v2239 = vpop.f32.mrf.mxu0
    %2240 = vmatprep.mubr.bf16.mxu0 0
    %2241 = vmatmul.mubr.bf16.gmra.mxu0 %v2121
    %v2242 = vpop.f32.mrf.mxu0
    %v2243 = vadd.f32 %v2023, %v2242
    %v2244 = vpop.f32.mrf.mxu0
    %v2245 = vpop.f32.mrf.mxu0
    %v2246 = vadd.f32 %v2026, %v2245
    %v2247 = vpop.f32.mrf.mxu0
    %2248 = vmatprep.mubr.bf16.mxu0 0
    %2249 = vmatmul.mubr.bf16.gmra.mxu0 %v2124
    %v2250 = vpop.f32.mrf.mxu0
    %v2251 = vadd.f32 %v2031, %v2250
    %v2252 = vpop.f32.mrf.mxu0
    %v2253 = vpop.f32.mrf.mxu0
    %v2254 = vadd.f32 %v2034, %v2253
    %v2255 = vpop.f32.mrf.mxu0
    %2256 = vmatprep.mubr.bf16.mxu0 0
    %2257 = vmatmul.mubr.bf16.gmra.mxu0 %v2127
    %v2258 = vpop.f32.mrf.mxu0
    %v2259 = vadd.f32 %v2039, %v2258
    %v2260 = vpop.f32.mrf.mxu0
    %v2261 = vpop.f32.mrf.mxu0
    %v2262 = vadd.f32 %v2042, %v2261
    %v2263 = vpop.f32.mrf.mxu0
    %2264 = vmatprep.mubr.bf16.mxu0 0
    %2265 = vmatmul.mubr.bf16.gmra.mxu0 %v2130
    %v2266 = vpop.f32.mrf.mxu0
    %v2267 = vadd.f32 %v2047, %v2266
    %v2268 = vpop.f32.mrf.mxu0
    %v2269 = vpop.f32.mrf.mxu0
    %v2270 = vadd.f32 %v2050, %v2269
    %v2271 = vpop.f32.mrf.mxu0
    %2272 = vmatprep.mubr.bf16.mxu0 0
    %2273 = vmatmul.mubr.bf16.gmra.mxu0 %v2133
    %v2274 = vpop.f32.mrf.mxu0
    %v2275 = vadd.f32 %v2055, %v2274
    %v2276 = vpop.f32.mrf.mxu0
    %v2277 = vpop.f32.mrf.mxu0
    %v2278 = vadd.f32 %v2058, %v2277
    %v2279 = vpop.f32.mrf.mxu0
    %2280 = vmatprep.mubr.bf16.mxu0 0
    %2281 = vmatmul.mubr.bf16.gmra.mxu0 %v2136
    %v2282 = vpop.f32.mrf.mxu0
    %v2283 = vadd.f32 %v2063, %v2282
    %v2284 = vpop.f32.mrf.mxu0
    %v2285 = vpop.f32.mrf.mxu0
    %v2286 = vadd.f32 %v2066, %v2285
    %v2287 = vpop.f32.mrf.mxu0
    %2288 = vmatprep.mubr.bf16.mxu0 0
    %2289 = vmatmul.mubr.bf16.gmra.mxu0 %v2139
    %v2290 = vpop.f32.mrf.mxu0
    %v2291 = vadd.f32 %v2071, %v2290
    %v2292 = vpop.f32.mrf.mxu0
    %v2293 = vpop.f32.mrf.mxu0
    %v2294 = vadd.f32 %v2074, %v2293
    %v2295 = vpop.f32.mrf.mxu0
    %2296 = vmatprep.mubr.bf16.mxu0 0
    %2297 = vmatmul.mubr.bf16.gmra.mxu0 %v2142
    %v2298 = vpop.f32.mrf.mxu0
    %v2299 = vadd.f32 %v2079, %v2298
    %v2300 = vpop.f32.mrf.mxu0
    %v2301 = vpop.f32.mrf.mxu0
    %v2302 = vadd.f32 %v2082, %v2301
    %v2303 = vpop.f32.mrf.mxu0
    %2304 = vdwg.mxu0
    %v2309 = vunpack.c.l.b16 %v1875
    %v2310 = vunpack.c.l.b16 %v1876
    %v2311 = vunpack.c.l.b16 %v1877
    %v2312 = vunpack.c.l.b16 %v1878
    %v2313 = vpack.c.b16 %v2310, %v2309
    %v2314 = vpack.c.b16 %v2312, %v2311
    %v2317 = vsel %vm1891, %v1866, 0
    %2319 = vmatprep.subr.bf16.mxu0 0
    %2320 = vmatpush1.bf16.msra.mxu0 0
    %2321 = vmatprep.subr.bf16.mxu0 0
    %2322 = vmatpush1.bf16.msra.mxu0 0
    %2323 = vmatprep.subr.bf16.mxu0 0
    %2324 = vmatpush1.bf16.msra.mxu0 0
    %2325 = vmatprep.subr.bf16.mxu0 0
    %2326 = vmatpush1.bf16.msra.mxu0 0
    %2327 = vmatprep.subr.bf16.mxu0 0
    %2328 = vmatpush1.bf16.msra.mxu0 0
    %2329 = vmatprep.subr.bf16.mxu0 0
    %2330 = vmatpush1.bf16.msra.mxu0 0
    %2331 = vmatprep.subr.bf16.mxu0 0
    %2332 = vmatpush1.bf16.msra.mxu0 %v2314
    %2333 = vmatprep.subr.bf16.mxu0 0
    %2334 = vmatpush1.bf16.msra.mxu0 %v2313
    %2335 = vmatprep.subr.bf16.mxu0 0
    %2336 = vmatpush2.bf16.msra.mxu0 0
    %2337 = vmatprep.subr.bf16.mxu0 0
    %2338 = vmatpush2.bf16.msra.mxu0 0
    %2339 = vmatprep.subr.bf16.mxu0 0
    %2340 = vmatpush2.bf16.msra.mxu0 0
    %2341 = vmatprep.subr.bf16.mxu0 0
    %2342 = vmatpush2.bf16.msra.mxu0 0
    %2343 = vmatprep.subr.bf16.mxu0 0
    %2344 = vmatpush2.bf16.msra.mxu0 0
    %2345 = vmatprep.subr.bf16.mxu0 0
    %2346 = vmatpush2.bf16.msra.mxu0 0
    %2347 = vmatprep.subr.bf16.mxu0 0
    %2348 = vmatpush2.bf16.msra.mxu0 0
    %2349 = vmatprep.subr.bf16.mxu0 0
    %2350 = vmatpush2.bf16.msra.mxu0 0
    %2351 = vmatprep.mubr.bf16.mxu0 0
    %2352 = vmatmul.mubr.bf16.gmra.mxu0 %v2100
    %v2353 = vpop.f32.mrf.mxu0
    %v2354 = vadd.f32 0.0, %v2353
    %v2355 = vpop.f32.mrf.mxu0
    %v2356 = vpop.f32.mrf.mxu0
    %v2357 = vadd.f32 0.0, %v2356
    %v2358 = vpop.f32.mrf.mxu0
    %2359 = vmatprep.mubr.bf16.mxu0 0
    %2360 = vmatmul.mubr.bf16.gmra.mxu0 %v2103
    %v2361 = vpop.f32.mrf.mxu0
    %v2362 = vadd.f32 0.0, %v2361
    %v2363 = vpop.f32.mrf.mxu0
    %v2364 = vpop.f32.mrf.mxu0
    %v2365 = vadd.f32 0.0, %v2364
    %v2366 = vpop.f32.mrf.mxu0
    %2367 = vmatprep.mubr.bf16.mxu0 0
    %2368 = vmatmul.mubr.bf16.gmra.mxu0 %v2106
    %v2369 = vpop.f32.mrf.mxu0
    %v2370 = vadd.f32 0.0, %v2369
    %v2371 = vpop.f32.mrf.mxu0
    %v2372 = vpop.f32.mrf.mxu0
    %v2373 = vadd.f32 0.0, %v2372
    %v2374 = vpop.f32.mrf.mxu0
    %2375 = vmatprep.mubr.bf16.mxu0 0
    %2376 = vmatmul.mubr.bf16.gmra.mxu0 %v2109
    %v2377 = vpop.f32.mrf.mxu0
    %v2378 = vadd.f32 0.0, %v2377
    %v2379 = vpop.f32.mrf.mxu0
    %v2380 = vpop.f32.mrf.mxu0
    %v2381 = vadd.f32 0.0, %v2380
    %v2382 = vpop.f32.mrf.mxu0
    %2383 = vmatprep.mubr.bf16.mxu0 0
    %2384 = vmatmul.mubr.bf16.gmra.mxu0 %v2112
    %v2385 = vpop.f32.mrf.mxu0
    %v2386 = vadd.f32 0.0, %v2385
    %v2387 = vpop.f32.mrf.mxu0
    %v2388 = vpop.f32.mrf.mxu0
    %v2389 = vadd.f32 0.0, %v2388
    %v2390 = vpop.f32.mrf.mxu0
    %2391 = vmatprep.mubr.bf16.mxu0 0
    %2392 = vmatmul.mubr.bf16.gmra.mxu0 %v2115
    %v2393 = vpop.f32.mrf.mxu0
    %v2394 = vadd.f32 0.0, %v2393
    %v2395 = vpop.f32.mrf.mxu0
    %v2396 = vpop.f32.mrf.mxu0
    %v2397 = vadd.f32 0.0, %v2396
    %v2398 = vpop.f32.mrf.mxu0
    %2399 = vmatprep.mubr.bf16.mxu0 0
    %2400 = vmatmul.mubr.bf16.gmra.mxu0 %v2118
    %v2401 = vpop.f32.mrf.mxu0
    %v2402 = vadd.f32 0.0, %v2401
    %v2403 = vpop.f32.mrf.mxu0
    %v2404 = vpop.f32.mrf.mxu0
    %v2405 = vadd.f32 0.0, %v2404
    %v2406 = vpop.f32.mrf.mxu0
    %2407 = vmatprep.mubr.bf16.mxu0 0
    %2408 = vmatmul.mubr.bf16.gmra.mxu0 %v2121
    %v2409 = vpop.f32.mrf.mxu0
    %v2410 = vadd.f32 0.0, %v2409
    %v2411 = vpop.f32.mrf.mxu0
    %v2412 = vpop.f32.mrf.mxu0
    %v2413 = vadd.f32 0.0, %v2412
    %v2414 = vpop.f32.mrf.mxu0
    %2415 = vmatprep.mubr.bf16.mxu0 0
    %2416 = vmatmul.mubr.bf16.gmra.mxu0 %v2124
    %v2417 = vpop.f32.mrf.mxu0
    %v2418 = vadd.f32 0.0, %v2417
    %v2419 = vpop.f32.mrf.mxu0
    %v2420 = vpop.f32.mrf.mxu0
    %v2421 = vadd.f32 0.0, %v2420
    %v2422 = vpop.f32.mrf.mxu0
    %2423 = vmatprep.mubr.bf16.mxu0 0
    %2424 = vmatmul.mubr.bf16.gmra.mxu0 %v2127
    %v2425 = vpop.f32.mrf.mxu0
    %v2426 = vadd.f32 0.0, %v2425
    %v2427 = vpop.f32.mrf.mxu0
    %v2428 = vpop.f32.mrf.mxu0
    %v2429 = vadd.f32 0.0, %v2428
    %v2430 = vpop.f32.mrf.mxu0
    %2431 = vmatprep.mubr.bf16.mxu0 0
    %2432 = vmatmul.mubr.bf16.gmra.mxu0 %v2130
    %v2433 = vpop.f32.mrf.mxu0
    %v2434 = vadd.f32 0.0, %v2433
    %v2435 = vpop.f32.mrf.mxu0
    %v2436 = vpop.f32.mrf.mxu0
    %v2437 = vadd.f32 0.0, %v2436
    %v2438 = vpop.f32.mrf.mxu0
    %2439 = vmatprep.mubr.bf16.mxu0 0
    %2440 = vmatmul.mubr.bf16.gmra.mxu0 %v2133
    %v2441 = vpop.f32.mrf.mxu0
    %v2442 = vadd.f32 0.0, %v2441
    %v2443 = vpop.f32.mrf.mxu0
    %v2444 = vpop.f32.mrf.mxu0
    %v2445 = vadd.f32 0.0, %v2444
    %v2446 = vpop.f32.mrf.mxu0
    %2447 = vmatprep.mubr.bf16.mxu0 0
    %2448 = vmatmul.mubr.bf16.gmra.mxu0 %v2136
    %v2449 = vpop.f32.mrf.mxu0
    %v2450 = vadd.f32 0.0, %v2449
    %v2451 = vpop.f32.mrf.mxu0
    %v2452 = vpop.f32.mrf.mxu0
    %v2453 = vadd.f32 0.0, %v2452
    %v2454 = vpop.f32.mrf.mxu0
    %2455 = vmatprep.mubr.bf16.mxu0 0
    %2456 = vmatmul.mubr.bf16.gmra.mxu0 %v2139
    %v2457 = vpop.f32.mrf.mxu0
    %v2458 = vadd.f32 0.0, %v2457
    %v2459 = vpop.f32.mrf.mxu0
    %v2460 = vpop.f32.mrf.mxu0
    %v2461 = vadd.f32 0.0, %v2460
    %v2462 = vpop.f32.mrf.mxu0
    %2463 = vmatprep.mubr.bf16.mxu0 0
    %2464 = vmatmul.mubr.bf16.gmra.mxu0 %v2142
    %v2465 = vpop.f32.mrf.mxu0
    %v2466 = vadd.f32 0.0, %v2465
    %v2467 = vpop.f32.mrf.mxu0
    %v2468 = vpop.f32.mrf.mxu0
    %v2469 = vadd.f32 0.0, %v2468
    %v2470 = vpop.f32.mrf.mxu0
    %2471 = vmatprep.mubr.bf16.mxu0 0
    %2472 = vmatmul.mubr.bf16.gmra.mxu0 %v2317
    %v2473 = vpop.f32.mrf.mxu0
    %v2474 = vadd.f32 0.0, %v2473
    %v2475 = vpop.f32.mrf.mxu0
    %v2476 = vpop.f32.mrf.mxu0
    %v2477 = vadd.f32 0.0, %v2476
    %v2478 = vpop.f32.mrf.mxu0
    %2479 = vdwg.mxu0
    %v2480 = vadd.f32 %v2179, %v2354
    %v2481 = vadd.f32 %v2182, %v2357
    %v2482 = vadd.f32 %v2187, %v2362
    %v2483 = vadd.f32 %v2190, %v2365
    %v2484 = vadd.f32 %v2195, %v2370
    %v2485 = vadd.f32 %v2198, %v2373
    %v2486 = vadd.f32 %v2203, %v2378
    %v2487 = vadd.f32 %v2206, %v2381
    %v2488 = vadd.f32 %v2211, %v2386
    %v2489 = vadd.f32 %v2214, %v2389
    %v2490 = vadd.f32 %v2219, %v2394
    %v2491 = vadd.f32 %v2222, %v2397
    %v2492 = vadd.f32 %v2227, %v2402
    %v2493 = vadd.f32 %v2230, %v2405
    %v2494 = vadd.f32 %v2235, %v2410
    %v2495 = vadd.f32 %v2238, %v2413
    %v2496 = vadd.f32 %v2243, %v2418
    %v2497 = vadd.f32 %v2246, %v2421
    %v2498 = vadd.f32 %v2251, %v2426
    %v2499 = vadd.f32 %v2254, %v2429
    %v2500 = vadd.f32 %v2259, %v2434
    %v2501 = vadd.f32 %v2262, %v2437
    %v2502 = vadd.f32 %v2267, %v2442
    %v2503 = vadd.f32 %v2270, %v2445
    %v2504 = vadd.f32 %v2275, %v2450
    %v2505 = vadd.f32 %v2278, %v2453
    %v2506 = vadd.f32 %v2283, %v2458
    %v2507 = vadd.f32 %v2286, %v2461
    %v2508 = vadd.f32 %v2291, %v2466
    %v2509 = vadd.f32 %v2294, %v2469
    %v2510 = vadd.f32 %v2299, %v2474
    %v2511 = vadd.f32 %v2302, %v2477
    %v2512 = vld [vmem:[%s4] sm:$0x1]
    %v2514 = vlaneseq
    %v2515 = vshrl.u32 %v2514, 7
    %v2516 = vsub.s32 0, %v2515
    %v2517 = vrot.slane %v2512, %v2516
    %v2519 = vadd.f32 %v2480, %v2517
    %v2520 = vadd.f32 %v2481, %v2517
    %v2521 = vadd.f32 %v2482, %v2517
    %v2522 = vadd.f32 %v2483, %v2517
    %v2523 = vadd.f32 %v2484, %v2517
    %v2524 = vadd.f32 %v2485, %v2517
    %v2525 = vadd.f32 %v2486, %v2517
    %v2526 = vadd.f32 %v2487, %v2517
    %v2527 = vadd.f32 %v2488, %v2517
    %v2528 = vadd.f32 %v2489, %v2517
    %v2529 = vadd.f32 %v2490, %v2517
    %v2530 = vadd.f32 %v2491, %v2517
    %v2531 = vadd.f32 %v2492, %v2517
    %v2532 = vadd.f32 %v2493, %v2517
    %v2533 = vadd.f32 %v2494, %v2517
    %v2534 = vadd.f32 %v2495, %v2517
    %v2535 = vadd.f32 %v2496, %v2517
    %v2536 = vadd.f32 %v2497, %v2517
    %v2537 = vadd.f32 %v2498, %v2517
    %v2538 = vadd.f32 %v2499, %v2517
    %v2539 = vadd.f32 %v2500, %v2517
    %v2540 = vadd.f32 %v2501, %v2517
    %v2541 = vadd.f32 %v2502, %v2517
    %v2542 = vadd.f32 %v2503, %v2517
    %v2543 = vadd.f32 %v2504, %v2517
    %v2544 = vadd.f32 %v2505, %v2517
    %v2545 = vadd.f32 %v2506, %v2517
    %v2546 = vadd.f32 %v2507, %v2517
    %v2547 = vadd.f32 %v2508, %v2517
    %v2548 = vadd.f32 %v2509, %v2517
    %v2549 = vadd.f32 %v2510, %v2517
    %v2550 = vadd.f32 %v2511, %v2517
    %vm2551 = vcmp.ge.f32.partialorder %v2519, 0.0
    %vm2552 = vcmp.ge.f32.partialorder %v2520, 0.0
    %vm2553 = vcmp.ge.f32.partialorder %v2521, 0.0
    %vm2554 = vcmp.ge.f32.partialorder %v2522, 0.0
    %vm2555 = vcmp.ge.f32.partialorder %v2523, 0.0
    %vm2556 = vcmp.ge.f32.partialorder %v2524, 0.0
    %vm2557 = vcmp.ge.f32.partialorder %v2525, 0.0
    %vm2558 = vcmp.ge.f32.partialorder %v2526, 0.0
    %vm2559 = vcmp.ge.f32.partialorder %v2527, 0.0
    %vm2560 = vcmp.ge.f32.partialorder %v2528, 0.0
    %vm2561 = vcmp.ge.f32.partialorder %v2529, 0.0
    %vm2562 = vcmp.ge.f32.partialorder %v2530, 0.0
    %vm2563 = vcmp.ge.f32.partialorder %v2531, 0.0
    %vm2564 = vcmp.ge.f32.partialorder %v2532, 0.0
    %vm2565 = vcmp.ge.f32.partialorder %v2533, 0.0
    %vm2566 = vcmp.ge.f32.partialorder %v2534, 0.0
    %vm2567 = vcmp.ge.f32.partialorder %v2535, 0.0
    %vm2568 = vcmp.ge.f32.partialorder %v2536, 0.0
    %vm2569 = vcmp.ge.f32.partialorder %v2537, 0.0
    %vm2570 = vcmp.ge.f32.partialorder %v2538, 0.0
    %vm2571 = vcmp.ge.f32.partialorder %v2539, 0.0
    %vm2572 = vcmp.ge.f32.partialorder %v2540, 0.0
    %vm2573 = vcmp.ge.f32.partialorder %v2541, 0.0
    %vm2574 = vcmp.ge.f32.partialorder %v2542, 0.0
    %vm2575 = vcmp.ge.f32.partialorder %v2543, 0.0
    %vm2576 = vcmp.ge.f32.partialorder %v2544, 0.0
    %vm2577 = vcmp.ge.f32.partialorder %v2545, 0.0
    %vm2578 = vcmp.ge.f32.partialorder %v2546, 0.0
    %vm2579 = vcmp.ge.f32.partialorder %v2547, 0.0
    %vm2580 = vcmp.ge.f32.partialorder %v2548, 0.0
    %vm2581 = vcmp.ge.f32.partialorder %v2549, 0.0
    %vm2582 = vcmp.ge.f32.partialorder %v2550, 0.0
    %v2583 = vmul.f32 %v2519, 0.01
    %v2584 = vmul.f32 %v2520, 0.01
    %v2585 = vmul.f32 %v2521, 0.01
    %v2586 = vmul.f32 %v2522, 0.01
    %v2587 = vmul.f32 %v2523, 0.01
    %v2588 = vmul.f32 %v2524, 0.01
    %v2589 = vmul.f32 %v2525, 0.01
    %v2590 = vmul.f32 %v2526, 0.01
    %v2591 = vmul.f32 %v2527, 0.01
    %v2592 = vmul.f32 %v2528, 0.01
    %v2593 = vmul.f32 %v2529, 0.01
    %v2594 = vmul.f32 %v2530, 0.01
    %v2595 = vmul.f32 %v2531, 0.01
    %v2596 = vmul.f32 %v2532, 0.01
    %v2597 = vmul.f32 %v2533, 0.01
    %v2598 = vmul.f32 %v2534, 0.01
    %v2599 = vmul.f32 %v2535, 0.01
    %v2600 = vmul.f32 %v2536, 0.01
    %v2601 = vmul.f32 %v2537, 0.01
    %v2602 = vmul.f32 %v2538, 0.01
    %v2603 = vmul.f32 %v2539, 0.01
    %v2604 = vmul.f32 %v2540, 0.01
    %v2605 = vmul.f32 %v2541, 0.01
    %v2606 = vmul.f32 %v2542, 0.01
    %v2607 = vmul.f32 %v2543, 0.01
    %v2608 = vmul.f32 %v2544, 0.01
    %v2609 = vmul.f32 %v2545, 0.01
    %v2610 = vmul.f32 %v2546, 0.01
    %v2611 = vmul.f32 %v2547, 0.01
    %v2612 = vmul.f32 %v2548, 0.01
    %v2613 = vmul.f32 %v2549, 0.01
    %v2614 = vmul.f32 %v2550, 0.01
    %v2615 = vsel %vm2551, %v2519, %v2583
    %v2616 = vsel %vm2552, %v2520, %v2584
    %v2617 = vsel %vm2553, %v2521, %v2585
    %v2618 = vsel %vm2554, %v2522, %v2586
    %v2619 = vsel %vm2555, %v2523, %v2587
    %v2620 = vsel %vm2556, %v2524, %v2588
    %v2621 = vsel %vm2557, %v2525, %v2589
    %v2622 = vsel %vm2558, %v2526, %v2590
    %v2623 = vsel %vm2559, %v2527, %v2591
    %v2624 = vsel %vm2560, %v2528, %v2592
    %v2625 = vsel %vm2561, %v2529, %v2593
    %v2626 = vsel %vm2562, %v2530, %v2594
    %v2627 = vsel %vm2563, %v2531, %v2595
    %v2628 = vsel %vm2564, %v2532, %v2596
    %v2629 = vsel %vm2565, %v2533, %v2597
    %v2630 = vsel %vm2566, %v2534, %v2598
    %v2631 = vsel %vm2567, %v2535, %v2599
    %v2632 = vsel %vm2568, %v2536, %v2600
    %v2633 = vsel %vm2569, %v2537, %v2601
    %v2634 = vsel %vm2570, %v2538, %v2602
    %v2635 = vsel %vm2571, %v2539, %v2603
    %v2636 = vsel %vm2572, %v2540, %v2604
    %v2637 = vsel %vm2573, %v2541, %v2605
    %v2638 = vsel %vm2574, %v2542, %v2606
    %v2639 = vsel %vm2575, %v2543, %v2607
    %v2640 = vsel %vm2576, %v2544, %v2608
    %v2641 = vsel %vm2577, %v2545, %v2609
    %v2642 = vsel %vm2578, %v2546, %v2610
    %v2643 = vsel %vm2579, %v2547, %v2611
    %v2644 = vsel %vm2580, %v2548, %v2612
    %v2645 = vsel %vm2581, %v2549, %v2613
    %v2646 = vsel %vm2582, %v2550, %v2614
    %v2647 = vmax.f32 %v2615, %v2616
    %v2648 = vpack.c.bf16 %v2647, %v2647
    %v2649 = vmax.f32 %v2617, %v2618
    %v2650 = vpack.c.bf16 %v2649, %v2649
    %v2651 = vmax.f32 %v2619, %v2620
    %v2652 = vpack.c.bf16 %v2651, %v2651
    %v2653 = vmax.f32 %v2621, %v2622
    %v2654 = vpack.c.bf16 %v2653, %v2653
    %v2655 = vmax.f32 %v2623, %v2624
    %v2656 = vpack.c.bf16 %v2655, %v2655
    %v2657 = vmax.f32 %v2625, %v2626
    %v2658 = vpack.c.bf16 %v2657, %v2657
    %v2659 = vmax.f32 %v2627, %v2628
    %v2660 = vpack.c.bf16 %v2659, %v2659
    %v2661 = vmax.f32 %v2629, %v2630
    %v2662 = vpack.c.bf16 %v2661, %v2661
    %v2663 = vmax.f32 %v2631, %v2632
    %v2664 = vpack.c.bf16 %v2663, %v2663
    %v2665 = vmax.f32 %v2633, %v2634
    %v2666 = vpack.c.bf16 %v2665, %v2665
    %v2667 = vmax.f32 %v2635, %v2636
    %v2668 = vpack.c.bf16 %v2667, %v2667
    %v2669 = vmax.f32 %v2637, %v2638
    %v2670 = vpack.c.bf16 %v2669, %v2669
    %v2671 = vmax.f32 %v2639, %v2640
    %v2672 = vpack.c.bf16 %v2671, %v2671
    %v2673 = vmax.f32 %v2641, %v2642
    %v2674 = vpack.c.bf16 %v2673, %v2673
    %v2675 = vmax.f32 %v2643, %v2644
    %v2676 = vpack.c.bf16 %v2675, %v2675
    %v2677 = vmax.f32 %v2645, %v2646
    %v2678 = vpack.c.bf16 %v2677, %v2677
    %2680 = vrot.lane.b32.xlu0 %v2650, 64
    %v2681 = vpop.permute.xlu0 %2680
    %2683 = vrot.lane.b32.xlu0 %v2654, 64
    %v2684 = vpop.permute.xlu0 %2683
    %2686 = vrot.lane.b32.xlu0 %v2658, 64
    %v2687 = vpop.permute.xlu0 %2686
    %2689 = vrot.lane.b32.xlu0 %v2662, 64
    %v2690 = vpop.permute.xlu0 %2689
    %2692 = vrot.lane.b32.xlu0 %v2666, 64
    %v2693 = vpop.permute.xlu0 %2692
    %2695 = vrot.lane.b32.xlu0 %v2670, 64
    %v2696 = vpop.permute.xlu0 %2695
    %2698 = vrot.lane.b32.xlu0 %v2674, 64
    %v2699 = vpop.permute.xlu0 %2698
    %2701 = vrot.lane.b32.xlu0 %v2678, 64
    %v2702 = vpop.permute.xlu0 %2701
    %vm2703 = vcmask 523264
    %v2706 = vsel %vm2703, %v2648, %v2681
    %v2710 = vsel %vm2703, %v2652, %v2684
    %v2714 = vsel %vm2703, %v2656, %v2687
    %v2718 = vsel %vm2703, %v2660, %v2690
    %v2722 = vsel %vm2703, %v2664, %v2693
    %v2726 = vsel %vm2703, %v2668, %v2696
    %v2730 = vsel %vm2703, %v2672, %v2699
    %v2734 = vsel %vm2703, %v2676, %v2702
    %v2736 = vld [vmem:[#allocation5] sm:$0xf]
    %v2737 = vld [vmem:[#allocation5 + $0x4] sm:$0xf]
    %v2738 = vld [vmem:[#allocation5 + $0x8] sm:$0xf]
    %v2739 = vld [vmem:[#allocation5 + $0xc] sm:$0xf]
    %v2740 = vld [vmem:[#allocation5 + $0x10] sm:$0xf]
    %v2741 = vld [vmem:[#allocation5 + $0x14] sm:$0xf]
    %v2742 = vld [vmem:[#allocation5 + $0x18] sm:$0xf]
    %v2743 = vld [vmem:[#allocation5 + $0x1c] sm:$0xf]
    %v2744 = vld [vmem:[#allocation5 + $0x20] sm:$0xf]
    %v2745 = vld [vmem:[#allocation5 + $0x24] sm:$0xf]
    %v2746 = vld [vmem:[#allocation5 + $0x28] sm:$0xf]
    %v2747 = vld [vmem:[#allocation5 + $0x2c] sm:$0xf]
    %v2748 = vld [vmem:[#allocation5 + $0x30] sm:$0xf]
    %v2749 = vld [vmem:[#allocation5 + $0x34] sm:$0xf]
    %v2750 = vld [vmem:[#allocation5 + $0x38] sm:$0xf]
    %v2751 = vld [vmem:[#allocation5 + $0x3c] sm:$0xf]
    %v2752 = vld [vmem:[#allocation5 + $0x40] sm:$0xf]
    %v2753 = vld [vmem:[#allocation5 + $0x44] sm:$0xf]
    %v2754 = vld [vmem:[#allocation5 + $0x48] sm:$0xf]
    %v2755 = vld [vmem:[#allocation5 + $0x4c] sm:$0xf]
    %v2756 = vld [vmem:[#allocation5 + $0x50] sm:$0xf]
    %v2757 = vld [vmem:[#allocation5 + $0x54] sm:$0xf]
    %v2758 = vld [vmem:[#allocation5 + $0x58] sm:$0xf]
    %v2759 = vld [vmem:[#allocation5 + $0x5c] sm:$0xf]
    %v2760 = vld [vmem:[#allocation5 + $0x60] sm:$0xf]
    %v2761 = vld [vmem:[#allocation5 + $0x64] sm:$0xf]
    %v2762 = vld [vmem:[#allocation5 + $0x68] sm:$0xf]
    %v2763 = vld [vmem:[#allocation5 + $0x6c] sm:$0xf]
    %v2764 = vld [vmem:[#allocation5 + $0x70] sm:$0xf]
    %v2765 = vld [vmem:[#allocation5 + $0x74] sm:$0xf]
    %v2766 = vld [vmem:[#allocation5 + $0x78] sm:$0xf]
    %v2767 = vld [vmem:[#allocation5 + $0x7c] sm:$0xf]
    %v2768 = vld [vmem:[#allocation5 + $0x80] sm:$0xf]
    %v2769 = vld [vmem:[#allocation5 + $0x84] sm:$0xf]
    %v2770 = vld [vmem:[#allocation5 + $0x88] sm:$0xf]
    %v2771 = vld [vmem:[#allocation5 + $0x8c] sm:$0xf]
    %v2772 = vld [vmem:[#allocation5 + $0x90] sm:$0xf]
    %v2773 = vld [vmem:[#allocation5 + $0x94] sm:$0xf]
    %v2774 = vld [vmem:[#allocation5 + $0x98] sm:$0xf]
    %v2775 = vld [vmem:[#allocation5 + $0x9c] sm:$0xf]
    %v2776 = vld [vmem:[#allocation5 + $0xa0] sm:$0xf]
    %v2777 = vld [vmem:[#allocation5 + $0xa4] sm:$0xf]
    %v2778 = vld [vmem:[#allocation5 + $0xa8] sm:$0xf]
    %v2779 = vld [vmem:[#allocation5 + $0xac] sm:$0xf]
    %v2780 = vld [vmem:[#allocation5 + $0xb0] sm:$0xf]
    %v2781 = vld [vmem:[#allocation5 + $0xb4] sm:$0xf]
    %v2782 = vld [vmem:[#allocation5 + $0xb8] sm:$0xf]
    %v2783 = vld [vmem:[#allocation5 + $0xbc] sm:$0xf]
    %v2784 = vld [vmem:[#allocation5 + $0xc0] sm:$0xf]
    %v2785 = vld [vmem:[#allocation5 + $0xc4] sm:$0xf]
    %v2786 = vld [vmem:[#allocation5 + $0xc8] sm:$0xf]
    %v2787 = vld [vmem:[#allocation5 + $0xcc] sm:$0xf]
    %v2788 = vld [vmem:[#allocation5 + $0xd0] sm:$0xf]
    %v2789 = vld [vmem:[#allocation5 + $0xd4] sm:$0xf]
    %v2790 = vld [vmem:[#allocation5 + $0xd8] sm:$0xf]
    %v2791 = vld [vmem:[#allocation5 + $0xdc] sm:$0xf]
    %v2792 = vld [vmem:[#allocation5 + $0xe0] sm:$0xf]
    %v2793 = vld [vmem:[#allocation5 + $0xe4] sm:$0xf]
    %v2794 = vld [vmem:[#allocation5 + $0xe8] sm:$0xf]
    %v2795 = vld [vmem:[#allocation5 + $0xec] sm:$0xf]
    %v2796 = vld [vmem:[#allocation5 + $0xf0] sm:$0xf]
    %v2797 = vld [vmem:[#allocation5 + $0xf4] sm:$0xf]
    %v2798 = vld [vmem:[#allocation5 + $0xf8] sm:$0xf]
    %v2799 = vld [vmem:[#allocation5 + $0xfc] sm:$0xf]
    %v2800 = vld [vmem:[#allocation5 + $0x100] sm:$0xf]
    %v2801 = vld [vmem:[#allocation5 + $0x104] sm:$0xf]
    %v2802 = vld [vmem:[#allocation5 + $0x108] sm:$0xf]
    %v2803 = vld [vmem:[#allocation5 + $0x10c] sm:$0xf]
    %v2804 = vld [vmem:[#allocation5 + $0x110] sm:$0xf]
    %v2805 = vld [vmem:[#allocation5 + $0x114] sm:$0xf]
    %v2806 = vld [vmem:[#allocation5 + $0x118] sm:$0xf]
    %v2807 = vld [vmem:[#allocation5 + $0x11c] sm:$0xf]
    %v2808 = vld [vmem:[#allocation5 + $0x120] sm:$0xf]
    %v2809 = vld [vmem:[#allocation5 + $0x124] sm:$0xf]
    %v2810 = vld [vmem:[#allocation5 + $0x128] sm:$0xf]
    %v2811 = vld [vmem:[#allocation5 + $0x12c] sm:$0xf]
    %v2812 = vld [vmem:[#allocation5 + $0x130] sm:$0xf]
    %v2813 = vld [vmem:[#allocation5 + $0x134] sm:$0xf]
    %v2814 = vld [vmem:[#allocation5 + $0x138] sm:$0xf]
    %v2815 = vld [vmem:[#allocation5 + $0x13c] sm:$0xf]
    %v2816 = vld [vmem:[#allocation5 + $0x140] sm:$0xf]
    %v2817 = vld [vmem:[#allocation5 + $0x144] sm:$0xf]
    %v2818 = vld [vmem:[#allocation5 + $0x148] sm:$0xf]
    %v2819 = vld [vmem:[#allocation5 + $0x14c] sm:$0xf]
    %v2820 = vld [vmem:[#allocation5 + $0x150] sm:$0xf]
    %v2821 = vld [vmem:[#allocation5 + $0x154] sm:$0xf]
    %v2822 = vld [vmem:[#allocation5 + $0x158] sm:$0xf]
    %v2823 = vld [vmem:[#allocation5 + $0x15c] sm:$0xf]
    %v2824 = vld [vmem:[#allocation5 + $0x160] sm:$0xf]
    %v2825 = vld [vmem:[#allocation5 + $0x164] sm:$0xf]
    %v2826 = vld [vmem:[#allocation5 + $0x168] sm:$0xf]
    %v2827 = vld [vmem:[#allocation5 + $0x16c] sm:$0xf]
    %v2828 = vld [vmem:[#allocation5 + $0x170] sm:$0xf]
    %v2829 = vld [vmem:[#allocation5 + $0x174] sm:$0xf]
    %v2830 = vld [vmem:[#allocation5 + $0x178] sm:$0xf]
    %v2831 = vld [vmem:[#allocation5 + $0x17c] sm:$0xf]
    %v2832 = vld [vmem:[#allocation5 + $0x180] sm:$0xf]
    %v2833 = vld [vmem:[#allocation5 + $0x184] sm:$0xf]
    %v2834 = vld [vmem:[#allocation5 + $0x188] sm:$0xf]
    %v2835 = vld [vmem:[#allocation5 + $0x18c] sm:$0xf]
    %v2836 = vld [vmem:[#allocation5 + $0x190] sm:$0xf]
    %v2837 = vld [vmem:[#allocation5 + $0x194] sm:$0xf]
    %v2838 = vld [vmem:[#allocation5 + $0x198] sm:$0xf]
    %v2839 = vld [vmem:[#allocation5 + $0x19c] sm:$0xf]
    %v2840 = vld [vmem:[#allocation5 + $0x1a0] sm:$0xf]
    %v2841 = vld [vmem:[#allocation5 + $0x1a4] sm:$0xf]
    %v2842 = vld [vmem:[#allocation5 + $0x1a8] sm:$0xf]
    %v2843 = vld [vmem:[#allocation5 + $0x1ac] sm:$0xf]
    %v2844 = vld [vmem:[#allocation5 + $0x1b0] sm:$0xf]
    %v2845 = vld [vmem:[#allocation5 + $0x1b4] sm:$0xf]
    %v2846 = vld [vmem:[#allocation5 + $0x1b8] sm:$0xf]
    %v2847 = vld [vmem:[#allocation5 + $0x1bc] sm:$0xf]
    %v2848 = vld [vmem:[#allocation5 + $0x1c0] sm:$0xf]
    %v2849 = vld [vmem:[#allocation5 + $0x1c4] sm:$0xf]
    %v2850 = vld [vmem:[#allocation5 + $0x1c8] sm:$0xf]
    %v2851 = vld [vmem:[#allocation5 + $0x1cc] sm:$0xf]
    %v2852 = vld [vmem:[#allocation5 + $0x1d0] sm:$0xf]
    %v2853 = vld [vmem:[#allocation5 + $0x1d4] sm:$0xf]
    %v2854 = vld [vmem:[#allocation5 + $0x1d8] sm:$0xf]
    %v2855 = vld [vmem:[#allocation5 + $0x1dc] sm:$0xf]
    %v2856 = vld [vmem:[#allocation5 + $0x1e0] sm:$0xf]
    %v2857 = vld [vmem:[#allocation5 + $0x1e4] sm:$0xf]
    %v2858 = vld [vmem:[#allocation5 + $0x1e8] sm:$0xf]
    %v2859 = vld [vmem:[#allocation5 + $0x1ec] sm:$0xf]
    %v2860 = vld [vmem:[#allocation5 + $0x1f0] sm:$0xf]
    %v2861 = vld [vmem:[#allocation5 + $0x1f4] sm:$0xf]
    %v2862 = vld [vmem:[#allocation5 + $0x1f8] sm:$0xf]
    %v2863 = vld [vmem:[#allocation5 + $0x1fc] sm:$0xf]
    %v2864 = vld [vmem:[%s6] sm:$0x1]
    %v2866 = vlaneseq
    %v2867 = vshrl.u32 %v2866, 7
    %v2868 = vsub.s32 0, %v2867
    %v2869 = vrot.slane %v2864, %v2868
    %v2999 = vunpack.c.l.b16 %v2736
    %v3000 = vunpack.c.l.b16 %v2737
    %v3001 = vunpack.c.l.b16 %v2738
    %v3002 = vunpack.c.l.b16 %v2739
    %v3003 = vunpack.c.l.b16 %v2740
    %v3004 = vunpack.c.l.b16 %v2741
    %v3005 = vunpack.c.l.b16 %v2742
    %v3006 = vunpack.c.l.b16 %v2743
    %v3007 = vunpack.c.l.b16 %v2744
    %v3008 = vunpack.c.l.b16 %v2745
    %v3009 = vunpack.c.l.b16 %v2746
    %v3010 = vunpack.c.l.b16 %v2747
    %v3011 = vunpack.c.l.b16 %v2748
    %v3012 = vunpack.c.l.b16 %v2749
    %v3013 = vunpack.c.l.b16 %v2750
    %v3014 = vunpack.c.l.b16 %v2751
    %v3015 = vunpack.c.l.b16 %v2752
    %v3016 = vunpack.c.l.b16 %v2753
    %v3017 = vunpack.c.l.b16 %v2754
    %v3018 = vunpack.c.l.b16 %v2755
    %v3019 = vunpack.c.l.b16 %v2756
    %v3020 = vunpack.c.l.b16 %v2757
    %v3021 = vunpack.c.l.b16 %v2758
    %v3022 = vunpack.c.l.b16 %v2759
    %v3023 = vunpack.c.l.b16 %v2760
    %v3024 = vunpack.c.l.b16 %v2761
    %v3025 = vunpack.c.l.b16 %v2762
    %v3026 = vunpack.c.l.b16 %v2763
    %v3027 = vunpack.c.l.b16 %v2764
    %v3028 = vunpack.c.l.b16 %v2765
    %v3029 = vunpack.c.l.b16 %v2766
    %v3030 = vunpack.c.l.b16 %v2767
    %v3031 = vunpack.c.l.b16 %v2768
    %v3032 = vunpack.c.l.b16 %v2769
    %v3033 = vunpack.c.l.b16 %v2770
    %v3034 = vunpack.c.l.b16 %v2771
    %v3035 = vunpack.c.l.b16 %v2772
    %v3036 = vunpack.c.l.b16 %v2773
    %v3037 = vunpack.c.l.b16 %v2774
    %v3038 = vunpack.c.l.b16 %v2775
    %v3039 = vunpack.c.l.b16 %v2776
    %v3040 = vunpack.c.l.b16 %v2777
    %v3041 = vunpack.c.l.b16 %v2778
    %v3042 = vunpack.c.l.b16 %v2779
    %v3043 = vunpack.c.l.b16 %v2780
    %v3044 = vunpack.c.l.b16 %v2781
    %v3045 = vunpack.c.l.b16 %v2782
    %v3046 = vunpack.c.l.b16 %v2783
    %v3047 = vunpack.c.l.b16 %v2784
    %v3048 = vunpack.c.l.b16 %v2785
    %v3049 = vunpack.c.l.b16 %v2786
    %v3050 = vunpack.c.l.b16 %v2787
    %v3051 = vunpack.c.l.b16 %v2788
    %v3052 = vunpack.c.l.b16 %v2789
    %v3053 = vunpack.c.l.b16 %v2790
    %v3054 = vunpack.c.l.b16 %v2791
    %v3055 = vunpack.c.l.b16 %v2792
    %v3056 = vunpack.c.l.b16 %v2793
    %v3057 = vunpack.c.l.b16 %v2794
    %v3058 = vunpack.c.l.b16 %v2795
    %v3059 = vunpack.c.l.b16 %v2796
    %v3060 = vunpack.c.l.b16 %v2797
    %v3061 = vunpack.c.l.b16 %v2798
    %v3062 = vunpack.c.l.b16 %v2799
    %v3063 = vunpack.c.l.b16 %v2800
    %v3064 = vunpack.c.l.b16 %v2801
    %v3065 = vunpack.c.l.b16 %v2802
    %v3066 = vunpack.c.l.b16 %v2803
    %v3067 = vunpack.c.l.b16 %v2804
    %v3068 = vunpack.c.l.b16 %v2805
    %v3069 = vunpack.c.l.b16 %v2806
    %v3070 = vunpack.c.l.b16 %v2807
    %v3071 = vunpack.c.l.b16 %v2808
    %v3072 = vunpack.c.l.b16 %v2809
    %v3073 = vunpack.c.l.b16 %v2810
    %v3074 = vunpack.c.l.b16 %v2811
    %v3075 = vunpack.c.l.b16 %v2812
    %v3076 = vunpack.c.l.b16 %v2813
    %v3077 = vunpack.c.l.b16 %v2814
    %v3078 = vunpack.c.l.b16 %v2815
    %v3079 = vunpack.c.l.b16 %v2816
    %v3080 = vunpack.c.l.b16 %v2817
    %v3081 = vunpack.c.l.b16 %v2818
    %v3082 = vunpack.c.l.b16 %v2819
    %v3083 = vunpack.c.l.b16 %v2820
    %v3084 = vunpack.c.l.b16 %v2821
    %v3085 = vunpack.c.l.b16 %v2822
    %v3086 = vunpack.c.l.b16 %v2823
    %v3087 = vunpack.c.l.b16 %v2824
    %v3088 = vunpack.c.l.b16 %v2825
    %v3089 = vunpack.c.l.b16 %v2826
    %v3090 = vunpack.c.l.b16 %v2827
    %v3091 = vunpack.c.l.b16 %v2828
    %v3092 = vunpack.c.l.b16 %v2829
    %v3093 = vunpack.c.l.b16 %v2830
    %v3094 = vunpack.c.l.b16 %v2831
    %v3095 = vunpack.c.l.b16 %v2832
    %v3096 = vunpack.c.l.b16 %v2833
    %v3097 = vunpack.c.l.b16 %v2834
    %v3098 = vunpack.c.l.b16 %v2835
    %v3099 = vunpack.c.l.b16 %v2836
    %v3100 = vunpack.c.l.b16 %v2837
    %v3101 = vunpack.c.l.b16 %v2838
    %v3102 = vunpack.c.l.b16 %v2839
    %v3103 = vunpack.c.l.b16 %v2840
    %v3104 = vunpack.c.l.b16 %v2841
    %v3105 = vunpack.c.l.b16 %v2842
    %v3106 = vunpack.c.l.b16 %v2843
    %v3107 = vunpack.c.l.b16 %v2844
    %v3108 = vunpack.c.l.b16 %v2845
    %v3109 = vunpack.c.l.b16 %v2846
    %v3110 = vunpack.c.l.b16 %v2847
    %v3111 = vunpack.c.l.b16 %v2848
    %v3112 = vunpack.c.l.b16 %v2849
    %v3113 = vunpack.c.l.b16 %v2850
    %v3114 = vunpack.c.l.b16 %v2851
    %v3115 = vunpack.c.l.b16 %v2852
    %v3116 = vunpack.c.l.b16 %v2853
    %v3117 = vunpack.c.l.b16 %v2854
    %v3118 = vunpack.c.l.b16 %v2855
    %v3119 = vunpack.c.l.b16 %v2856
    %v3120 = vunpack.c.l.b16 %v2857
    %v3121 = vunpack.c.l.b16 %v2858
    %v3122 = vunpack.c.l.b16 %v2859
    %v3123 = vunpack.c.l.b16 %v2860
    %v3124 = vunpack.c.l.b16 %v2861
    %v3125 = vunpack.c.l.b16 %v2862
    %v3126 = vunpack.c.l.b16 %v2863
    %v3127 = vpack.c.b16 %v3000, %v2999
    %v3128 = vpack.c.b16 %v3002, %v3001
    %v3129 = vpack.c.b16 %v3004, %v3003
    %v3130 = vpack.c.b16 %v3006, %v3005
    %v3131 = vpack.c.b16 %v3008, %v3007
    %v3132 = vpack.c.b16 %v3010, %v3009
    %v3133 = vpack.c.b16 %v3012, %v3011
    %v3134 = vpack.c.b16 %v3014, %v3013
    %v3135 = vpack.c.b16 %v3016, %v3015
    %v3136 = vpack.c.b16 %v3018, %v3017
    %v3137 = vpack.c.b16 %v3020, %v3019
    %v3138 = vpack.c.b16 %v3022, %v3021
    %v3139 = vpack.c.b16 %v3024, %v3023
    %v3140 = vpack.c.b16 %v3026, %v3025
    %v3141 = vpack.c.b16 %v3028, %v3027
    %v3142 = vpack.c.b16 %v3030, %v3029
    %v3143 = vpack.c.b16 %v3032, %v3031
    %v3144 = vpack.c.b16 %v3034, %v3033
    %v3145 = vpack.c.b16 %v3036, %v3035
    %v3146 = vpack.c.b16 %v3038, %v3037
    %v3147 = vpack.c.b16 %v3040, %v3039
    %v3148 = vpack.c.b16 %v3042, %v3041
    %v3149 = vpack.c.b16 %v3044, %v3043
    %v3150 = vpack.c.b16 %v3046, %v3045
    %v3151 = vpack.c.b16 %v3048, %v3047
    %v3152 = vpack.c.b16 %v3050, %v3049
    %v3153 = vpack.c.b16 %v3052, %v3051
    %v3154 = vpack.c.b16 %v3054, %v3053
    %v3155 = vpack.c.b16 %v3056, %v3055
    %v3156 = vpack.c.b16 %v3058, %v3057
    %v3157 = vpack.c.b16 %v3060, %v3059
    %v3158 = vpack.c.b16 %v3062, %v3061
    %v3159 = vpack.c.b16 %v3064, %v3063
    %v3160 = vpack.c.b16 %v3066, %v3065
    %v3161 = vpack.c.b16 %v3068, %v3067
    %v3162 = vpack.c.b16 %v3070, %v3069
    %v3163 = vpack.c.b16 %v3072, %v3071
    %v3164 = vpack.c.b16 %v3074, %v3073
    %v3165 = vpack.c.b16 %v3076, %v3075
    %v3166 = vpack.c.b16 %v3078, %v3077
    %v3167 = vpack.c.b16 %v3080, %v3079
    %v3168 = vpack.c.b16 %v3082, %v3081
    %v3169 = vpack.c.b16 %v3084, %v3083
    %v3170 = vpack.c.b16 %v3086, %v3085
    %v3171 = vpack.c.b16 %v3088, %v3087
    %v3172 = vpack.c.b16 %v3090, %v3089
    %v3173 = vpack.c.b16 %v3092, %v3091
    %v3174 = vpack.c.b16 %v3094, %v3093
    %v3175 = vpack.c.b16 %v3096, %v3095
    %v3176 = vpack.c.b16 %v3098, %v3097
    %v3177 = vpack.c.b16 %v3100, %v3099
    %v3178 = vpack.c.b16 %v3102, %v3101
    %v3179 = vpack.c.b16 %v3104, %v3103
    %v3180 = vpack.c.b16 %v3106, %v3105
    %v3181 = vpack.c.b16 %v3108, %v3107
    %v3182 = vpack.c.b16 %v3110, %v3109
    %v3183 = vpack.c.b16 %v3112, %v3111
    %v3184 = vpack.c.b16 %v3114, %v3113
    %v3185 = vpack.c.b16 %v3116, %v3115
    %v3186 = vpack.c.b16 %v3118, %v3117
    %v3187 = vpack.c.b16 %v3120, %v3119
    %v3188 = vpack.c.b16 %v3122, %v3121
    %v3189 = vpack.c.b16 %v3124, %v3123
    %v3190 = vpack.c.b16 %v3126, %v3125
    %3255 = vmatprep.subr.bf16.mxu0 0
    %3256 = vmatpush1.bf16.msra.mxu0 %v3134
    %3257 = vmatprep.subr.bf16.mxu0 0
    %3258 = vmatpush1.bf16.msra.mxu0 %v3133
    %3259 = vmatprep.subr.bf16.mxu0 0
    %3260 = vmatpush1.bf16.msra.mxu0 %v3132
    %3261 = vmatprep.subr.bf16.mxu0 0
    %3262 = vmatpush1.bf16.msra.mxu0 %v3131
    %3263 = vmatprep.subr.bf16.mxu0 0
    %3264 = vmatpush1.bf16.msra.mxu0 %v3130
    %3265 = vmatprep.subr.bf16.mxu0 0
    %3266 = vmatpush1.bf16.msra.mxu0 %v3129
    %3267 = vmatprep.subr.bf16.mxu0 0
    %3268 = vmatpush1.bf16.msra.mxu0 %v3128
    %3269 = vmatprep.subr.bf16.mxu0 0
    %3270 = vmatpush1.bf16.msra.mxu0 %v3127
    %3271 = vmatprep.subr.bf16.mxu0 0
    %3272 = vmatpush2.bf16.msra.mxu0 %v3142
    %3273 = vmatprep.subr.bf16.mxu0 0
    %3274 = vmatpush2.bf16.msra.mxu0 %v3141
    %3275 = vmatprep.subr.bf16.mxu0 0
    %3276 = vmatpush2.bf16.msra.mxu0 %v3140
    %3277 = vmatprep.subr.bf16.mxu0 0
    %3278 = vmatpush2.bf16.msra.mxu0 %v3139
    %3279 = vmatprep.subr.bf16.mxu0 0
    %3280 = vmatpush2.bf16.msra.mxu0 %v3138
    %3281 = vmatprep.subr.bf16.mxu0 0
    %3282 = vmatpush2.bf16.msra.mxu0 %v3137
    %3283 = vmatprep.subr.bf16.mxu0 0
    %3284 = vmatpush2.bf16.msra.mxu0 %v3136
    %3285 = vmatprep.subr.bf16.mxu0 0
    %3286 = vmatpush2.bf16.msra.mxu0 %v3135
    %3287 = vmatprep.mubr.bf16.mxu0 %v2710
    %3288 = vmatmul.mubr.bf16.gmra.mxu0 %v2706
    %v3289 = vpop.f32.mrf.mxu0
    %v3290 = vadd.f32 %v2869, %v3289
    %v3291 = vpop.f32.mrf.mxu0
    %v3292 = vpop.f32.mrf.mxu0
    %v3293 = vpop.f32.mrf.mxu0
    %3294 = vdwg.mxu0
    %3295 = vmatprep.subr.bf16.mxu0 0
    %3296 = vmatpush1.bf16.msra.mxu0 %v3150
    %3297 = vmatprep.subr.bf16.mxu0 0
    %3298 = vmatpush1.bf16.msra.mxu0 %v3149
    %3299 = vmatprep.subr.bf16.mxu0 0
    %3300 = vmatpush1.bf16.msra.mxu0 %v3148
    %3301 = vmatprep.subr.bf16.mxu0 0
    %3302 = vmatpush1.bf16.msra.mxu0 %v3147
    %3303 = vmatprep.subr.bf16.mxu0 0
    %3304 = vmatpush1.bf16.msra.mxu0 %v3146
    %3305 = vmatprep.subr.bf16.mxu0 0
    %3306 = vmatpush1.bf16.msra.mxu0 %v3145
    %3307 = vmatprep.subr.bf16.mxu0 0
    %3308 = vmatpush1.bf16.msra.mxu0 %v3144
    %3309 = vmatprep.subr.bf16.mxu0 0
    %3310 = vmatpush1.bf16.msra.mxu0 %v3143
    %3311 = vmatprep.subr.bf16.mxu0 0
    %3312 = vmatpush2.bf16.msra.mxu0 %v3158
    %3313 = vmatprep.subr.bf16.mxu0 0
    %3314 = vmatpush2.bf16.msra.mxu0 %v3157
    %3315 = vmatprep.subr.bf16.mxu0 0
    %3316 = vmatpush2.bf16.msra.mxu0 %v3156
    %3317 = vmatprep.subr.bf16.mxu0 0
    %3318 = vmatpush2.bf16.msra.mxu0 %v3155
    %3319 = vmatprep.subr.bf16.mxu0 0
    %3320 = vmatpush2.bf16.msra.mxu0 %v3154
    %3321 = vmatprep.subr.bf16.mxu0 0
    %3322 = vmatpush2.bf16.msra.mxu0 %v3153
    %3323 = vmatprep.subr.bf16.mxu0 0
    %3324 = vmatpush2.bf16.msra.mxu0 %v3152
    %3325 = vmatprep.subr.bf16.mxu0 0
    %3326 = vmatpush2.bf16.msra.mxu0 %v3151
    %3327 = vmatprep.mubr.bf16.mxu0 %v2718
    %3328 = vmatmul.mubr.bf16.gmra.mxu0 %v2714
    %v3329 = vpop.f32.mrf.mxu0
    %v3330 = vadd.f32 %v3290, %v3329
    %v3331 = vpop.f32.mrf.mxu0
    %v3332 = vpop.f32.mrf.mxu0
    %v3333 = vpop.f32.mrf.mxu0
    %3334 = vdwg.mxu0
    %3335 = vmatprep.subr.bf16.mxu0 0
    %3336 = vmatpush1.bf16.msra.mxu0 %v3166
    %3337 = vmatprep.subr.bf16.mxu0 0
    %3338 = vmatpush1.bf16.msra.mxu0 %v3165
    %3339 = vmatprep.subr.bf16.mxu0 0
    %3340 = vmatpush1.bf16.msra.mxu0 %v3164
    %3341 = vmatprep.subr.bf16.mxu0 0
    %3342 = vmatpush1.bf16.msra.mxu0 %v3163
    %3343 = vmatprep.subr.bf16.mxu0 0
    %3344 = vmatpush1.bf16.msra.mxu0 %v3162
    %3345 = vmatprep.subr.bf16.mxu0 0
    %3346 = vmatpush1.bf16.msra.mxu0 %v3161
    %3347 = vmatprep.subr.bf16.mxu0 0
    %3348 = vmatpush1.bf16.msra.mxu0 %v3160
    %3349 = vmatprep.subr.bf16.mxu0 0
    %3350 = vmatpush1.bf16.msra.mxu0 %v3159
    %3351 = vmatprep.subr.bf16.mxu0 0
    %3352 = vmatpush2.bf16.msra.mxu0 %v3174
    %3353 = vmatprep.subr.bf16.mxu0 0
    %3354 = vmatpush2.bf16.msra.mxu0 %v3173
    %3355 = vmatprep.subr.bf16.mxu0 0
    %3356 = vmatpush2.bf16.msra.mxu0 %v3172
    %3357 = vmatprep.subr.bf16.mxu0 0
    %3358 = vmatpush2.bf16.msra.mxu0 %v3171
    %3359 = vmatprep.subr.bf16.mxu0 0
    %3360 = vmatpush2.bf16.msra.mxu0 %v3170
    %3361 = vmatprep.subr.bf16.mxu0 0
    %3362 = vmatpush2.bf16.msra.mxu0 %v3169
    %3363 = vmatprep.subr.bf16.mxu0 0
    %3364 = vmatpush2.bf16.msra.mxu0 %v3168
    %3365 = vmatprep.subr.bf16.mxu0 0
    %3366 = vmatpush2.bf16.msra.mxu0 %v3167
    %3367 = vmatprep.mubr.bf16.mxu0 %v2726
    %3368 = vmatmul.mubr.bf16.gmra.mxu0 %v2722
    %v3369 = vpop.f32.mrf.mxu0
    %v3370 = vadd.f32 %v3330, %v3369
    %v3371 = vpop.f32.mrf.mxu0
    %v3372 = vpop.f32.mrf.mxu0
    %v3373 = vpop.f32.mrf.mxu0
    %3374 = vdwg.mxu0
    %3375 = vmatprep.subr.bf16.mxu0 0
    %3376 = vmatpush1.bf16.msra.mxu0 %v3182
    %3377 = vmatprep.subr.bf16.mxu0 0
    %3378 = vmatpush1.bf16.msra.mxu0 %v3181
    %3379 = vmatprep.subr.bf16.mxu0 0
    %3380 = vmatpush1.bf16.msra.mxu0 %v3180
    %3381 = vmatprep.subr.bf16.mxu0 0
    %3382 = vmatpush1.bf16.msra.mxu0 %v3179
    %3383 = vmatprep.subr.bf16.mxu0 0
    %3384 = vmatpush1.bf16.msra.mxu0 %v3178
    %3385 = vmatprep.subr.bf16.mxu0 0
    %3386 = vmatpush1.bf16.msra.mxu0 %v3177
    %3387 = vmatprep.subr.bf16.mxu0 0
    %3388 = vmatpush1.bf16.msra.mxu0 %v3176
    %3389 = vmatprep.subr.bf16.mxu0 0
    %3390 = vmatpush1.bf16.msra.mxu0 %v3175
    %3391 = vmatprep.subr.bf16.mxu0 0
    %3392 = vmatpush2.bf16.msra.mxu0 %v3190
    %3393 = vmatprep.subr.bf16.mxu0 0
    %3394 = vmatpush2.bf16.msra.mxu0 %v3189
    %3395 = vmatprep.subr.bf16.mxu0 0
    %3396 = vmatpush2.bf16.msra.mxu0 %v3188
    %3397 = vmatprep.subr.bf16.mxu0 0
    %3398 = vmatpush2.bf16.msra.mxu0 %v3187
    %3399 = vmatprep.subr.bf16.mxu0 0
    %3400 = vmatpush2.bf16.msra.mxu0 %v3186
    %3401 = vmatprep.subr.bf16.mxu0 0
    %3402 = vmatpush2.bf16.msra.mxu0 %v3185
    %3403 = vmatprep.subr.bf16.mxu0 0
    %3404 = vmatpush2.bf16.msra.mxu0 %v3184
    %3405 = vmatprep.subr.bf16.mxu0 0
    %3406 = vmatpush2.bf16.msra.mxu0 %v3183
    %3407 = vmatprep.mubr.bf16.mxu0 %v2734
    %3408 = vmatmul.mubr.bf16.gmra.mxu0 %v2730
    %v3409 = vpop.f32.mrf.mxu0
    %v3410 = vadd.f32 %v3370, %v3409
    %v3411 = vpop.f32.mrf.mxu0
    %v3412 = vpop.f32.mrf.mxu0
    %v3413 = vpop.f32.mrf.mxu0
    %3414 = vdwg.mxu0
    %vm3415 = vcmp.ge.f32.partialorder %v3410, 0.0
    %v3416 = vmul.f32 %v3410, 0.01
    %v3417 = vsel %vm3415, %v3410, %v3416
    %v3418 = vpack.c.bf16 %v3417, %v3417
    %v3419 = vld [vmem:[%s7] sm:$0xf]
    %v3420 = vld [vmem:[%s7 + $0x4] sm:$0xf]
    %v3421 = vld [vmem:[%s7 + $0x8] sm:$0xf]
    %v3422 = vld [vmem:[%s7 + $0xc] sm:$0xf]
    %v3423 = vld [vmem:[%s7 + $0x10] sm:$0xf]
    %v3424 = vld [vmem:[%s7 + $0x14] sm:$0xf]
    %v3425 = vld [vmem:[%s7 + $0x18] sm:$0xf]
    %v3426 = vld [vmem:[%s7 + $0x1c] sm:$0xf]
    %v3427 = vld [vmem:[%s7 + $0x20] sm:$0xf]
    %v3428 = vld [vmem:[%s7 + $0x24] sm:$0xf]
    %v3429 = vld [vmem:[%s7 + $0x28] sm:$0xf]
    %v3430 = vld [vmem:[%s7 + $0x2c] sm:$0xf]
    %v3431 = vld [vmem:[%s7 + $0x30] sm:$0xf]
    %v3432 = vld [vmem:[%s7 + $0x34] sm:$0xf]
    %v3433 = vld [vmem:[%s7 + $0x38] sm:$0xf]
    %v3434 = vld [vmem:[%s7 + $0x3c] sm:$0xf]
    %v3435 = vld [vmem:[%s8] sm:$0x1]
    %v3437 = vlaneseq
    %v3438 = vshrl.u32 %v3437, 7
    %v3439 = vsub.s32 0, %v3438
    %v3440 = vrot.slane %v3435, %v3439
    %v3458 = vunpack.c.l.b16 %v3419
    %v3459 = vunpack.c.l.b16 %v3420
    %v3460 = vunpack.c.l.b16 %v3421
    %v3461 = vunpack.c.l.b16 %v3422
    %v3462 = vunpack.c.l.b16 %v3423
    %v3463 = vunpack.c.l.b16 %v3424
    %v3464 = vunpack.c.l.b16 %v3425
    %v3465 = vunpack.c.l.b16 %v3426
    %v3466 = vunpack.c.l.b16 %v3427
    %v3467 = vunpack.c.l.b16 %v3428
    %v3468 = vunpack.c.l.b16 %v3429
    %v3469 = vunpack.c.l.b16 %v3430
    %v3470 = vunpack.c.l.b16 %v3431
    %v3471 = vunpack.c.l.b16 %v3432
    %v3472 = vunpack.c.l.b16 %v3433
    %v3473 = vunpack.c.l.b16 %v3434
    %v3474 = vpack.c.b16 %v3459, %v3458
    %v3475 = vpack.c.b16 %v3461, %v3460
    %v3476 = vpack.c.b16 %v3463, %v3462
    %v3477 = vpack.c.b16 %v3465, %v3464
    %v3478 = vpack.c.b16 %v3467, %v3466
    %v3479 = vpack.c.b16 %v3469, %v3468
    %v3480 = vpack.c.b16 %v3471, %v3470
    %v3481 = vpack.c.b16 %v3473, %v3472
    %3490 = vmatprep.subr.bf16.mxu0 0
    %3491 = vmatpush1.bf16.msra.mxu0 %v3481
    %3492 = vmatprep.subr.bf16.mxu0 0
    %3493 = vmatpush1.bf16.msra.mxu0 %v3480
    %3494 = vmatprep.subr.bf16.mxu0 0
    %3495 = vmatpush1.bf16.msra.mxu0 %v3479
    %3496 = vmatprep.subr.bf16.mxu0 0
    %3497 = vmatpush1.bf16.msra.mxu0 %v3478
    %3498 = vmatprep.subr.bf16.mxu0 0
    %3499 = vmatpush1.bf16.msra.mxu0 %v3477
    %3500 = vmatprep.subr.bf16.mxu0 0
    %3501 = vmatpush1.bf16.msra.mxu0 %v3476
    %3502 = vmatprep.subr.bf16.mxu0 0
    %3503 = vmatpush1.bf16.msra.mxu0 %v3475
    %3504 = vmatprep.subr.bf16.mxu0 0
    %3505 = vmatpush1.bf16.msra.mxu0 %v3474
    %3506 = vmatprep.subr.bf16.mxu0 0
    %3507 = vmatpush2.bf16.msra.mxu0 0
    %3508 = vmatprep.subr.bf16.mxu0 0
    %3509 = vmatpush2.bf16.msra.mxu0 0
    %3510 = vmatprep.subr.bf16.mxu0 0
    %3511 = vmatpush2.bf16.msra.mxu0 0
    %3512 = vmatprep.subr.bf16.mxu0 0
    %3513 = vmatpush2.bf16.msra.mxu0 0
    %3514 = vmatprep.subr.bf16.mxu0 0
    %3515 = vmatpush2.bf16.msra.mxu0 0
    %3516 = vmatprep.subr.bf16.mxu0 0
    %3517 = vmatpush2.bf16.msra.mxu0 0
    %3518 = vmatprep.subr.bf16.mxu0 0
    %3519 = vmatpush2.bf16.msra.mxu0 0
    %3520 = vmatprep.subr.bf16.mxu0 0
    %3521 = vmatpush2.bf16.msra.mxu0 0
    %3522 = vmatprep.mubr.bf16.mxu0 0
    %3523 = vmatmul.mubr.bf16.gmra.mxu0 %v3418
    %v3524 = vpop.f32.mrf.mxu0
    %v3525 = vadd.f32 %v3440, %v3524
    %v3526 = vpop.f32.mrf.mxu0
    %v3527 = vpop.f32.mrf.mxu0
    %v3528 = vpop.f32.mrf.mxu0
    %3529 = vdwg.mxu0
    %3530 = vst [vmem:[#allocation7] sm:$0xff] %v3525
    // Predicated region
    $region46: #{tpu_custom_call.1} parent=1 // pred_check
      _
    $region47: #{tpu_custom_call.1} parent=1 // pred_check_branch
      %3532 = sbr.rel (0) target = $region49
    $region48: #{tpu_custom_call.1} parent=1 // pred_region
      %s3534 = ssub.s32 128, 128
      %3535 = vsyncadd [#allocation4], %s3534
      %s3537 = sshll.u32 [#allocation7], 4
      %s3538 = int_to_ptr.vmem [resolvable:$true] %s3537
      %3540 = dma.vmem_to_hbm [thread:$0]  %s3538, 128, %s9, [#allocation4]
    $region49: #{tpu_custom_call.1} parent=1 // pred_fallthru
      _
    // Predicated region
    $region50: #{tpu_custom_call.1} parent=1 // pred_check
      _
    $region51: #{tpu_custom_call.1} parent=1 // pred_check_branch
      %3542 = sbr.rel (0) target = $region53
    $region52: #{tpu_custom_call.1} parent=1 // pred_region
      %3543 = dma.done [#allocation4], 128
    $region53: #{tpu_custom_call.1} parent=1 // pred_fallthru
      _
    %3544 = vsyncpa [#allocation3], 1
    %3545 = vsyncpa [#allocation6], 1
    %3546 = vsyncpa [#allocation4], 1

</llo_original>
